<compile_context>
chip_gen: v5e
topology: v5e:2x2
jax: 0.10.0
libtpu: 0.0.40
codegen_flags: <defaults>
</compile_context>

<pallas_src>
import jax
import jax.numpy as jnp
from jax.experimental import pallas as pl
from jax.experimental.pallas import tpu as pltpu


def _decoder_gru_kernel(x_ref, h0_ref,
                        wih0_ref, whh0_ref, wih1_ref, whh1_ref,
                        bi0_ref, bhn0_ref, bi1_ref, bhn1_ref,
                        out_ref, hn_ref,
                        gi_scr):
    """Shapes (Bp = batch padded to 8, PyTorch gate order (r, z, n)):
      x_ref   : (T*Bp, I)  f32   flattened row-major (t major, b minor)
      h0_ref  : (2, Bp, H) f32
      wih0    : (I, 3H)    bf16  pre-transposed [in_features, 3H]
      whh0    : (H, 3H)    bf16
      wih1    : (H, 3H)    bf16
      whh1    : (H, 3H)    bf16
      bi0     : (1, 3H)    f32   = bih0 + [bhh0_r, bhh0_z, 0]
      bhn0    : (1, H)     f32   = bhh0_n  (stays inside the r*(.) term)
      bi1     : (1, 3H)    f32   = bih1 + [bhh1_r, bhh1_z, 0]
      bhn1    : (1, H)     f32   = bhh1_n
      out_ref : (T, Bp, H) f32
      hn_ref  : (2, Bp, H) f32
      gi_scr  : (T*Bp, 3H) f32   hoisted layer-0 input projection
    """
    T, Bp, H = out_ref.shape

    # (1) ReLU + hoisted layer-0 input projection over ALL timesteps (no recurrent
    #     dependence): one big MXU matmul, with the layer-0 bias (incl. pre-summed
    #     r/z hidden bias) folded in once.  Bp=8 keeps every per-step slice of the
    #     flat scratch sublane-tile aligned.
    x_bf = jnp.maximum(x_ref[...], 0.0).astype(jnp.bfloat16)
    gi_scr[...] = (jnp.dot(x_bf, wih0_ref[...], preferred_element_type=jnp.float32)
                   + bi0_ref[...])

    whh0 = whh0_ref[...]
    wih1 = wih1_ref[...]
    whh1 = whh1_ref[...]
    bi1 = bi1_ref[...]
    bhn0 = bhn0_ref[...]
    bhn1 = bhn1_ref[...]

    h0_prev = h0_ref[0]
    h1_prev = h0_ref[1]

    # (2) Time recurrence, fully unrolled (T small & static).  Per step:
    #     - gh1 depends only on h1_{t-1} -> issued first so its MXU push overlaps
    #       layer-0 elementwise work.
    #     - gh0 depends only on h0_{t-1}.
    #     - gi1 is the only dot on the true serial path (needs h0_t).
    for t in range(T):
        gh1 = jnp.dot(h1_prev.astype(jnp.bfloat16), whh1,
                      preferred_element_type=jnp.float32)            # (Bp, 3H)
        gh0 = jnp.dot(h0_prev.astype(jnp.bfloat16), whh0,
                      preferred_element_type=jnp.float32)            # (Bp, 3H)

        gi0 = gi_scr[t * Bp:(t + 1) * Bp, :]                         # aligned (Bp, 3H)

        # Layer 0 gates (biases for r/z already folded into gi0).
        r0 = jax.nn.sigmoid(gi0[:, 0:H] + gh0[:, 0:H])
        z0 = jax.nn.sigmoid(gi0[:, H:2 * H] + gh0[:, H:2 * H])
        n0 = jnp.tanh(gi0[:, 2 * H:3 * H] + r0 * (gh0[:, 2 * H:3 * H] + bhn0))
        h0_prev = (1.0 - z0) * n0 + z0 * h0_prev

        # Layer 1: input projection on the serial path, hidden projection already done.
        gi1 = jnp.dot(h0_prev.astype(jnp.bfloat16), wih1,
                      preferred_element_type=jnp.float32) + bi1      # (Bp, 3H)
        r1 = jax.nn.sigmoid(gi1[:, 0:H] + gh1[:, 0:H])
        z1 = jax.nn.sigmoid(gi1[:, H:2 * H] + gh1[:, H:2 * H])
        n1 = jnp.tanh(gi1[:, 2 * H:3 * H] + r1 * (gh1[:, 2 * H:3 * H] + bhn1))
        h1_prev = (1.0 - z1) * n1 + z1 * h1_prev

        out_ref[t] = h1_prev

    # h_n written exactly once, after the recurrence.
    hn_ref[0] = h0_prev
    hn_ref[1] = h1_prev


def prepare_params(params):
    """One-time parameter prep (call ONCE, outside the per-call forward path):
    bf16 weight casts + pre-summed r/z input+hidden biases (PyTorch gate order r,z,n).
    The n-gate hidden bias cannot be folded (it sits inside r*(W_hn h + b_hn))."""
    wih0, whh0, bih0, bhh0, wih1, whh1, bih1, bhh1 = params
    H = whh0.shape[0]

    def fold(bih, bhh):
        bi = jnp.concatenate([bih[:, :2 * H] + bhh[:, :2 * H], bih[:, 2 * H:]], axis=1)
        bhn = bhh[:, 2 * H:]
        return bi, bhn

    bi0, bhn0 = fold(bih0, bhh0)
    bi1, bhn1 = fold(bih1, bhh1)
    bf = jnp.bfloat16
    return (wih0.astype(bf), whh0.astype(bf), wih1.astype(bf), whh1.astype(bf),
            bi0, bhn0, bi1, bhn1)


@jax.jit
def decoder_rnn_forward(x, h0, prepped):
    """x: (T, B, I) f32, h0: (2, B, H) f32, prepped = prepare_params(params).
    Returns (output (T,B,H), h_n (2,B,H)), both f32, PyTorch GRU semantics."""
    T, B, I = x.shape
    L, _, H = h0.shape
    assert L == 2
    wih0, whh0, wih1, whh1, bi0, bhn0, bi1, bhn1 = prepped

    # Pad batch to the 8-sublane tile so all in-kernel loads/stores are full tiles.
    Bp = max(8, -(-B // 8) * 8)
    if Bp != B:
        x = jnp.pad(x, ((0, 0), (0, Bp - B), (0, 0)))
        h0 = jnp.pad(h0, ((0, 0), (0, Bp - B), (0, 0)))
    x2d = x.reshape(T * Bp, I)

    vmem = lambda: pl.BlockSpec(memory_space=pltpu.MemorySpace.VMEM)

    w_bytes = (I * 3 * H + 3 * H * 3 * H) * 2                         # bf16 weights
    b_bytes = (2 * 3 * H + 2 * H) * 4                                 # f32 biases
    a_bytes = (T * Bp * I + 2 * Bp * H + T * Bp * H + 2 * Bp * H) * 4 # acts in+out
    cost = pl.CostEstimate(
        flops=2 * T * Bp * 3 * H * (I + 2 * H),
        transcendentals=T * Bp * 6 * H,
        bytes_accessed=w_bytes + b_bytes + a_bytes,
    )

    out, h_n = pl.pallas_call(
        _decoder_gru_kernel,
        out_shape=(
            jax.ShapeDtypeStruct((T, Bp, H), jnp.float32),
            jax.ShapeDtypeStruct((L, Bp, H), jnp.float32),
        ),
        in_specs=[vmem() for _ in range(10)],
        out_specs=(vmem(), vmem()),
        scratch_shapes=[pltpu.VMEM((T * Bp, 3 * H), jnp.float32)],
        cost_estimate=cost,
    )(x2d, h0, wih0, whh0, wih1, whh1, bi0, bhn0, bi1, bhn1)

    return out[:, :B, :], h_n[:, :B, :]


def _reference_forward(x, h0, params):
    """Pure-JAX f32 reference of ReLU + 2-layer GRU (PyTorch semantics)."""
    wih0, whh0, bih0, bhh0, wih1, whh1, bih1, bhh1 = params
    H = h0.shape[-1]
    x = jnp.maximum(x, 0.0)

    def cell(x_in, h_prev, wih, whh, bih, bhh):
        gi = x_in @ wih + bih[0]
        gh = h_prev @ whh + bhh[0]
        r = jax.nn.sigmoid(gi[:, 0:H] + gh[:, 0:H])
        z = jax.nn.sigmoid(gi[:, H:2 * H] + gh[:, H:2 * H])
        n = jnp.tanh(gi[:, 2 * H:3 * H] + r * gh[:, 2 * H:3 * H])
        return (1.0 - z) * n + z * h_prev

    def step(carry, x_t):
        h0_prev, h1_prev = carry
        h0_new = cell(x_t, h0_prev, wih0, whh0, bih0, bhh0)
        h1_new = cell(h0_new, h1_prev, wih1, whh1, bih1, bhh1)
        return (h0_new, h1_new), h1_new

    (h0_fin, h1_fin), outs = jax.lax.scan(step, (h0[0], h0[1]), x)
    return outs, jnp.stack([h0_fin, h1_fin], axis=0)


def init_params(key, input_size, hidden_size):
    """Deterministic uniform(-1/sqrt(H), 1/sqrt(H)) init, PyTorch-style.
    Weights are stored pre-transposed: W_* -> (in_features, 3*H)."""
    k = 1.0 / jnp.sqrt(hidden_size)
    keys = jax.random.split(key, 8)

    def u(kk, shape):
        return jax.random.uniform(kk, shape, jnp.float32, -k, k)

    wih0 = u(keys[0], (input_size, 3 * hidden_size))
    whh0 = u(keys[1], (hidden_size, 3 * hidden_size))
    bih0 = u(keys[2], (1, 3 * hidden_size))
    bhh0 = u(keys[3], (1, 3 * hidden_size))
    wih1 = u(keys[4], (hidden_size, 3 * hidden_size))
    whh1 = u(keys[5], (hidden_size, 3 * hidden_size))
    bih1 = u(keys[6], (1, 3 * hidden_size))
    bhh1 = u(keys[7], (1, 3 * hidden_size))
    return (wih0, whh0, bih0, bhh0, wih1, whh1, bih1, bhh1)


if __name__ == "__main__":
    SEQ_LEN = 8
    BATCH = 4
    INPUT_SIZE = 256
    HIDDEN_SIZE = 128
    NUM_LAYERS = 2

    root = jax.random.PRNGKey(0)
    k_param, k_x, k_h = jax.random.split(root, 3)

    params = init_params(k_param, INPUT_SIZE, HIDDEN_SIZE)
    prepped = prepare_params(params)          # one-time: bf16 casts + bias folding
    x = jax.random.normal(k_x, (SEQ_LEN, BATCH, INPUT_SIZE), jnp.float32)
    h0 = jax.random.normal(k_h, (NUM_LAYERS, BATCH, HIDDEN_SIZE), jnp.float32)

    out, h_n = decoder_rnn_forward(x, h0, prepped)
    out = jax.block_until_ready(out)
    h_n = jax.block_until_ready(h_n)

    ref_out, ref_hn = _reference_forward(x, h0, params)
    assert out.shape == (SEQ_LEN, BATCH, HIDDEN_SIZE)
    assert h_n.shape == (NUM_LAYERS, BATCH, HIDDEN_SIZE)
    # Tolerance reflects bf16 matmul operands (f32 accumulation & gate math).
    assert jnp.allclose(out, ref_out, atol=3e-2, rtol=3e-2)
    assert jnp.allclose(h_n, ref_hn, atol=3e-2, rtol=3e-2)

    print("KERNEL_OK")
</pallas_src>

<mosaic_0001>
module attributes {stable_mosaic.version = 11 : i64} {
  func.func @_decoder_gru_kernel(%arg0: memref<64x256xf32, #tpu.memory_space<vmem>>, %arg1: memref<2x8x128xf32, #tpu.memory_space<vmem>>, %arg2: memref<256x384xbf16, #tpu.memory_space<vmem>>, %arg3: memref<128x384xbf16, #tpu.memory_space<vmem>>, %arg4: memref<128x384xbf16, #tpu.memory_space<vmem>>, %arg5: memref<128x384xbf16, #tpu.memory_space<vmem>>, %arg6: memref<1x384xf32, #tpu.memory_space<vmem>>, %arg7: memref<1x128xf32, #tpu.memory_space<vmem>>, %arg8: memref<1x384xf32, #tpu.memory_space<vmem>>, %arg9: memref<1x128xf32, #tpu.memory_space<vmem>>, %arg10: memref<8x8x128xf32, #tpu.memory_space<vmem>>, %arg11: memref<2x8x128xf32, #tpu.memory_space<vmem>>, %arg12: memref<64x384xf32, #tpu.memory_space<vmem>>) attributes {dimension_semantics = [], scalar_prefetch = 0 : i64, scratch_operands = 1 : i64, tpu.core_type = #tpu.core_type<tc>} {
    %c0 = arith.constant 0 : index
    %c0_0 = arith.constant 0 : index
    %0 = vector.load %arg0[%c0, %c0_0] : memref<64x256xf32, #tpu.memory_space<vmem>>, vector<64x256xf32>
    %cst = arith.constant 0.000000e+00 : f32
    %1 = vector.broadcast %cst : f32 to vector<64x256xf32>
    %2 = arith.maximumf %0, %1 : vector<64x256xf32>
    %3 = arith.truncf %2 : vector<64x256xf32> to vector<64x256xbf16>
    %c0_1 = arith.constant 0 : index
    %c0_2 = arith.constant 0 : index
    %4 = vector.load %arg2[%c0_1, %c0_2] : memref<256x384xbf16, #tpu.memory_space<vmem>>, vector<256x384xbf16>
    %cst_3 = arith.constant dense<0.000000e+00> : vector<64x384xf32>
    %5 = tpu.matmul %3, %4, %cst_3 {dimension_numbers = #tpu.dot_dimension_numbers<[1], [0], [0], [1], [0, 0, 1, 1], [], []>} : vector<64x256xbf16>, vector<256x384xbf16>, vector<64x384xf32> -> vector<64x384xf32>
    %c0_4 = arith.constant 0 : index
    %c0_5 = arith.constant 0 : index
    %6 = vector.load %arg6[%c0_4, %c0_5] : memref<1x384xf32, #tpu.memory_space<vmem>>, vector<1x384xf32>
    %7 = vector.broadcast %6 : vector<1x384xf32> to vector<64x384xf32>
    %8 = arith.addf %5, %7 : vector<64x384xf32>
    %c0_6 = arith.constant 0 : index
    %c0_7 = arith.constant 0 : index
    %9 = vector.load %arg12[%c0_6, %c0_7] : memref<64x384xf32, #tpu.memory_space<vmem>>, vector<64x384xf32>
    tpu.vector_store %arg12[%c0_6, %c0_7], %8 {strides = array<i32>} : memref<64x384xf32, #tpu.memory_space<vmem>>, vector<64x384xf32>,
    %c0_8 = arith.constant 0 : index
    %c0_9 = arith.constant 0 : index
    %10 = vector.load %arg3[%c0_8, %c0_9] : memref<128x384xbf16, #tpu.memory_space<vmem>>, vector<128x384xbf16>
    %c0_10 = arith.constant 0 : index
    %c0_11 = arith.constant 0 : index
    %11 = vector.load %arg4[%c0_10, %c0_11] : memref<128x384xbf16, #tpu.memory_space<vmem>>, vector<128x384xbf16>
    %c0_12 = arith.constant 0 : index
    %c0_13 = arith.constant 0 : index
    %12 = vector.load %arg5[%c0_12, %c0_13] : memref<128x384xbf16, #tpu.memory_space<vmem>>, vector<128x384xbf16>
    %c0_14 = arith.constant 0 : index
    %c0_15 = arith.constant 0 : index
    %13 = vector.load %arg8[%c0_14, %c0_15] : memref<1x384xf32, #tpu.memory_space<vmem>>, vector<1x384xf32>
    %c0_16 = arith.constant 0 : index
    %c0_17 = arith.constant 0 : index
    %14 = vector.load %arg7[%c0_16, %c0_17] : memref<1x128xf32, #tpu.memory_space<vmem>>, vector<1x128xf32>
    %c0_18 = arith.constant 0 : index
    %c0_19 = arith.constant 0 : index
    %15 = vector.load %arg9[%c0_18, %c0_19] : memref<1x128xf32, #tpu.memory_space<vmem>>, vector<1x128xf32>
    %c0_20 = arith.constant 0 : index
    %c0_21 = arith.constant 0 : index
    %c0_22 = arith.constant 0 : index
    %16 = vector.load %arg1[%c0_20, %c0_21, %c0_22] : memref<2x8x128xf32, #tpu.memory_space<vmem>>, vector<1x8x128xf32>
    %17 = vector.shape_cast %16 : vector<1x8x128xf32> to vector<8x128xf32>
    %c1 = arith.constant 1 : index
    %c0_23 = arith.constant 0 : index
    %c0_24 = arith.constant 0 : index
    %18 = vector.load %arg1[%c1, %c0_23, %c0_24] : memref<2x8x128xf32, #tpu.memory_space<vmem>>, vector<1x8x128xf32>
    %19 = vector.shape_cast %18 : vector<1x8x128xf32> to vector<8x128xf32>
    %20 = arith.truncf %19 : vector<8x128xf32> to vector<8x128xbf16>
    %cst_25 = arith.constant dense<0.000000e+00> : vector<8x384xf32>
    %21 = tpu.matmul %20, %12, %cst_25 {dimension_numbers = #tpu.dot_dimension_numbers<[1], [0], [0], [1], [0, 0, 1, 1], [], []>} : vector<8x128xbf16>, vector<128x384xbf16>, vector<8x384xf32> -> vector<8x384xf32>
    %22 = arith.truncf %17 : vector<8x128xf32> to vector<8x128xbf16>
    %cst_26 = arith.constant dense<0.000000e+00> : vector<8x384xf32>
    %23 = tpu.matmul %22, %10, %cst_26 {dimension_numbers = #tpu.dot_dimension_numbers<[1], [0], [0], [1], [0, 0, 1, 1], [], []>} : vector<8x128xbf16>, vector<128x384xbf16>, vector<8x384xf32> -> vector<8x384xf32>
    %c0_27 = arith.constant 0 : index
    %c0_28 = arith.constant 0 : index
    %24 = vector.load %arg12[%c0_27, %c0_28] : memref<64x384xf32, #tpu.memory_space<vmem>>, vector<8x384xf32>
    %25 = vector.extract_strided_slice %24 {offsets = [0, 0], sizes = [8, 128], strides = [1, 1]} : vector<8x384xf32> to vector<8x128xf32>
    %26 = vector.extract_strided_slice %23 {offsets = [0, 0], sizes = [8, 128], strides = [1, 1]} : vector<8x384xf32> to vector<8x128xf32>
    %27 = arith.addf %25, %26 : vector<8x128xf32>
    %28 = arith.negf %27 : vector<8x128xf32>
    %29 = math.exp %28 : vector<8x128xf32>
    %cst_29 = arith.constant 1.000000e+00 : f32
    %30 = vector.broadcast %cst_29 : f32 to vector<8x128xf32>
    %31 = arith.addf %30, %29 : vector<8x128xf32>
    %32 = arith.divf %30, %31 : vector<8x128xf32>
    %33 = vector.extract_strided_slice %24 {offsets = [0, 128], sizes = [8, 128], strides = [1, 1]} : vector<8x384xf32> to vector<8x128xf32>
    %34 = vector.extract_strided_slice %23 {offsets = [0, 128], sizes = [8, 128], strides = [1, 1]} : vector<8x384xf32> to vector<8x128xf32>
    %35 = arith.addf %33, %34 : vector<8x128xf32>
    %36 = arith.negf %35 : vector<8x128xf32>
    %37 = math.exp %36 : vector<8x128xf32>
    %cst_30 = arith.constant 1.000000e+00 : f32
    %38 = vector.broadcast %cst_30 : f32 to vector<8x128xf32>
    %39 = arith.addf %38, %37 : vector<8x128xf32>
    %40 = arith.divf %38, %39 : vector<8x128xf32>
    %41 = vector.extract_strided_slice %24 {offsets = [0, 256], sizes = [8, 128], strides = [1, 1]} : vector<8x384xf32> to vector<8x128xf32>
    %42 = vector.extract_strided_slice %23 {offsets = [0, 256], sizes = [8, 128], strides = [1, 1]} : vector<8x384xf32> to vector<8x128xf32>
    %43 = vector.broadcast %14 : vector<1x128xf32> to vector<8x128xf32>
    %44 = arith.addf %42, %43 : vector<8x128xf32>
    %45 = arith.mulf %32, %44 : vector<8x128xf32>
    %46 = arith.addf %41, %45 : vector<8x128xf32>
    %47 = math.tanh %46 : vector<8x128xf32>
    %cst_31 = arith.constant 1.000000e+00 : f32
    %48 = vector.broadcast %cst_31 : f32 to vector<8x128xf32>
    %49 = arith.subf %48, %40 : vector<8x128xf32>
    %50 = arith.mulf %49, %47 : vector<8x128xf32>
    %51 = arith.mulf %40, %17 : vector<8x128xf32>
    %52 = arith.addf %50, %51 : vector<8x128xf32>
    %53 = arith.truncf %52 : vector<8x128xf32> to vector<8x128xbf16>
    %cst_32 = arith.constant dense<0.000000e+00> : vector<8x384xf32>
    %54 = tpu.matmul %53, %11, %cst_32 {dimension_numbers = #tpu.dot_dimension_numbers<[1], [0], [0], [1], [0, 0, 1, 1], [], []>} : vector<8x128xbf16>, vector<128x384xbf16>, vector<8x384xf32> -> vector<8x384xf32>
    %55 = vector.broadcast %13 : vector<1x384xf32> to vector<8x384xf32>
    %56 = arith.addf %54, %55 : vector<8x384xf32>
    %57 = vector.extract_strided_slice %56 {offsets = [0, 0], sizes = [8, 128], strides = [1, 1]} : vector<8x384xf32> to vector<8x128xf32>
    %58 = vector.extract_strided_slice %21 {offsets = [0, 0], sizes = [8, 128], strides = [1, 1]} : vector<8x384xf32> to vector<8x128xf32>
    %59 = arith.addf %57, %58 : vector<8x128xf32>
    %60 = arith.negf %59 : vector<8x128xf32>
    %61 = math.exp %60 : vector<8x128xf32>
    %cst_33 = arith.constant 1.000000e+00 : f32
    %62 = vector.broadcast %cst_33 : f32 to vector<8x128xf32>
    %63 = arith.addf %62, %61 : vector<8x128xf32>
    %64 = arith.divf %62, %63 : vector<8x128xf32>
    %65 = vector.extract_strided_slice %56 {offsets = [0, 128], sizes = [8, 128], strides = [1, 1]} : vector<8x384xf32> to vector<8x128xf32>
    %66 = vector.extract_strided_slice %21 {offsets = [0, 128], sizes = [8, 128], strides = [1, 1]} : vector<8x384xf32> to vector<8x128xf32>
    %67 = arith.addf %65, %66 : vector<8x128xf32>
    %68 = arith.negf %67 : vector<8x128xf32>
    %69 = math.exp %68 : vector<8x128xf32>
    %cst_34 = arith.constant 1.000000e+00 : f32
    %70 = vector.broadcast %cst_34 : f32 to vector<8x128xf32>
    %71 = arith.addf %70, %69 : vector<8x128xf32>
    %72 = arith.divf %70, %71 : vector<8x128xf32>
    %73 = vector.extract_strided_slice %56 {offsets = [0, 256], sizes = [8, 128], strides = [1, 1]} : vector<8x384xf32> to vector<8x128xf32>
    %74 = vector.extract_strided_slice %21 {offsets = [0, 256], sizes = [8, 128], strides = [1, 1]} : vector<8x384xf32> to vector<8x128xf32>
    %75 = vector.broadcast %15 : vector<1x128xf32> to vector<8x128xf32>
    %76 = arith.addf %74, %75 : vector<8x128xf32>
    %77 = arith.mulf %64, %76 : vector<8x128xf32>
    %78 = arith.addf %73, %77 : vector<8x128xf32>
    %79 = math.tanh %78 : vector<8x128xf32>
    %cst_35 = arith.constant 1.000000e+00 : f32
    %80 = vector.broadcast %cst_35 : f32 to vector<8x128xf32>
    %81 = arith.subf %80, %72 : vector<8x128xf32>
    %82 = arith.mulf %81, %79 : vector<8x128xf32>
    %83 = arith.mulf %72, %19 : vector<8x128xf32>
    %84 = arith.addf %82, %83 : vector<8x128xf32>
    %c0_36 = arith.constant 0 : index
    %c0_37 = arith.constant 0 : index
    %c0_38 = arith.constant 0 : index
    %85 = vector.load %arg10[%c0_36, %c0_37, %c0_38] : memref<8x8x128xf32, #tpu.memory_space<vmem>>, vector<1x8x128xf32>
    %86 = vector.shape_cast %85 : vector<1x8x128xf32> to vector<8x128xf32>
    %87 = vector.shape_cast %84 : vector<8x128xf32> to vector<1x8x128xf32>
    tpu.vector_store %arg10[%c0_36, %c0_37, %c0_38], %87 {strides = array<i32>} : memref<8x8x128xf32, #tpu.memory_space<vmem>>, vector<1x8x128xf32>,
    %88 = arith.truncf %84 : vector<8x128xf32> to vector<8x128xbf16>
    %cst_39 = arith.constant dense<0.000000e+00> : vector<8x384xf32>
    %89 = tpu.matmul %88, %12, %cst_39 {dimension_numbers = #tpu.dot_dimension_numbers<[1], [0], [0], [1], [0, 0, 1, 1], [], []>} : vector<8x128xbf16>, vector<128x384xbf16>, vector<8x384xf32> -> vector<8x384xf32>
    %90 = arith.truncf %52 : vector<8x128xf32> to vector<8x128xbf16>
    %cst_40 = arith.constant dense<0.000000e+00> : vector<8x384xf32>
    %91 = tpu.matmul %90, %10, %cst_40 {dimension_numbers = #tpu.dot_dimension_numbers<[1], [0], [0], [1], [0, 0, 1, 1], [], []>} : vector<8x128xbf16>, vector<128x384xbf16>, vector<8x384xf32> -> vector<8x384xf32>
    %c8 = arith.constant 8 : index
    %c0_41 = arith.constant 0 : index
    %92 = vector.load %arg12[%c8, %c0_41] : memref<64x384xf32, #tpu.memory_space<vmem>>, vector<8x384xf32>
    %93 = vector.extract_strided_slice %92 {offsets = [0, 0], sizes = [8, 128], strides = [1, 1]} : vector<8x384xf32> to vector<8x128xf32>
    %94 = vector.extract_strided_slice %91 {offsets = [0, 0], sizes = [8, 128], strides = [1, 1]} : vector<8x384xf32> to vector<8x128xf32>
    %95 = arith.addf %93, %94 : vector<8x128xf32>
    %96 = arith.negf %95 : vector<8x128xf32>
    %97 = math.exp %96 : vector<8x128xf32>
    %cst_42 = arith.constant 1.000000e+00 : f32
    %98 = vector.broadcast %cst_42 : f32 to vector<8x128xf32>
    %99 = arith.addf %98, %97 : vector<8x128xf32>
    %100 = arith.divf %98, %99 : vector<8x128xf32>
    %101 = vector.extract_strided_slice %92 {offsets = [0, 128], sizes = [8, 128], strides = [1, 1]} : vector<8x384xf32> to vector<8x128xf32>
    %102 = vector.extract_strided_slice %91 {offsets = [0, 128], sizes = [8, 128], strides = [1, 1]} : vector<8x384xf32> to vector<8x128xf32>
    %103 = arith.addf %101, %102 : vector<8x128xf32>
    %104 = arith.negf %103 : vector<8x128xf32>
    %105 = math.exp %104 : vector<8x128xf32>
    %cst_43 = arith.constant 1.000000e+00 : f32
    %106 = vector.broadcast %cst_43 : f32 to vector<8x128xf32>
    %107 = arith.addf %106, %105 : vector<8x128xf32>
    %108 = arith.divf %106, %107 : vector<8x128xf32>
    %109 = vector.extract_strided_slice %92 {offsets = [0, 256], sizes = [8, 128], strides = [1, 1]} : vector<8x384xf32> to vector<8x128xf32>
    %110 = vector.extract_strided_slice %91 {offsets = [0, 256], sizes = [8, 128], strides = [1, 1]} : vector<8x384xf32> to vector<8x128xf32>
    %111 = vector.broadcast %14 : vector<1x128xf32> to vector<8x128xf32>
    %112 = arith.addf %110, %111 : vector<8x128xf32>
    %113 = arith.mulf %100, %112 : vector<8x128xf32>
    %114 = arith.addf %109, %113 : vector<8x128xf32>
    %115 = math.tanh %114 : vector<8x128xf32>
    %cst_44 = arith.constant 1.000000e+00 : f32
    %116 = vector.broadcast %cst_44 : f32 to vector<8x128xf32>
    %117 = arith.subf %116, %108 : vector<8x128xf32>
    %118 = arith.mulf %117, %115 : vector<8x128xf32>
    %119 = arith.mulf %108, %52 : vector<8x128xf32>
    %120 = arith.addf %118, %119 : vector<8x128xf32>
    %121 = arith.truncf %120 : vector<8x128xf32> to vector<8x128xbf16>
    %cst_45 = arith.constant dense<0.000000e+00> : vector<8x384xf32>
    %122 = tpu.matmul %121, %11, %cst_45 {dimension_numbers = #tpu.dot_dimension_numbers<[1], [0], [0], [1], [0, 0, 1, 1], [], []>} : vector<8x128xbf16>, vector<128x384xbf16>, vector<8x384xf32> -> vector<8x384xf32>
    %123 = vector.broadcast %13 : vector<1x384xf32> to vector<8x384xf32>
    %124 = arith.addf %122, %123 : vector<8x384xf32>
    %125 = vector.extract_strided_slice %124 {offsets = [0, 0], sizes = [8, 128], strides = [1, 1]} : vector<8x384xf32> to vector<8x128xf32>
    %126 = vector.extract_strided_slice %89 {offsets = [0, 0], sizes = [8, 128], strides = [1, 1]} : vector<8x384xf32> to vector<8x128xf32>
    %127 = arith.addf %125, %126 : vector<8x128xf32>
    %128 = arith.negf %127 : vector<8x128xf32>
    %129 = math.exp %128 : vector<8x128xf32>
    %cst_46 = arith.constant 1.000000e+00 : f32
    %130 = vector.broadcast %cst_46 : f32 to vector<8x128xf32>
    %131 = arith.addf %130, %129 : vector<8x128xf32>
    %132 = arith.divf %130, %131 : vector<8x128xf32>
    %133 = vector.extract_strided_slice %124 {offsets = [0, 128], sizes = [8, 128], strides = [1, 1]} : vector<8x384xf32> to vector<8x128xf32>
    %134 = vector.extract_strided_slice %89 {offsets = [0, 128], sizes = [8, 128], strides = [1, 1]} : vector<8x384xf32> to vector<8x128xf32>
    %135 = arith.addf %133, %134 : vector<8x128xf32>
    %136 = arith.negf %135 : vector<8x128xf32>
    %137 = math.exp %136 : vector<8x128xf32>
    %cst_47 = arith.constant 1.000000e+00 : f32
    %138 = vector.broadcast %cst_47 : f32 to vector<8x128xf32>
    %139 = arith.addf %138, %137 : vector<8x128xf32>
    %140 = arith.divf %138, %139 : vector<8x128xf32>
    %141 = vector.extract_strided_slice %124 {offsets = [0, 256], sizes = [8, 128], strides = [1, 1]} : vector<8x384xf32> to vector<8x128xf32>
    %142 = vector.extract_strided_slice %89 {offsets = [0, 256], sizes = [8, 128], strides = [1, 1]} : vector<8x384xf32> to vector<8x128xf32>
    %143 = vector.broadcast %15 : vector<1x128xf32> to vector<8x128xf32>
    %144 = arith.addf %142, %143 : vector<8x128xf32>
    %145 = arith.mulf %132, %144 : vector<8x128xf32>
    %146 = arith.addf %141, %145 : vector<8x128xf32>
    %147 = math.tanh %146 : vector<8x128xf32>
    %cst_48 = arith.constant 1.000000e+00 : f32
    %148 = vector.broadcast %cst_48 : f32 to vector<8x128xf32>
    %149 = arith.subf %148, %140 : vector<8x128xf32>
    %150 = arith.mulf %149, %147 : vector<8x128xf32>
    %151 = arith.mulf %140, %84 : vector<8x128xf32>
    %152 = arith.addf %150, %151 : vector<8x128xf32>
    %c1_49 = arith.constant 1 : index
    %c0_50 = arith.constant 0 : index
    %c0_51 = arith.constant 0 : index
    %153 = vector.load %arg10[%c1_49, %c0_50, %c0_51] : memref<8x8x128xf32, #tpu.memory_space<vmem>>, vector<1x8x128xf32>
    %154 = vector.shape_cast %153 : vector<1x8x128xf32> to vector<8x128xf32>
    %155 = vector.shape_cast %152 : vector<8x128xf32> to vector<1x8x128xf32>
    tpu.vector_store %arg10[%c1_49, %c0_50, %c0_51], %155 {strides = array<i32>} : memref<8x8x128xf32, #tpu.memory_space<vmem>>, vector<1x8x128xf32>,
    %156 = arith.truncf %152 : vector<8x128xf32> to vector<8x128xbf16>
    %cst_52 = arith.constant dense<0.000000e+00> : vector<8x384xf32>
    %157 = tpu.matmul %156, %12, %cst_52 {dimension_numbers = #tpu.dot_dimension_numbers<[1], [0], [0], [1], [0, 0, 1, 1], [], []>} : vector<8x128xbf16>, vector<128x384xbf16>, vector<8x384xf32> -> vector<8x384xf32>
    %158 = arith.truncf %120 : vector<8x128xf32> to vector<8x128xbf16>
    %cst_53 = arith.constant dense<0.000000e+00> : vector<8x384xf32>
    %159 = tpu.matmul %158, %10, %cst_53 {dimension_numbers = #tpu.dot_dimension_numbers<[1], [0], [0], [1], [0, 0, 1, 1], [], []>} : vector<8x128xbf16>, vector<128x384xbf16>, vector<8x384xf32> -> vector<8x384xf32>
    %c16 = arith.constant 16 : index
    %c0_54 = arith.constant 0 : index
    %160 = vector.load %arg12[%c16, %c0_54] : memref<64x384xf32, #tpu.memory_space<vmem>>, vector<8x384xf32>
    %161 = vector.extract_strided_slice %160 {offsets = [0, 0], sizes = [8, 128], strides = [1, 1]} : vector<8x384xf32> to vector<8x128xf32>
    %162 = vector.extract_strided_slice %159 {offsets = [0, 0], sizes = [8, 128], strides = [1, 1]} : vector<8x384xf32> to vector<8x128xf32>
    %163 = arith.addf %161, %162 : vector<8x128xf32>
    %164 = arith.negf %163 : vector<8x128xf32>
    %165 = math.exp %164 : vector<8x128xf32>
    %cst_55 = arith.constant 1.000000e+00 : f32
    %166 = vector.broadcast %cst_55 : f32 to vector<8x128xf32>
    %167 = arith.addf %166, %165 : vector<8x128xf32>
    %168 = arith.divf %166, %167 : vector<8x128xf32>
    %169 = vector.extract_strided_slice %160 {offsets = [0, 128], sizes = [8, 128], strides = [1, 1]} : vector<8x384xf32> to vector<8x128xf32>
    %170 = vector.extract_strided_slice %159 {offsets = [0, 128], sizes = [8, 128], strides = [1, 1]} : vector<8x384xf32> to vector<8x128xf32>
    %171 = arith.addf %169, %170 : vector<8x128xf32>
    %172 = arith.negf %171 : vector<8x128xf32>
    %173 = math.exp %172 : vector<8x128xf32>
    %cst_56 = arith.constant 1.000000e+00 : f32
    %174 = vector.broadcast %cst_56 : f32 to vector<8x128xf32>
    %175 = arith.addf %174, %173 : vector<8x128xf32>
    %176 = arith.divf %174, %175 : vector<8x128xf32>
    %177 = vector.extract_strided_slice %160 {offsets = [0, 256], sizes = [8, 128], strides = [1, 1]} : vector<8x384xf32> to vector<8x128xf32>
    %178 = vector.extract_strided_slice %159 {offsets = [0, 256], sizes = [8, 128], strides = [1, 1]} : vector<8x384xf32> to vector<8x128xf32>
    %179 = vector.broadcast %14 : vector<1x128xf32> to vector<8x128xf32>
    %180 = arith.addf %178, %179 : vector<8x128xf32>
    %181 = arith.mulf %168, %180 : vector<8x128xf32>
    %182 = arith.addf %177, %181 : vector<8x128xf32>
    %183 = math.tanh %182 : vector<8x128xf32>
    %cst_57 = arith.constant 1.000000e+00 : f32
    %184 = vector.broadcast %cst_57 : f32 to vector<8x128xf32>
    %185 = arith.subf %184, %176 : vector<8x128xf32>
    %186 = arith.mulf %185, %183 : vector<8x128xf32>
    %187 = arith.mulf %176, %120 : vector<8x128xf32>
    %188 = arith.addf %186, %187 : vector<8x128xf32>
    %189 = arith.truncf %188 : vector<8x128xf32> to vector<8x128xbf16>
    %cst_58 = arith.constant dense<0.000000e+00> : vector<8x384xf32>
    %190 = tpu.matmul %189, %11, %cst_58 {dimension_numbers = #tpu.dot_dimension_numbers<[1], [0], [0], [1], [0, 0, 1, 1], [], []>} : vector<8x128xbf16>, vector<128x384xbf16>, vector<8x384xf32> -> vector<8x384xf32>
    %191 = vector.broadcast %13 : vector<1x384xf32> to vector<8x384xf32>
    %192 = arith.addf %190, %191 : vector<8x384xf32>
    %193 = vector.extract_strided_slice %192 {offsets = [0, 0], sizes = [8, 128], strides = [1, 1]} : vector<8x384xf32> to vector<8x128xf32>
    %194 = vector.extract_strided_slice %157 {offsets = [0, 0], sizes = [8, 128], strides = [1, 1]} : vector<8x384xf32> to vector<8x128xf32>
    %195 = arith.addf %193, %194 : vector<8x128xf32>
    %196 = arith.negf %195 : vector<8x128xf32>
    %197 = math.exp %196 : vector<8x128xf32>
    %cst_59 = arith.constant 1.000000e+00 : f32
    %198 = vector.broadcast %cst_59 : f32 to vector<8x128xf32>
    %199 = arith.addf %198, %197 : vector<8x128xf32>
    %200 = arith.divf %198, %199 : vector<8x128xf32>
    %201 = vector.extract_strided_slice %192 {offsets = [0, 128], sizes = [8, 128], strides = [1, 1]} : vector<8x384xf32> to vector<8x128xf32>
    %202 = vector.extract_strided_slice %157 {offsets = [0, 128], sizes = [8, 128], strides = [1, 1]} : vector<8x384xf32> to vector<8x128xf32>
    %203 = arith.addf %201, %202 : vector<8x128xf32>
    %204 = arith.negf %203 : vector<8x128xf32>
    %205 = math.exp %204 : vector<8x128xf32>
    %cst_60 = arith.constant 1.000000e+00 : f32
    %206 = vector.broadcast %cst_60 : f32 to vector<8x128xf32>
    %207 = arith.addf %206, %205 : vector<8x128xf32>
    %208 = arith.divf %206, %207 : vector<8x128xf32>
    %209 = vector.extract_strided_slice %192 {offsets = [0, 256], sizes = [8, 128], strides = [1, 1]} : vector<8x384xf32> to vector<8x128xf32>
    %210 = vector.extract_strided_slice %157 {offsets = [0, 256], sizes = [8, 128], strides = [1, 1]} : vector<8x384xf32> to vector<8x128xf32>
    %211 = vector.broadcast %15 : vector<1x128xf32> to vector<8x128xf32>
    %212 = arith.addf %210, %211 : vector<8x128xf32>
    %213 = arith.mulf %200, %212 : vector<8x128xf32>
    %214 = arith.addf %209, %213 : vector<8x128xf32>
    %215 = math.tanh %214 : vector<8x128xf32>
    %cst_61 = arith.constant 1.000000e+00 : f32
    %216 = vector.broadcast %cst_61 : f32 to vector<8x128xf32>
    %217 = arith.subf %216, %208 : vector<8x128xf32>
    %218 = arith.mulf %217, %215 : vector<8x128xf32>
    %219 = arith.mulf %208, %152 : vector<8x128xf32>
    %220 = arith.addf %218, %219 : vector<8x128xf32>
    %c2 = arith.constant 2 : index
    %c0_62 = arith.constant 0 : index
    %c0_63 = arith.constant 0 : index
    %221 = vector.load %arg10[%c2, %c0_62, %c0_63] : memref<8x8x128xf32, #tpu.memory_space<vmem>>, vector<1x8x128xf32>
    %222 = vector.shape_cast %221 : vector<1x8x128xf32> to vector<8x128xf32>
    %223 = vector.shape_cast %220 : vector<8x128xf32> to vector<1x8x128xf32>
    tpu.vector_store %arg10[%c2, %c0_62, %c0_63], %223 {strides = array<i32>} : memref<8x8x128xf32, #tpu.memory_space<vmem>>, vector<1x8x128xf32>,
    %224 = arith.truncf %220 : vector<8x128xf32> to vector<8x128xbf16>
    %cst_64 = arith.constant dense<0.000000e+00> : vector<8x384xf32>
    %225 = tpu.matmul %224, %12, %cst_64 {dimension_numbers = #tpu.dot_dimension_numbers<[1], [0], [0], [1], [0, 0, 1, 1], [], []>} : vector<8x128xbf16>, vector<128x384xbf16>, vector<8x384xf32> -> vector<8x384xf32>
    %226 = arith.truncf %188 : vector<8x128xf32> to vector<8x128xbf16>
    %cst_65 = arith.constant dense<0.000000e+00> : vector<8x384xf32>
    %227 = tpu.matmul %226, %10, %cst_65 {dimension_numbers = #tpu.dot_dimension_numbers<[1], [0], [0], [1], [0, 0, 1, 1], [], []>} : vector<8x128xbf16>, vector<128x384xbf16>, vector<8x384xf32> -> vector<8x384xf32>
    %c24 = arith.constant 24 : index
    %c0_66 = arith.constant 0 : index
    %228 = vector.load %arg12[%c24, %c0_66] : memref<64x384xf32, #tpu.memory_space<vmem>>, vector<8x384xf32>
    %229 = vector.extract_strided_slice %228 {offsets = [0, 0], sizes = [8, 128], strides = [1, 1]} : vector<8x384xf32> to vector<8x128xf32>
    %230 = vector.extract_strided_slice %227 {offsets = [0, 0], sizes = [8, 128], strides = [1, 1]} : vector<8x384xf32> to vector<8x128xf32>
    %231 = arith.addf %229, %230 : vector<8x128xf32>
    %232 = arith.negf %231 : vector<8x128xf32>
    %233 = math.exp %232 : vector<8x128xf32>
    %cst_67 = arith.constant 1.000000e+00 : f32
    %234 = vector.broadcast %cst_67 : f32 to vector<8x128xf32>
    %235 = arith.addf %234, %233 : vector<8x128xf32>
    %236 = arith.divf %234, %235 : vector<8x128xf32>
    %237 = vector.extract_strided_slice %228 {offsets = [0, 128], sizes = [8, 128], strides = [1, 1]} : vector<8x384xf32> to vector<8x128xf32>
    %238 = vector.extract_strided_slice %227 {offsets = [0, 128], sizes = [8, 128], strides = [1, 1]} : vector<8x384xf32> to vector<8x128xf32>
    %239 = arith.addf %237, %238 : vector<8x128xf32>
    %240 = arith.negf %239 : vector<8x128xf32>
    %241 = math.exp %240 : vector<8x128xf32>
    %cst_68 = arith.constant 1.000000e+00 : f32
    %242 = vector.broadcast %cst_68 : f32 to vector<8x128xf32>
    %243 = arith.addf %242, %241 : vector<8x128xf32>
    %244 = arith.divf %242, %243 : vector<8x128xf32>
    %245 = vector.extract_strided_slice %228 {offsets = [0, 256], sizes = [8, 128], strides = [1, 1]} : vector<8x384xf32> to vector<8x128xf32>
    %246 = vector.extract_strided_slice %227 {offsets = [0, 256], sizes = [8, 128], strides = [1, 1]} : vector<8x384xf32> to vector<8x128xf32>
    %247 = vector.broadcast %14 : vector<1x128xf32> to vector<8x128xf32>
    %248 = arith.addf %246, %247 : vector<8x128xf32>
    %249 = arith.mulf %236, %248 : vector<8x128xf32>
    %250 = arith.addf %245, %249 : vector<8x128xf32>
    %251 = math.tanh %250 : vector<8x128xf32>
    %cst_69 = arith.constant 1.000000e+00 : f32
    %252 = vector.broadcast %cst_69 : f32 to vector<8x128xf32>
    %253 = arith.subf %252, %244 : vector<8x128xf32>
    %254 = arith.mulf %253, %251 : vector<8x128xf32>
    %255 = arith.mulf %244, %188 : vector<8x128xf32>
    %256 = arith.addf %254, %255 : vector<8x128xf32>
    %257 = arith.truncf %256 : vector<8x128xf32> to vector<8x128xbf16>
    %cst_70 = arith.constant dense<0.000000e+00> : vector<8x384xf32>
    %258 = tpu.matmul %257, %11, %cst_70 {dimension_numbers = #tpu.dot_dimension_numbers<[1], [0], [0], [1], [0, 0, 1, 1], [], []>} : vector<8x128xbf16>, vector<128x384xbf16>, vector<8x384xf32> -> vector<8x384xf32>
    %259 = vector.broadcast %13 : vector<1x384xf32> to vector<8x384xf32>
    %260 = arith.addf %258, %259 : vector<8x384xf32>
    %261 = vector.extract_strided_slice %260 {offsets = [0, 0], sizes = [8, 128], strides = [1, 1]} : vector<8x384xf32> to vector<8x128xf32>
    %262 = vector.extract_strided_slice %225 {offsets = [0, 0], sizes = [8, 128], strides = [1, 1]} : vector<8x384xf32> to vector<8x128xf32>
    %263 = arith.addf %261, %262 : vector<8x128xf32>
    %264 = arith.negf %263 : vector<8x128xf32>
    %265 = math.exp %264 : vector<8x128xf32>
    %cst_71 = arith.constant 1.000000e+00 : f32
    %266 = vector.broadcast %cst_71 : f32 to vector<8x128xf32>
    %267 = arith.addf %266, %265 : vector<8x128xf32>
    %268 = arith.divf %266, %267 : vector<8x128xf32>
    %269 = vector.extract_strided_slice %260 {offsets = [0, 128], sizes = [8, 128], strides = [1, 1]} : vector<8x384xf32> to vector<8x128xf32>
    %270 = vector.extract_strided_slice %225 {offsets = [0, 128], sizes = [8, 128], strides = [1, 1]} : vector<8x384xf32> to vector<8x128xf32>
    %271 = arith.addf %269, %270 : vector<8x128xf32>
    %272 = arith.negf %271 : vector<8x128xf32>
    %273 = math.exp %272 : vector<8x128xf32>
    %cst_72 = arith.constant 1.000000e+00 : f32
    %274 = vector.broadcast %cst_72 : f32 to vector<8x128xf32>
    %275 = arith.addf %274, %273 : vector<8x128xf32>
    %276 = arith.divf %274, %275 : vector<8x128xf32>
    %277 = vector.extract_strided_slice %260 {offsets = [0, 256], sizes = [8, 128], strides = [1, 1]} : vector<8x384xf32> to vector<8x128xf32>
    %278 = vector.extract_strided_slice %225 {offsets = [0, 256], sizes = [8, 128], strides = [1, 1]} : vector<8x384xf32> to vector<8x128xf32>
    %279 = vector.broadcast %15 : vector<1x128xf32> to vector<8x128xf32>
    %280 = arith.addf %278, %279 : vector<8x128xf32>
    %281 = arith.mulf %268, %280 : vector<8x128xf32>
    %282 = arith.addf %277, %281 : vector<8x128xf32>
    %283 = math.tanh %282 : vector<8x128xf32>
    %cst_73 = arith.constant 1.000000e+00 : f32
    %284 = vector.broadcast %cst_73 : f32 to vector<8x128xf32>
    %285 = arith.subf %284, %276 : vector<8x128xf32>
    %286 = arith.mulf %285, %283 : vector<8x128xf32>
    %287 = arith.mulf %276, %220 : vector<8x128xf32>
    %288 = arith.addf %286, %287 : vector<8x128xf32>
    %c3 = arith.constant 3 : index
    %c0_74 = arith.constant 0 : index
    %c0_75 = arith.constant 0 : index
    %289 = vector.load %arg10[%c3, %c0_74, %c0_75] : memref<8x8x128xf32, #tpu.memory_space<vmem>>, vector<1x8x128xf32>
    %290 = vector.shape_cast %289 : vector<1x8x128xf32> to vector<8x128xf32>
    %291 = vector.shape_cast %288 : vector<8x128xf32> to vector<1x8x128xf32>
    tpu.vector_store %arg10[%c3, %c0_74, %c0_75], %291 {strides = array<i32>} : memref<8x8x128xf32, #tpu.memory_space<vmem>>, vector<1x8x128xf32>,
    %292 = arith.truncf %288 : vector<8x128xf32> to vector<8x128xbf16>
    %cst_76 = arith.constant dense<0.000000e+00> : vector<8x384xf32>
    %293 = tpu.matmul %292, %12, %cst_76 {dimension_numbers = #tpu.dot_dimension_numbers<[1], [0], [0], [1], [0, 0, 1, 1], [], []>} : vector<8x128xbf16>, vector<128x384xbf16>, vector<8x384xf32> -> vector<8x384xf32>
    %294 = arith.truncf %256 : vector<8x128xf32> to vector<8x128xbf16>
    %cst_77 = arith.constant dense<0.000000e+00> : vector<8x384xf32>
    %295 = tpu.matmul %294, %10, %cst_77 {dimension_numbers = #tpu.dot_dimension_numbers<[1], [0], [0], [1], [0, 0, 1, 1], [], []>} : vector<8x128xbf16>, vector<128x384xbf16>, vector<8x384xf32> -> vector<8x384xf32>
    %c32 = arith.constant 32 : index
    %c0_78 = arith.constant 0 : index
    %296 = vector.load %arg12[%c32, %c0_78] : memref<64x384xf32, #tpu.memory_space<vmem>>, vector<8x384xf32>
    %297 = vector.extract_strided_slice %296 {offsets = [0, 0], sizes = [8, 128], strides = [1, 1]} : vector<8x384xf32> to vector<8x128xf32>
    %298 = vector.extract_strided_slice %295 {offsets = [0, 0], sizes = [8, 128], strides = [1, 1]} : vector<8x384xf32> to vector<8x128xf32>
    %299 = arith.addf %297, %298 : vector<8x128xf32>
    %300 = arith.negf %299 : vector<8x128xf32>
    %301 = math.exp %300 : vector<8x128xf32>
    %cst_79 = arith.constant 1.000000e+00 : f32
    %302 = vector.broadcast %cst_79 : f32 to vector<8x128xf32>
    %303 = arith.addf %302, %301 : vector<8x128xf32>
    %304 = arith.divf %302, %303 : vector<8x128xf32>
    %305 = vector.extract_strided_slice %296 {offsets = [0, 128], sizes = [8, 128], strides = [1, 1]} : vector<8x384xf32> to vector<8x128xf32>
    %306 = vector.extract_strided_slice %295 {offsets = [0, 128], sizes = [8, 128], strides = [1, 1]} : vector<8x384xf32> to vector<8x128xf32>
    %307 = arith.addf %305, %306 : vector<8x128xf32>
    %308 = arith.negf %307 : vector<8x128xf32>
    %309 = math.exp %308 : vector<8x128xf32>
    %cst_80 = arith.constant 1.000000e+00 : f32
    %310 = vector.broadcast %cst_80 : f32 to vector<8x128xf32>
    %311 = arith.addf %310, %309 : vector<8x128xf32>
    %312 = arith.divf %310, %311 : vector<8x128xf32>
    %313 = vector.extract_strided_slice %296 {offsets = [0, 256], sizes = [8, 128], strides = [1, 1]} : vector<8x384xf32> to vector<8x128xf32>
    %314 = vector.extract_strided_slice %295 {offsets = [0, 256], sizes = [8, 128], strides = [1, 1]} : vector<8x384xf32> to vector<8x128xf32>
    %315 = vector.broadcast %14 : vector<1x128xf32> to vector<8x128xf32>
    %316 = arith.addf %314, %315 : vector<8x128xf32>
    %317 = arith.mulf %304, %316 : vector<8x128xf32>
    %318 = arith.addf %313, %317 : vector<8x128xf32>
    %319 = math.tanh %318 : vector<8x128xf32>
    %cst_81 = arith.constant 1.000000e+00 : f32
    %320 = vector.broadcast %cst_81 : f32 to vector<8x128xf32>
    %321 = arith.subf %320, %312 : vector<8x128xf32>
    %322 = arith.mulf %321, %319 : vector<8x128xf32>
    %323 = arith.mulf %312, %256 : vector<8x128xf32>
    %324 = arith.addf %322, %323 : vector<8x128xf32>
    %325 = arith.truncf %324 : vector<8x128xf32> to vector<8x128xbf16>
    %cst_82 = arith.constant dense<0.000000e+00> : vector<8x384xf32>
    %326 = tpu.matmul %325, %11, %cst_82 {dimension_numbers = #tpu.dot_dimension_numbers<[1], [0], [0], [1], [0, 0, 1, 1], [], []>} : vector<8x128xbf16>, vector<128x384xbf16>, vector<8x384xf32> -> vector<8x384xf32>
    %327 = vector.broadcast %13 : vector<1x384xf32> to vector<8x384xf32>
    %328 = arith.addf %326, %327 : vector<8x384xf32>
    %329 = vector.extract_strided_slice %328 {offsets = [0, 0], sizes = [8, 128], strides = [1, 1]} : vector<8x384xf32> to vector<8x128xf32>
    %330 = vector.extract_strided_slice %293 {offsets = [0, 0], sizes = [8, 128], strides = [1, 1]} : vector<8x384xf32> to vector<8x128xf32>
    %331 = arith.addf %329, %330 : vector<8x128xf32>
    %332 = arith.negf %331 : vector<8x128xf32>
    %333 = math.exp %332 : vector<8x128xf32>
    %cst_83 = arith.constant 1.000000e+00 : f32
    %334 = vector.broadcast %cst_83 : f32 to vector<8x128xf32>
    %335 = arith.addf %334, %333 : vector<8x128xf32>
    %336 = arith.divf %334, %335 : vector<8x128xf32>
    %337 = vector.extract_strided_slice %328 {offsets = [0, 128], sizes = [8, 128], strides = [1, 1]} : vector<8x384xf32> to vector<8x128xf32>
    %338 = vector.extract_strided_slice %293 {offsets = [0, 128], sizes = [8, 128], strides = [1, 1]} : vector<8x384xf32> to vector<8x128xf32>
    %339 = arith.addf %337, %338 : vector<8x128xf32>
    %340 = arith.negf %339 : vector<8x128xf32>
    %341 = math.exp %340 : vector<8x128xf32>
    %cst_84 = arith.constant 1.000000e+00 : f32
    %342 = vector.broadcast %cst_84 : f32 to vector<8x128xf32>
    %343 = arith.addf %342, %341 : vector<8x128xf32>
    %344 = arith.divf %342, %343 : vector<8x128xf32>
    %345 = vector.extract_strided_slice %328 {offsets = [0, 256], sizes = [8, 128], strides = [1, 1]} : vector<8x384xf32> to vector<8x128xf32>
    %346 = vector.extract_strided_slice %293 {offsets = [0, 256], sizes = [8, 128], strides = [1, 1]} : vector<8x384xf32> to vector<8x128xf32>
    %347 = vector.broadcast %15 : vector<1x128xf32> to vector<8x128xf32>
    %348 = arith.addf %346, %347 : vector<8x128xf32>
    %349 = arith.mulf %336, %348 : vector<8x128xf32>
    %350 = arith.addf %345, %349 : vector<8x128xf32>
    %351 = math.tanh %350 : vector<8x128xf32>
    %cst_85 = arith.constant 1.000000e+00 : f32
    %352 = vector.broadcast %cst_85 : f32 to vector<8x128xf32>
    %353 = arith.subf %352, %344 : vector<8x128xf32>
    %354 = arith.mulf %353, %351 : vector<8x128xf32>
    %355 = arith.mulf %344, %288 : vector<8x128xf32>
    %356 = arith.addf %354, %355 : vector<8x128xf32>
    %c4 = arith.constant 4 : index
    %c0_86 = arith.constant 0 : index
    %c0_87 = arith.constant 0 : index
    %357 = vector.load %arg10[%c4, %c0_86, %c0_87] : memref<8x8x128xf32, #tpu.memory_space<vmem>>, vector<1x8x128xf32>
    %358 = vector.shape_cast %357 : vector<1x8x128xf32> to vector<8x128xf32>
    %359 = vector.shape_cast %356 : vector<8x128xf32> to vector<1x8x128xf32>
    tpu.vector_store %arg10[%c4, %c0_86, %c0_87], %359 {strides = array<i32>} : memref<8x8x128xf32, #tpu.memory_space<vmem>>, vector<1x8x128xf32>,
    %360 = arith.truncf %356 : vector<8x128xf32> to vector<8x128xbf16>
    %cst_88 = arith.constant dense<0.000000e+00> : vector<8x384xf32>
    %361 = tpu.matmul %360, %12, %cst_88 {dimension_numbers = #tpu.dot_dimension_numbers<[1], [0], [0], [1], [0, 0, 1, 1], [], []>} : vector<8x128xbf16>, vector<128x384xbf16>, vector<8x384xf32> -> vector<8x384xf32>
    %362 = arith.truncf %324 : vector<8x128xf32> to vector<8x128xbf16>
    %cst_89 = arith.constant dense<0.000000e+00> : vector<8x384xf32>
    %363 = tpu.matmul %362, %10, %cst_89 {dimension_numbers = #tpu.dot_dimension_numbers<[1], [0], [0], [1], [0, 0, 1, 1], [], []>} : vector<8x128xbf16>, vector<128x384xbf16>, vector<8x384xf32> -> vector<8x384xf32>
    %c40 = arith.constant 40 : index
    %c0_90 = arith.constant 0 : index
    %364 = vector.load %arg12[%c40, %c0_90] : memref<64x384xf32, #tpu.memory_space<vmem>>, vector<8x384xf32>
    %365 = vector.extract_strided_slice %364 {offsets = [0, 0], sizes = [8, 128], strides = [1, 1]} : vector<8x384xf32> to vector<8x128xf32>
    %366 = vector.extract_strided_slice %363 {offsets = [0, 0], sizes = [8, 128], strides = [1, 1]} : vector<8x384xf32> to vector<8x128xf32>
    %367 = arith.addf %365, %366 : vector<8x128xf32>
    %368 = arith.negf %367 : vector<8x128xf32>
    %369 = math.exp %368 : vector<8x128xf32>
    %cst_91 = arith.constant 1.000000e+00 : f32
    %370 = vector.broadcast %cst_91 : f32 to vector<8x128xf32>
    %371 = arith.addf %370, %369 : vector<8x128xf32>
    %372 = arith.divf %370, %371 : vector<8x128xf32>
    %373 = vector.extract_strided_slice %364 {offsets = [0, 128], sizes = [8, 128], strides = [1, 1]} : vector<8x384xf32> to vector<8x128xf32>
    %374 = vector.extract_strided_slice %363 {offsets = [0, 128], sizes = [8, 128], strides = [1, 1]} : vector<8x384xf32> to vector<8x128xf32>
    %375 = arith.addf %373, %374 : vector<8x128xf32>
    %376 = arith.negf %375 : vector<8x128xf32>
    %377 = math.exp %376 : vector<8x128xf32>
    %cst_92 = arith.constant 1.000000e+00 : f32
    %378 = vector.broadcast %cst_92 : f32 to vector<8x128xf32>
    %379 = arith.addf %378, %377 : vector<8x128xf32>
    %380 = arith.divf %378, %379 : vector<8x128xf32>
    %381 = vector.extract_strided_slice %364 {offsets = [0, 256], sizes = [8, 128], strides = [1, 1]} : vector<8x384xf32> to vector<8x128xf32>
    %382 = vector.extract_strided_slice %363 {offsets = [0, 256], sizes = [8, 128], strides = [1, 1]} : vector<8x384xf32> to vector<8x128xf32>
    %383 = vector.broadcast %14 : vector<1x128xf32> to vector<8x128xf32>
    %384 = arith.addf %382, %383 : vector<8x128xf32>
    %385 = arith.mulf %372, %384 : vector<8x128xf32>
    %386 = arith.addf %381, %385 : vector<8x128xf32>
    %387 = math.tanh %386 : vector<8x128xf32>
    %cst_93 = arith.constant 1.000000e+00 : f32
    %388 = vector.broadcast %cst_93 : f32 to vector<8x128xf32>
    %389 = arith.subf %388, %380 : vector<8x128xf32>
    %390 = arith.mulf %389, %387 : vector<8x128xf32>
    %391 = arith.mulf %380, %324 : vector<8x128xf32>
    %392 = arith.addf %390, %391 : vector<8x128xf32>
    %393 = arith.truncf %392 : vector<8x128xf32> to vector<8x128xbf16>
    %cst_94 = arith.constant dense<0.000000e+00> : vector<8x384xf32>
    %394 = tpu.matmul %393, %11, %cst_94 {dimension_numbers = #tpu.dot_dimension_numbers<[1], [0], [0], [1], [0, 0, 1, 1], [], []>} : vector<8x128xbf16>, vector<128x384xbf16>, vector<8x384xf32> -> vector<8x384xf32>
    %395 = vector.broadcast %13 : vector<1x384xf32> to vector<8x384xf32>
    %396 = arith.addf %394, %395 : vector<8x384xf32>
    %397 = vector.extract_strided_slice %396 {offsets = [0, 0], sizes = [8, 128], strides = [1, 1]} : vector<8x384xf32> to vector<8x128xf32>
    %398 = vector.extract_strided_slice %361 {offsets = [0, 0], sizes = [8, 128], strides = [1, 1]} : vector<8x384xf32> to vector<8x128xf32>
    %399 = arith.addf %397, %398 : vector<8x128xf32>
    %400 = arith.negf %399 : vector<8x128xf32>
    %401 = math.exp %400 : vector<8x128xf32>
    %cst_95 = arith.constant 1.000000e+00 : f32
    %402 = vector.broadcast %cst_95 : f32 to vector<8x128xf32>
    %403 = arith.addf %402, %401 : vector<8x128xf32>
    %404 = arith.divf %402, %403 : vector<8x128xf32>
    %405 = vector.extract_strided_slice %396 {offsets = [0, 128], sizes = [8, 128], strides = [1, 1]} : vector<8x384xf32> to vector<8x128xf32>
    %406 = vector.extract_strided_slice %361 {offsets = [0, 128], sizes = [8, 128], strides = [1, 1]} : vector<8x384xf32> to vector<8x128xf32>
    %407 = arith.addf %405, %406 : vector<8x128xf32>
    %408 = arith.negf %407 : vector<8x128xf32>
    %409 = math.exp %408 : vector<8x128xf32>
    %cst_96 = arith.constant 1.000000e+00 : f32
    %410 = vector.broadcast %cst_96 : f32 to vector<8x128xf32>
    %411 = arith.addf %410, %409 : vector<8x128xf32>
    %412 = arith.divf %410, %411 : vector<8x128xf32>
    %413 = vector.extract_strided_slice %396 {offsets = [0, 256], sizes = [8, 128], strides = [1, 1]} : vector<8x384xf32> to vector<8x128xf32>
    %414 = vector.extract_strided_slice %361 {offsets = [0, 256], sizes = [8, 128], strides = [1, 1]} : vector<8x384xf32> to vector<8x128xf32>
    %415 = vector.broadcast %15 : vector<1x128xf32> to vector<8x128xf32>
    %416 = arith.addf %414, %415 : vector<8x128xf32>
    %417 = arith.mulf %404, %416 : vector<8x128xf32>
    %418 = arith.addf %413, %417 : vector<8x128xf32>
    %419 = math.tanh %418 : vector<8x128xf32>
    %cst_97 = arith.constant 1.000000e+00 : f32
    %420 = vector.broadcast %cst_97 : f32 to vector<8x128xf32>
    %421 = arith.subf %420, %412 : vector<8x128xf32>
    %422 = arith.mulf %421, %419 : vector<8x128xf32>
    %423 = arith.mulf %412, %356 : vector<8x128xf32>
    %424 = arith.addf %422, %423 : vector<8x128xf32>
    %c5 = arith.constant 5 : index
    %c0_98 = arith.constant 0 : index
    %c0_99 = arith.constant 0 : index
    %425 = vector.load %arg10[%c5, %c0_98, %c0_99] : memref<8x8x128xf32, #tpu.memory_space<vmem>>, vector<1x8x128xf32>
    %426 = vector.shape_cast %425 : vector<1x8x128xf32> to vector<8x128xf32>
    %427 = vector.shape_cast %424 : vector<8x128xf32> to vector<1x8x128xf32>
    tpu.vector_store %arg10[%c5, %c0_98, %c0_99], %427 {strides = array<i32>} : memref<8x8x128xf32, #tpu.memory_space<vmem>>, vector<1x8x128xf32>,
    %428 = arith.truncf %424 : vector<8x128xf32> to vector<8x128xbf16>
    %cst_100 = arith.constant dense<0.000000e+00> : vector<8x384xf32>
    %429 = tpu.matmul %428, %12, %cst_100 {dimension_numbers = #tpu.dot_dimension_numbers<[1], [0], [0], [1], [0, 0, 1, 1], [], []>} : vector<8x128xbf16>, vector<128x384xbf16>, vector<8x384xf32> -> vector<8x384xf32>
    %430 = arith.truncf %392 : vector<8x128xf32> to vector<8x128xbf16>
    %cst_101 = arith.constant dense<0.000000e+00> : vector<8x384xf32>
    %431 = tpu.matmul %430, %10, %cst_101 {dimension_numbers = #tpu.dot_dimension_numbers<[1], [0], [0], [1], [0, 0, 1, 1], [], []>} : vector<8x128xbf16>, vector<128x384xbf16>, vector<8x384xf32> -> vector<8x384xf32>
    %c48 = arith.constant 48 : index
    %c0_102 = arith.constant 0 : index
    %432 = vector.load %arg12[%c48, %c0_102] : memref<64x384xf32, #tpu.memory_space<vmem>>, vector<8x384xf32>
    %433 = vector.extract_strided_slice %432 {offsets = [0, 0], sizes = [8, 128], strides = [1, 1]} : vector<8x384xf32> to vector<8x128xf32>
    %434 = vector.extract_strided_slice %431 {offsets = [0, 0], sizes = [8, 128], strides = [1, 1]} : vector<8x384xf32> to vector<8x128xf32>
    %435 = arith.addf %433, %434 : vector<8x128xf32>
    %436 = arith.negf %435 : vector<8x128xf32>
    %437 = math.exp %436 : vector<8x128xf32>
    %cst_103 = arith.constant 1.000000e+00 : f32
    %438 = vector.broadcast %cst_103 : f32 to vector<8x128xf32>
    %439 = arith.addf %438, %437 : vector<8x128xf32>
    %440 = arith.divf %438, %439 : vector<8x128xf32>
    %441 = vector.extract_strided_slice %432 {offsets = [0, 128], sizes = [8, 128], strides = [1, 1]} : vector<8x384xf32> to vector<8x128xf32>
    %442 = vector.extract_strided_slice %431 {offsets = [0, 128], sizes = [8, 128], strides = [1, 1]} : vector<8x384xf32> to vector<8x128xf32>
    %443 = arith.addf %441, %442 : vector<8x128xf32>
    %444 = arith.negf %443 : vector<8x128xf32>
    %445 = math.exp %444 : vector<8x128xf32>
    %cst_104 = arith.constant 1.000000e+00 : f32
    %446 = vector.broadcast %cst_104 : f32 to vector<8x128xf32>
    %447 = arith.addf %446, %445 : vector<8x128xf32>
    %448 = arith.divf %446, %447 : vector<8x128xf32>
    %449 = vector.extract_strided_slice %432 {offsets = [0, 256], sizes = [8, 128], strides = [1, 1]} : vector<8x384xf32> to vector<8x128xf32>
    %450 = vector.extract_strided_slice %431 {offsets = [0, 256], sizes = [8, 128], strides = [1, 1]} : vector<8x384xf32> to vector<8x128xf32>
    %451 = vector.broadcast %14 : vector<1x128xf32> to vector<8x128xf32>
    %452 = arith.addf %450, %451 : vector<8x128xf32>
    %453 = arith.mulf %440, %452 : vector<8x128xf32>
    %454 = arith.addf %449, %453 : vector<8x128xf32>
    %455 = math.tanh %454 : vector<8x128xf32>
    %cst_105 = arith.constant 1.000000e+00 : f32
    %456 = vector.broadcast %cst_105 : f32 to vector<8x128xf32>
    %457 = arith.subf %456, %448 : vector<8x128xf32>
    %458 = arith.mulf %457, %455 : vector<8x128xf32>
    %459 = arith.mulf %448, %392 : vector<8x128xf32>
    %460 = arith.addf %458, %459 : vector<8x128xf32>
    %461 = arith.truncf %460 : vector<8x128xf32> to vector<8x128xbf16>
    %cst_106 = arith.constant dense<0.000000e+00> : vector<8x384xf32>
    %462 = tpu.matmul %461, %11, %cst_106 {dimension_numbers = #tpu.dot_dimension_numbers<[1], [0], [0], [1], [0, 0, 1, 1], [], []>} : vector<8x128xbf16>, vector<128x384xbf16>, vector<8x384xf32> -> vector<8x384xf32>
    %463 = vector.broadcast %13 : vector<1x384xf32> to vector<8x384xf32>
    %464 = arith.addf %462, %463 : vector<8x384xf32>
    %465 = vector.extract_strided_slice %464 {offsets = [0, 0], sizes = [8, 128], strides = [1, 1]} : vector<8x384xf32> to vector<8x128xf32>
    %466 = vector.extract_strided_slice %429 {offsets = [0, 0], sizes = [8, 128], strides = [1, 1]} : vector<8x384xf32> to vector<8x128xf32>
    %467 = arith.addf %465, %466 : vector<8x128xf32>
    %468 = arith.negf %467 : vector<8x128xf32>
    %469 = math.exp %468 : vector<8x128xf32>
    %cst_107 = arith.constant 1.000000e+00 : f32
    %470 = vector.broadcast %cst_107 : f32 to vector<8x128xf32>
    %471 = arith.addf %470, %469 : vector<8x128xf32>
    %472 = arith.divf %470, %471 : vector<8x128xf32>
    %473 = vector.extract_strided_slice %464 {offsets = [0, 128], sizes = [8, 128], strides = [1, 1]} : vector<8x384xf32> to vector<8x128xf32>
    %474 = vector.extract_strided_slice %429 {offsets = [0, 128], sizes = [8, 128], strides = [1, 1]} : vector<8x384xf32> to vector<8x128xf32>
    %475 = arith.addf %473, %474 : vector<8x128xf32>
    %476 = arith.negf %475 : vector<8x128xf32>
    %477 = math.exp %476 : vector<8x128xf32>
    %cst_108 = arith.constant 1.000000e+00 : f32
    %478 = vector.broadcast %cst_108 : f32 to vector<8x128xf32>
    %479 = arith.addf %478, %477 : vector<8x128xf32>
    %480 = arith.divf %478, %479 : vector<8x128xf32>
    %481 = vector.extract_strided_slice %464 {offsets = [0, 256], sizes = [8, 128], strides = [1, 1]} : vector<8x384xf32> to vector<8x128xf32>
    %482 = vector.extract_strided_slice %429 {offsets = [0, 256], sizes = [8, 128], strides = [1, 1]} : vector<8x384xf32> to vector<8x128xf32>
    %483 = vector.broadcast %15 : vector<1x128xf32> to vector<8x128xf32>
    %484 = arith.addf %482, %483 : vector<8x128xf32>
    %485 = arith.mulf %472, %484 : vector<8x128xf32>
    %486 = arith.addf %481, %485 : vector<8x128xf32>
    %487 = math.tanh %486 : vector<8x128xf32>
    %cst_109 = arith.constant 1.000000e+00 : f32
    %488 = vector.broadcast %cst_109 : f32 to vector<8x128xf32>
    %489 = arith.subf %488, %480 : vector<8x128xf32>
    %490 = arith.mulf %489, %487 : vector<8x128xf32>
    %491 = arith.mulf %480, %424 : vector<8x128xf32>
    %492 = arith.addf %490, %491 : vector<8x128xf32>
    %c6 = arith.constant 6 : index
    %c0_110 = arith.constant 0 : index
    %c0_111 = arith.constant 0 : index
    %493 = vector.load %arg10[%c6, %c0_110, %c0_111] : memref<8x8x128xf32, #tpu.memory_space<vmem>>, vector<1x8x128xf32>
    %494 = vector.shape_cast %493 : vector<1x8x128xf32> to vector<8x128xf32>
    %495 = vector.shape_cast %492 : vector<8x128xf32> to vector<1x8x128xf32>
    tpu.vector_store %arg10[%c6, %c0_110, %c0_111], %495 {strides = array<i32>} : memref<8x8x128xf32, #tpu.memory_space<vmem>>, vector<1x8x128xf32>,
    %496 = arith.truncf %492 : vector<8x128xf32> to vector<8x128xbf16>
    %cst_112 = arith.constant dense<0.000000e+00> : vector<8x384xf32>
    %497 = tpu.matmul %496, %12, %cst_112 {dimension_numbers = #tpu.dot_dimension_numbers<[1], [0], [0], [1], [0, 0, 1, 1], [], []>} : vector<8x128xbf16>, vector<128x384xbf16>, vector<8x384xf32> -> vector<8x384xf32>
    %498 = arith.truncf %460 : vector<8x128xf32> to vector<8x128xbf16>
    %cst_113 = arith.constant dense<0.000000e+00> : vector<8x384xf32>
    %499 = tpu.matmul %498, %10, %cst_113 {dimension_numbers = #tpu.dot_dimension_numbers<[1], [0], [0], [1], [0, 0, 1, 1], [], []>} : vector<8x128xbf16>, vector<128x384xbf16>, vector<8x384xf32> -> vector<8x384xf32>
    %c56 = arith.constant 56 : index
    %c0_114 = arith.constant 0 : index
    %500 = vector.load %arg12[%c56, %c0_114] : memref<64x384xf32, #tpu.memory_space<vmem>>, vector<8x384xf32>
    %501 = vector.extract_strided_slice %500 {offsets = [0, 0], sizes = [8, 128], strides = [1, 1]} : vector<8x384xf32> to vector<8x128xf32>
    %502 = vector.extract_strided_slice %499 {offsets = [0, 0], sizes = [8, 128], strides = [1, 1]} : vector<8x384xf32> to vector<8x128xf32>
    %503 = arith.addf %501, %502 : vector<8x128xf32>
    %504 = arith.negf %503 : vector<8x128xf32>
    %505 = math.exp %504 : vector<8x128xf32>
    %cst_115 = arith.constant 1.000000e+00 : f32
    %506 = vector.broadcast %cst_115 : f32 to vector<8x128xf32>
    %507 = arith.addf %506, %505 : vector<8x128xf32>
    %508 = arith.divf %506, %507 : vector<8x128xf32>
    %509 = vector.extract_strided_slice %500 {offsets = [0, 128], sizes = [8, 128], strides = [1, 1]} : vector<8x384xf32> to vector<8x128xf32>
    %510 = vector.extract_strided_slice %499 {offsets = [0, 128], sizes = [8, 128], strides = [1, 1]} : vector<8x384xf32> to vector<8x128xf32>
    %511 = arith.addf %509, %510 : vector<8x128xf32>
    %512 = arith.negf %511 : vector<8x128xf32>
    %513 = math.exp %512 : vector<8x128xf32>
    %cst_116 = arith.constant 1.000000e+00 : f32
    %514 = vector.broadcast %cst_116 : f32 to vector<8x128xf32>
    %515 = arith.addf %514, %513 : vector<8x128xf32>
    %516 = arith.divf %514, %515 : vector<8x128xf32>
    %517 = vector.extract_strided_slice %500 {offsets = [0, 256], sizes = [8, 128], strides = [1, 1]} : vector<8x384xf32> to vector<8x128xf32>
    %518 = vector.extract_strided_slice %499 {offsets = [0, 256], sizes = [8, 128], strides = [1, 1]} : vector<8x384xf32> to vector<8x128xf32>
    %519 = vector.broadcast %14 : vector<1x128xf32> to vector<8x128xf32>
    %520 = arith.addf %518, %519 : vector<8x128xf32>
    %521 = arith.mulf %508, %520 : vector<8x128xf32>
    %522 = arith.addf %517, %521 : vector<8x128xf32>
    %523 = math.tanh %522 : vector<8x128xf32>
    %cst_117 = arith.constant 1.000000e+00 : f32
    %524 = vector.broadcast %cst_117 : f32 to vector<8x128xf32>
    %525 = arith.subf %524, %516 : vector<8x128xf32>
    %526 = arith.mulf %525, %523 : vector<8x128xf32>
    %527 = arith.mulf %516, %460 : vector<8x128xf32>
    %528 = arith.addf %526, %527 : vector<8x128xf32>
    %529 = arith.truncf %528 : vector<8x128xf32> to vector<8x128xbf16>
    %cst_118 = arith.constant dense<0.000000e+00> : vector<8x384xf32>
    %530 = tpu.matmul %529, %11, %cst_118 {dimension_numbers = #tpu.dot_dimension_numbers<[1], [0], [0], [1], [0, 0, 1, 1], [], []>} : vector<8x128xbf16>, vector<128x384xbf16>, vector<8x384xf32> -> vector<8x384xf32>
    %531 = vector.broadcast %13 : vector<1x384xf32> to vector<8x384xf32>
    %532 = arith.addf %530, %531 : vector<8x384xf32>
    %533 = vector.extract_strided_slice %532 {offsets = [0, 0], sizes = [8, 128], strides = [1, 1]} : vector<8x384xf32> to vector<8x128xf32>
    %534 = vector.extract_strided_slice %497 {offsets = [0, 0], sizes = [8, 128], strides = [1, 1]} : vector<8x384xf32> to vector<8x128xf32>
    %535 = arith.addf %533, %534 : vector<8x128xf32>
    %536 = arith.negf %535 : vector<8x128xf32>
    %537 = math.exp %536 : vector<8x128xf32>
    %cst_119 = arith.constant 1.000000e+00 : f32
    %538 = vector.broadcast %cst_119 : f32 to vector<8x128xf32>
    %539 = arith.addf %538, %537 : vector<8x128xf32>
    %540 = arith.divf %538, %539 : vector<8x128xf32>
    %541 = vector.extract_strided_slice %532 {offsets = [0, 128], sizes = [8, 128], strides = [1, 1]} : vector<8x384xf32> to vector<8x128xf32>
    %542 = vector.extract_strided_slice %497 {offsets = [0, 128], sizes = [8, 128], strides = [1, 1]} : vector<8x384xf32> to vector<8x128xf32>
    %543 = arith.addf %541, %542 : vector<8x128xf32>
    %544 = arith.negf %543 : vector<8x128xf32>
    %545 = math.exp %544 : vector<8x128xf32>
    %cst_120 = arith.constant 1.000000e+00 : f32
    %546 = vector.broadcast %cst_120 : f32 to vector<8x128xf32>
    %547 = arith.addf %546, %545 : vector<8x128xf32>
    %548 = arith.divf %546, %547 : vector<8x128xf32>
    %549 = vector.extract_strided_slice %532 {offsets = [0, 256], sizes = [8, 128], strides = [1, 1]} : vector<8x384xf32> to vector<8x128xf32>
    %550 = vector.extract_strided_slice %497 {offsets = [0, 256], sizes = [8, 128], strides = [1, 1]} : vector<8x384xf32> to vector<8x128xf32>
    %551 = vector.broadcast %15 : vector<1x128xf32> to vector<8x128xf32>
    %552 = arith.addf %550, %551 : vector<8x128xf32>
    %553 = arith.mulf %540, %552 : vector<8x128xf32>
    %554 = arith.addf %549, %553 : vector<8x128xf32>
    %555 = math.tanh %554 : vector<8x128xf32>
    %cst_121 = arith.constant 1.000000e+00 : f32
    %556 = vector.broadcast %cst_121 : f32 to vector<8x128xf32>
    %557 = arith.subf %556, %548 : vector<8x128xf32>
    %558 = arith.mulf %557, %555 : vector<8x128xf32>
    %559 = arith.mulf %548, %492 : vector<8x128xf32>
    %560 = arith.addf %558, %559 : vector<8x128xf32>
    %c7 = arith.constant 7 : index
    %c0_122 = arith.constant 0 : index
    %c0_123 = arith.constant 0 : index
    %561 = vector.load %arg10[%c7, %c0_122, %c0_123] : memref<8x8x128xf32, #tpu.memory_space<vmem>>, vector<1x8x128xf32>
    %562 = vector.shape_cast %561 : vector<1x8x128xf32> to vector<8x128xf32>
    %563 = vector.shape_cast %560 : vector<8x128xf32> to vector<1x8x128xf32>
    tpu.vector_store %arg10[%c7, %c0_122, %c0_123], %563 {strides = array<i32>} : memref<8x8x128xf32, #tpu.memory_space<vmem>>, vector<1x8x128xf32>,
    %c0_124 = arith.constant 0 : index
    %c0_125 = arith.constant 0 : index
    %c0_126 = arith.constant 0 : index
    %564 = vector.load %arg11[%c0_124, %c0_125, %c0_126] : memref<2x8x128xf32, #tpu.memory_space<vmem>>, vector<1x8x128xf32>
    %565 = vector.shape_cast %564 : vector<1x8x128xf32> to vector<8x128xf32>
    %566 = vector.shape_cast %528 : vector<8x128xf32> to vector<1x8x128xf32>
    tpu.vector_store %arg11[%c0_124, %c0_125, %c0_126], %566 {strides = array<i32>} : memref<2x8x128xf32, #tpu.memory_space<vmem>>, vector<1x8x128xf32>,
    %c1_127 = arith.constant 1 : index
    %c0_128 = arith.constant 0 : index
    %c0_129 = arith.constant 0 : index
    %567 = vector.load %arg11[%c1_127, %c0_128, %c0_129] : memref<2x8x128xf32, #tpu.memory_space<vmem>>, vector<1x8x128xf32>
    %568 = vector.shape_cast %567 : vector<1x8x128xf32> to vector<8x128xf32>
    %569 = vector.shape_cast %560 : vector<8x128xf32> to vector<1x8x128xf32>
    tpu.vector_store %arg11[%c1_127, %c0_128, %c0_129], %569 {strides = array<i32>} : memref<2x8x128xf32, #tpu.memory_space<vmem>>, vector<1x8x128xf32>,
    return
  }
}

</mosaic_0001>

<llo_original>
// kernel: decoder_rnn_forward.1
$region0: #{decoder_rnn_forward.1}
  #allocation0 [shape = 'u32[]', space=smem, size = 0x4, offset = 0x4, fixed_abs, tag = 'smem constant byte address 0x4 - core index']
  #allocation1 [shape = 'u32[72,128]{1,0:T(1,128)}', space=vmem, size = 0x9000, scoped, tag = 'internal scratch']
  #allocation2 [shape = 'f32[64,384]{1,0:T(8,128)}', space=vmem, size = 0x18000, scoped, tag = 'scratch operand']
  %s0 = inlined_call_operand.vmem [shape: f32[64,256], index: 0, kind: input, shape index: {}]
  %s1 = inlined_call_operand.vmem [shape: f32[2,8,128], index: 1, kind: input, shape index: {}]
  %s2 = inlined_call_operand.hbm [shape: bf16[256,384], index: 2, kind: input, shape index: {}]
  %s3 = inlined_call_operand.vmem [shape: bf16[128,384], index: 3, kind: input, shape index: {}]
  %s4 = inlined_call_operand.hbm [shape: bf16[128,384], index: 4, kind: input, shape index: {}]
  %s5 = inlined_call_operand.hbm [shape: bf16[128,384], index: 5, kind: input, shape index: {}]
  %s6 = inlined_call_operand.vmem [shape: f32[1,384], index: 6, kind: input, shape index: {}]
  %s7 = inlined_call_operand.vmem [shape: f32[1,128], index: 7, kind: input, shape index: {}]
  %s8 = inlined_call_operand.vmem [shape: f32[1,384], index: 8, kind: input, shape index: {}]
  %s9 = inlined_call_operand.vmem [shape: f32[1,128], index: 9, kind: input, shape index: {}]
  %s10 = inlined_call_operand.vmem [shape: f32[8,8,128], index: 10, kind: output, shape index: {0}]
  %s11 = inlined_call_operand.vmem [shape: f32[2,8,128], index: 11, kind: output, shape index: {1}]
  %12 = xla_tuple %s10, %s11
  %s13 = sld [smem:[#allocation0]]
  $region70: #{decoder_rnn_forward.1} parent=0
    _
  %s15 = ssub.s32 1, %s13
  %s16 = scalar_select 0, %s15, %s13
  $region1: #{decoder_rnn_forward.1} parent=0
    #allocation3 [shape = 'u8[196608]{0}', space=vmem, size = 0x30000, scoped, tag = 'input window, operand 2, single buffered']
    #allocation4 [shape = 's32[1]{0}', space=sflag, size = 0x4, scoped, tag = 'scoped memory for decoder_rnn_forward.1']
    #allocation5 [shape = 'u8[98304]{0}', space=vmem, size = 0x18000, scoped, tag = 'input window, operand 4, single buffered']
    #allocation6 [shape = 's32[1]{0}', space=sflag, size = 0x4, scoped, tag = 'scoped memory for decoder_rnn_forward.1']
    #allocation7 [shape = 'u8[98304]{0}', space=vmem, size = 0x18000, scoped, tag = 'input window, operand 5, single buffered']
    %17 = vsyncpa [#allocation4], 0
    %18 = vsyncpa [#allocation6], 0
    // Predicated region
    $region2: #{decoder_rnn_forward.1} parent=1 // pred_check
      _
    $region3: #{decoder_rnn_forward.1} parent=1 // pred_check_branch
      %20 = sbr.rel (0) target = $region5
    $region4: #{decoder_rnn_forward.1} parent=1 // pred_region
      _
    $region5: #{decoder_rnn_forward.1} parent=1 // pred_fallthru
      _
    // Predicated region
    $region6: #{decoder_rnn_forward.1} parent=1 // pred_check
      _
    $region7: #{decoder_rnn_forward.1} parent=1 // pred_check_branch
      %22 = sbr.rel (0) target = $region9
    $region8: #{decoder_rnn_forward.1} parent=1 // pred_region
      _
    $region9: #{decoder_rnn_forward.1} parent=1 // pred_fallthru
      _
    // Predicated region
    $region10: #{decoder_rnn_forward.1} parent=1 // pred_check
      _
    $region11: #{decoder_rnn_forward.1} parent=1 // pred_check_branch
      %24 = sbr.rel (0) target = $region13
    $region12: #{decoder_rnn_forward.1} parent=1 // pred_region
      %26 = vsyncadd [#allocation4], 0
      %s27 = sshll.u32 %s2, 4
      %s28 = int_to_ptr.hbm [resolvable:$true] %s27
      %s29 = sshll.u32 [#allocation3], 4
      %s30 = int_to_ptr.vmem [resolvable:$true] %s29
      %35 = dma.hbm_to_vmem [thread:$0]  %s28, 6144, %s30, [#allocation4], 192, 192, 12
    $region13: #{decoder_rnn_forward.1} parent=1 // pred_fallthru
      _
    // Predicated region
    $region14: #{decoder_rnn_forward.1} parent=1 // pred_check
      _
    $region15: #{decoder_rnn_forward.1} parent=1 // pred_check_branch
      %37 = sbr.rel (0) target = $region17
    $region16: #{decoder_rnn_forward.1} parent=1 // pred_region
      _
    $region17: #{decoder_rnn_forward.1} parent=1 // pred_fallthru
      _
    // Predicated region
    $region18: #{decoder_rnn_forward.1} parent=1 // pred_check
      _
    $region19: #{decoder_rnn_forward.1} parent=1 // pred_check_branch
      %39 = sbr.rel (0) target = $region21
    $region20: #{decoder_rnn_forward.1} parent=1 // pred_region
      %41 = vsyncadd [#allocation6], 0
      %s42 = sshll.u32 %s4, 4
      %s43 = int_to_ptr.hbm [resolvable:$true] %s42
      %s44 = sshll.u32 [#allocation5], 4
      %s45 = int_to_ptr.vmem [resolvable:$true] %s44
      %50 = dma.hbm_to_vmem [thread:$0]  %s43, 3072, %s45, [#allocation6], 192, 192, 12
    $region21: #{decoder_rnn_forward.1} parent=1 // pred_fallthru
      _
    // Predicated region
    $region22: #{decoder_rnn_forward.1} parent=1 // pred_check
      _
    $region23: #{decoder_rnn_forward.1} parent=1 // pred_check_branch
      %52 = sbr.rel (0) target = $region25
    $region24: #{decoder_rnn_forward.1} parent=1 // pred_region
      %54 = vsyncadd [#allocation6], 0
      %s55 = sshll.u32 %s5, 4
      %s56 = int_to_ptr.hbm [resolvable:$true] %s55
      %s57 = sshll.u32 [#allocation7], 4
      %s58 = int_to_ptr.vmem [resolvable:$true] %s57
      %63 = dma.hbm_to_vmem [thread:$0]  %s56, 3072, %s58, [#allocation6], 192, 192, 12
    $region25: #{decoder_rnn_forward.1} parent=1 // pred_fallthru
      _
    // Predicated region
    $region26: #{decoder_rnn_forward.1} parent=1 // pred_check
      _
    $region27: #{decoder_rnn_forward.1} parent=1 // pred_check_branch
      %65 = sbr.rel (0) target = $region29
    $region28: #{decoder_rnn_forward.1} parent=1 // pred_region
      _
    $region29: #{decoder_rnn_forward.1} parent=1 // pred_fallthru
      _
    // Predicated region
    $region30: #{decoder_rnn_forward.1} parent=1 // pred_check
      _
    $region31: #{decoder_rnn_forward.1} parent=1 // pred_check_branch
      %67 = sbr.rel (0) target = $region33
    $region32: #{decoder_rnn_forward.1} parent=1 // pred_region
      _
    $region33: #{decoder_rnn_forward.1} parent=1 // pred_fallthru
      _
    // Predicated region
    $region34: #{decoder_rnn_forward.1} parent=1 // pred_check
      _
    $region35: #{decoder_rnn_forward.1} parent=1 // pred_check_branch
      %69 = sbr.rel (0) target = $region37
    $region36: #{decoder_rnn_forward.1} parent=1 // pred_region
      _
    $region37: #{decoder_rnn_forward.1} parent=1 // pred_fallthru
      _
    // Predicated region
    $region38: #{decoder_rnn_forward.1} parent=1 // pred_check
      _
    $region39: #{decoder_rnn_forward.1} parent=1 // pred_check_branch
      %71 = sbr.rel (0) target = $region41
    $region40: #{decoder_rnn_forward.1} parent=1 // pred_region
      _
    $region41: #{decoder_rnn_forward.1} parent=1 // pred_fallthru
      _
    // Predicated region
    $region42: #{decoder_rnn_forward.1} parent=1 // pred_check
      _
    $region43: #{decoder_rnn_forward.1} parent=1 // pred_check_branch
      %73 = sbr.rel (0) target = $region45
    $region44: #{decoder_rnn_forward.1} parent=1 // pred_region
      %75 = dma.done [#allocation4], 6144
    $region45: #{decoder_rnn_forward.1} parent=1 // pred_fallthru
      _
    // Predicated region
    $region46: #{decoder_rnn_forward.1} parent=1 // pred_check
      _
    $region47: #{decoder_rnn_forward.1} parent=1 // pred_check_branch
      %77 = sbr.rel (0) target = $region49
    $region48: #{decoder_rnn_forward.1} parent=1 // pred_region
      %79 = dma.done [#allocation6], 3072
    $region49: #{decoder_rnn_forward.1} parent=1 // pred_fallthru
      _
    // Predicated region
    $region50: #{decoder_rnn_forward.1} parent=1 // pred_check
      _
    $region51: #{decoder_rnn_forward.1} parent=1 // pred_check_branch
      %81 = sbr.rel (0) target = $region53
    $region52: #{decoder_rnn_forward.1} parent=1 // pred_region
      %83 = dma.done [#allocation6], 3072
    $region53: #{decoder_rnn_forward.1} parent=1 // pred_fallthru
      _
    %v84 = vld [vmem:[%s0] sm:$0xff]
    %v85 = vld [vmem:[%s0 + $0x8] sm:$0xff]
    %v86 = vld [vmem:[%s0 + $0x10] sm:$0xff]
    %v87 = vld [vmem:[%s0 + $0x18] sm:$0xff]
    %v88 = vld [vmem:[%s0 + $0x20] sm:$0xff]
    %v89 = vld [vmem:[%s0 + $0x28] sm:$0xff]
    %v90 = vld [vmem:[%s0 + $0x30] sm:$0xff]
    %v91 = vld [vmem:[%s0 + $0x38] sm:$0xff]
    %v92 = vld [vmem:[%s0 + $0x40] sm:$0xff]
    %v93 = vld [vmem:[%s0 + $0x48] sm:$0xff]
    %v94 = vld [vmem:[%s0 + $0x50] sm:$0xff]
    %v95 = vld [vmem:[%s0 + $0x58] sm:$0xff]
    %v96 = vld [vmem:[%s0 + $0x60] sm:$0xff]
    %v97 = vld [vmem:[%s0 + $0x68] sm:$0xff]
    %v98 = vld [vmem:[%s0 + $0x70] sm:$0xff]
    %v99 = vld [vmem:[%s0 + $0x78] sm:$0xff]
    %v100 = vmax.f32 %v84, 0.0
    %v101 = vmax.f32 %v85, 0.0
    %v102 = vmax.f32 %v86, 0.0
    %v103 = vmax.f32 %v87, 0.0
    %v104 = vmax.f32 %v88, 0.0
    %v105 = vmax.f32 %v89, 0.0
    %v106 = vmax.f32 %v90, 0.0
    %v107 = vmax.f32 %v91, 0.0
    %v108 = vmax.f32 %v92, 0.0
    %v109 = vmax.f32 %v93, 0.0
    %v110 = vmax.f32 %v94, 0.0
    %v111 = vmax.f32 %v95, 0.0
    %v112 = vmax.f32 %v96, 0.0
    %v113 = vmax.f32 %v97, 0.0
    %v114 = vmax.f32 %v98, 0.0
    %v115 = vmax.f32 %v99, 0.0
    %v116 = vpack.c.bf16 %v102, %v100
    %v117 = vpack.c.bf16 %v103, %v101
    %v118 = vpack.c.bf16 %v106, %v104
    %v119 = vpack.c.bf16 %v107, %v105
    %v120 = vpack.c.bf16 %v110, %v108
    %v121 = vpack.c.bf16 %v111, %v109
    %v122 = vpack.c.bf16 %v114, %v112
    %v123 = vpack.c.bf16 %v115, %v113
    %v124 = vld [vmem:[#allocation3] sm:$0xff]
    %v125 = vld [vmem:[#allocation3 + $0x8] sm:$0xf]
    %v126 = vld [vmem:[#allocation3 + $0xc] sm:$0xff]
    %v127 = vld [vmem:[#allocation3 + $0x14] sm:$0xf]
    %v128 = vld [vmem:[#allocation3 + $0x18] sm:$0xff]
    %v129 = vld [vmem:[#allocation3 + $0x20] sm:$0xf]
    %v130 = vld [vmem:[#allocation3 + $0x24] sm:$0xff]
    %v131 = vld [vmem:[#allocation3 + $0x2c] sm:$0xf]
    %v132 = vld [vmem:[#allocation3 + $0x30] sm:$0xff]
    %v133 = vld [vmem:[#allocation3 + $0x38] sm:$0xf]
    %v134 = vld [vmem:[#allocation3 + $0x3c] sm:$0xff]
    %v135 = vld [vmem:[#allocation3 + $0x44] sm:$0xf]
    %v136 = vld [vmem:[#allocation3 + $0x48] sm:$0xff]
    %v137 = vld [vmem:[#allocation3 + $0x50] sm:$0xf]
    %v138 = vld [vmem:[#allocation3 + $0x54] sm:$0xff]
    %v139 = vld [vmem:[#allocation3 + $0x5c] sm:$0xf]
    %v140 = vld [vmem:[#allocation3 + $0x60] sm:$0xff]
    %v141 = vld [vmem:[#allocation3 + $0x68] sm:$0xf]
    %v142 = vld [vmem:[#allocation3 + $0x6c] sm:$0xff]
    %v143 = vld [vmem:[#allocation3 + $0x74] sm:$0xf]
    %v144 = vld [vmem:[#allocation3 + $0x78] sm:$0xff]
    %v145 = vld [vmem:[#allocation3 + $0x80] sm:$0xf]
    %v146 = vld [vmem:[#allocation3 + $0x84] sm:$0xff]
    %v147 = vld [vmem:[#allocation3 + $0x8c] sm:$0xf]
    %v148 = vld [vmem:[#allocation3 + $0x90] sm:$0xff]
    %v149 = vld [vmem:[#allocation3 + $0x98] sm:$0xf]
    %v150 = vld [vmem:[#allocation3 + $0x9c] sm:$0xff]
    %v151 = vld [vmem:[#allocation3 + $0xa4] sm:$0xf]
    %v152 = vld [vmem:[#allocation3 + $0xa8] sm:$0xff]
    %v153 = vld [vmem:[#allocation3 + $0xb0] sm:$0xf]
    %v154 = vld [vmem:[#allocation3 + $0xb4] sm:$0xff]
    %v155 = vld [vmem:[#allocation3 + $0xbc] sm:$0xf]
    %v156 = vld [vmem:[#allocation3 + $0xc0] sm:$0xff]
    %v157 = vld [vmem:[#allocation3 + $0xc8] sm:$0xf]
    %v158 = vld [vmem:[#allocation3 + $0xcc] sm:$0xff]
    %v159 = vld [vmem:[#allocation3 + $0xd4] sm:$0xf]
    %v160 = vld [vmem:[#allocation3 + $0xd8] sm:$0xff]
    %v161 = vld [vmem:[#allocation3 + $0xe0] sm:$0xf]
    %v162 = vld [vmem:[#allocation3 + $0xe4] sm:$0xff]
    %v163 = vld [vmem:[#allocation3 + $0xec] sm:$0xf]
    %v164 = vld [vmem:[#allocation3 + $0xf0] sm:$0xff]
    %v165 = vld [vmem:[#allocation3 + $0xf8] sm:$0xf]
    %v166 = vld [vmem:[#allocation3 + $0xfc] sm:$0xff]
    %v167 = vld [vmem:[#allocation3 + $0x104] sm:$0xf]
    %v168 = vld [vmem:[#allocation3 + $0x108] sm:$0xff]
    %v169 = vld [vmem:[#allocation3 + $0x110] sm:$0xf]
    %v170 = vld [vmem:[#allocation3 + $0x114] sm:$0xff]
    %v171 = vld [vmem:[#allocation3 + $0x11c] sm:$0xf]
    %v172 = vld [vmem:[#allocation3 + $0x120] sm:$0xff]
    %v173 = vld [vmem:[#allocation3 + $0x128] sm:$0xf]
    %v174 = vld [vmem:[#allocation3 + $0x12c] sm:$0xff]
    %v175 = vld [vmem:[#allocation3 + $0x134] sm:$0xf]
    %v176 = vld [vmem:[#allocation3 + $0x138] sm:$0xff]
    %v177 = vld [vmem:[#allocation3 + $0x140] sm:$0xf]
    %v178 = vld [vmem:[#allocation3 + $0x144] sm:$0xff]
    %v179 = vld [vmem:[#allocation3 + $0x14c] sm:$0xf]
    %v180 = vld [vmem:[#allocation3 + $0x150] sm:$0xff]
    %v181 = vld [vmem:[#allocation3 + $0x158] sm:$0xf]
    %v182 = vld [vmem:[#allocation3 + $0x15c] sm:$0xff]
    %v183 = vld [vmem:[#allocation3 + $0x164] sm:$0xf]
    %v184 = vld [vmem:[#allocation3 + $0x168] sm:$0xff]
    %v185 = vld [vmem:[#allocation3 + $0x170] sm:$0xf]
    %v186 = vld [vmem:[#allocation3 + $0x174] sm:$0xff]
    %v187 = vld [vmem:[#allocation3 + $0x17c] sm:$0xf]
    %v188 = vld [vmem:[%s6] sm:$0x7]
    %v190 = vperm.slane %v188, 0
    %v191 = vperm.slane %v188, 1
    %v192 = vperm.slane %v188, 2
    %v260 = vunpack.c.l.b16 %v124
    %v261 = vunpack.c.h.b16 %v124
    %v262 = vunpack.c.l.b16 %v125
    %v263 = vunpack.c.l.b16 %v126
    %v264 = vunpack.c.h.b16 %v126
    %v265 = vunpack.c.l.b16 %v127
    %v266 = vunpack.c.l.b16 %v128
    %v267 = vunpack.c.h.b16 %v128
    %v268 = vunpack.c.l.b16 %v129
    %v269 = vunpack.c.l.b16 %v130
    %v270 = vunpack.c.h.b16 %v130
    %v271 = vunpack.c.l.b16 %v131
    %v272 = vunpack.c.l.b16 %v132
    %v273 = vunpack.c.h.b16 %v132
    %v274 = vunpack.c.l.b16 %v133
    %v275 = vunpack.c.l.b16 %v134
    %v276 = vunpack.c.h.b16 %v134
    %v277 = vunpack.c.l.b16 %v135
    %v278 = vunpack.c.l.b16 %v136
    %v279 = vunpack.c.h.b16 %v136
    %v280 = vunpack.c.l.b16 %v137
    %v281 = vunpack.c.l.b16 %v138
    %v282 = vunpack.c.h.b16 %v138
    %v283 = vunpack.c.l.b16 %v139
    %v284 = vunpack.c.l.b16 %v140
    %v285 = vunpack.c.h.b16 %v140
    %v286 = vunpack.c.l.b16 %v141
    %v287 = vunpack.c.l.b16 %v142
    %v288 = vunpack.c.h.b16 %v142
    %v289 = vunpack.c.l.b16 %v143
    %v290 = vunpack.c.l.b16 %v144
    %v291 = vunpack.c.h.b16 %v144
    %v292 = vunpack.c.l.b16 %v145
    %v293 = vunpack.c.l.b16 %v146
    %v294 = vunpack.c.h.b16 %v146
    %v295 = vunpack.c.l.b16 %v147
    %v296 = vunpack.c.l.b16 %v148
    %v297 = vunpack.c.h.b16 %v148
    %v298 = vunpack.c.l.b16 %v149
    %v299 = vunpack.c.l.b16 %v150
    %v300 = vunpack.c.h.b16 %v150
    %v301 = vunpack.c.l.b16 %v151
    %v302 = vunpack.c.l.b16 %v152
    %v303 = vunpack.c.h.b16 %v152
    %v304 = vunpack.c.l.b16 %v153
    %v305 = vunpack.c.l.b16 %v154
    %v306 = vunpack.c.h.b16 %v154
    %v307 = vunpack.c.l.b16 %v155
    %v308 = vunpack.c.l.b16 %v156
    %v309 = vunpack.c.h.b16 %v156
    %v310 = vunpack.c.l.b16 %v157
    %v311 = vunpack.c.l.b16 %v158
    %v312 = vunpack.c.h.b16 %v158
    %v313 = vunpack.c.l.b16 %v159
    %v314 = vunpack.c.l.b16 %v160
    %v315 = vunpack.c.h.b16 %v160
    %v316 = vunpack.c.l.b16 %v161
    %v317 = vunpack.c.l.b16 %v162
    %v318 = vunpack.c.h.b16 %v162
    %v319 = vunpack.c.l.b16 %v163
    %v320 = vunpack.c.l.b16 %v164
    %v321 = vunpack.c.h.b16 %v164
    %v322 = vunpack.c.l.b16 %v165
    %v323 = vunpack.c.l.b16 %v166
    %v324 = vunpack.c.h.b16 %v166
    %v325 = vunpack.c.l.b16 %v167
    %v326 = vunpack.c.l.b16 %v168
    %v327 = vunpack.c.h.b16 %v168
    %v328 = vunpack.c.l.b16 %v169
    %v329 = vunpack.c.l.b16 %v170
    %v330 = vunpack.c.h.b16 %v170
    %v331 = vunpack.c.l.b16 %v171
    %v332 = vunpack.c.l.b16 %v172
    %v333 = vunpack.c.h.b16 %v172
    %v334 = vunpack.c.l.b16 %v173
    %v335 = vunpack.c.l.b16 %v174
    %v336 = vunpack.c.h.b16 %v174
    %v337 = vunpack.c.l.b16 %v175
    %v338 = vunpack.c.l.b16 %v176
    %v339 = vunpack.c.h.b16 %v176
    %v340 = vunpack.c.l.b16 %v177
    %v341 = vunpack.c.l.b16 %v178
    %v342 = vunpack.c.h.b16 %v178
    %v343 = vunpack.c.l.b16 %v179
    %v344 = vunpack.c.l.b16 %v180
    %v345 = vunpack.c.h.b16 %v180
    %v346 = vunpack.c.l.b16 %v181
    %v347 = vunpack.c.l.b16 %v182
    %v348 = vunpack.c.h.b16 %v182
    %v349 = vunpack.c.l.b16 %v183
    %v350 = vunpack.c.l.b16 %v184
    %v351 = vunpack.c.h.b16 %v184
    %v352 = vunpack.c.l.b16 %v185
    %v353 = vunpack.c.l.b16 %v186
    %v354 = vunpack.c.h.b16 %v186
    %v355 = vunpack.c.l.b16 %v187
    %v356 = vpack.c.b16 %v263, %v260
    %v357 = vpack.c.b16 %v264, %v261
    %v358 = vpack.c.b16 %v265, %v262
    %v359 = vpack.c.b16 %v269, %v266
    %v360 = vpack.c.b16 %v270, %v267
    %v361 = vpack.c.b16 %v271, %v268
    %v362 = vpack.c.b16 %v275, %v272
    %v363 = vpack.c.b16 %v276, %v273
    %v364 = vpack.c.b16 %v277, %v274
    %v365 = vpack.c.b16 %v281, %v278
    %v366 = vpack.c.b16 %v282, %v279
    %v367 = vpack.c.b16 %v283, %v280
    %v368 = vpack.c.b16 %v287, %v284
    %v369 = vpack.c.b16 %v288, %v285
    %v370 = vpack.c.b16 %v289, %v286
    %v371 = vpack.c.b16 %v293, %v290
    %v372 = vpack.c.b16 %v294, %v291
    %v373 = vpack.c.b16 %v295, %v292
    %v374 = vpack.c.b16 %v299, %v296
    %v375 = vpack.c.b16 %v300, %v297
    %v376 = vpack.c.b16 %v301, %v298
    %v377 = vpack.c.b16 %v305, %v302
    %v378 = vpack.c.b16 %v306, %v303
    %v379 = vpack.c.b16 %v307, %v304
    %v380 = vpack.c.b16 %v311, %v308
    %v381 = vpack.c.b16 %v312, %v309
    %v382 = vpack.c.b16 %v313, %v310
    %v383 = vpack.c.b16 %v317, %v314
    %v384 = vpack.c.b16 %v318, %v315
    %v385 = vpack.c.b16 %v319, %v316
    %v386 = vpack.c.b16 %v323, %v320
    %v387 = vpack.c.b16 %v324, %v321
    %v388 = vpack.c.b16 %v325, %v322
    %v389 = vpack.c.b16 %v329, %v326
    %v390 = vpack.c.b16 %v330, %v327
    %v391 = vpack.c.b16 %v331, %v328
    %v392 = vpack.c.b16 %v335, %v332
    %v393 = vpack.c.b16 %v336, %v333
    %v394 = vpack.c.b16 %v337, %v334
    %v395 = vpack.c.b16 %v341, %v338
    %v396 = vpack.c.b16 %v342, %v339
    %v397 = vpack.c.b16 %v343, %v340
    %v398 = vpack.c.b16 %v347, %v344
    %v399 = vpack.c.b16 %v348, %v345
    %v400 = vpack.c.b16 %v349, %v346
    %v401 = vpack.c.b16 %v353, %v350
    %v402 = vpack.c.b16 %v354, %v351
    %v403 = vpack.c.b16 %v355, %v352
    %452 = vmatpush.bf16.msra.mxu0 %v377
    %453 = vmatpush.bf16.msra.mxu0 %v374
    %454 = vmatpush.bf16.msra.mxu0 %v371
    %455 = vmatpush.bf16.msra.mxu0 %v368
    %456 = vmatpush.bf16.msra.mxu0 %v365
    %457 = vmatpush.bf16.msra.mxu0 %v362
    %458 = vmatpush.bf16.msra.mxu0 %v359
    %459 = vmatpush.bf16.msra.mxu0 %v356
    %460 = vmatmul.bf16.gmra.mxu0 %v116
    %v461 = vpop.f32.mrf.mxu0
    %v462 = vadd.f32 %v190, %v461
    %v463 = vpop.f32.mrf.mxu0
    %v464 = vadd.f32 %v190, %v463
    %465 = vmatmul.bf16.gmra.mxu0 %v118
    %v466 = vpop.f32.mrf.mxu0
    %v467 = vadd.f32 %v190, %v466
    %v468 = vpop.f32.mrf.mxu0
    %v469 = vadd.f32 %v190, %v468
    %470 = vmatmul.bf16.gmra.mxu0 %v120
    %v471 = vpop.f32.mrf.mxu0
    %v472 = vadd.f32 %v190, %v471
    %v473 = vpop.f32.mrf.mxu0
    %v474 = vadd.f32 %v190, %v473
    %475 = vmatmul.bf16.gmra.mxu0 %v122
    %v476 = vpop.f32.mrf.mxu0
    %v477 = vadd.f32 %v190, %v476
    %v478 = vpop.f32.mrf.mxu0
    %v479 = vadd.f32 %v190, %v478
    %480 = vdwg.mxu0
    %481 = vmatpush.bf16.msra.mxu0 %v401
    %482 = vmatpush.bf16.msra.mxu0 %v398
    %483 = vmatpush.bf16.msra.mxu0 %v395
    %484 = vmatpush.bf16.msra.mxu0 %v392
    %485 = vmatpush.bf16.msra.mxu0 %v389
    %486 = vmatpush.bf16.msra.mxu0 %v386
    %487 = vmatpush.bf16.msra.mxu0 %v383
    %488 = vmatpush.bf16.msra.mxu0 %v380
    %489 = vmatmul.bf16.gmra.mxu0 %v117
    %v490 = vpop.f32.mrf.mxu0
    %v491 = vadd.f32 %v462, %v490
    %v492 = vpop.f32.mrf.mxu0
    %v493 = vadd.f32 %v464, %v492
    %494 = vmatmul.bf16.gmra.mxu0 %v119
    %v495 = vpop.f32.mrf.mxu0
    %v496 = vadd.f32 %v467, %v495
    %v497 = vpop.f32.mrf.mxu0
    %v498 = vadd.f32 %v469, %v497
    %499 = vmatmul.bf16.gmra.mxu0 %v121
    %v500 = vpop.f32.mrf.mxu0
    %v501 = vadd.f32 %v472, %v500
    %v502 = vpop.f32.mrf.mxu0
    %v503 = vadd.f32 %v474, %v502
    %504 = vmatmul.bf16.gmra.mxu0 %v123
    %v505 = vpop.f32.mrf.mxu0
    %v506 = vadd.f32 %v477, %v505
    %v507 = vpop.f32.mrf.mxu0
    %v508 = vadd.f32 %v479, %v507
    %509 = vdwg.mxu0
    %510 = vmatpush.bf16.msra.mxu0 %v378
    %511 = vmatpush.bf16.msra.mxu0 %v375
    %512 = vmatpush.bf16.msra.mxu0 %v372
    %513 = vmatpush.bf16.msra.mxu0 %v369
    %514 = vmatpush.bf16.msra.mxu0 %v366
    %515 = vmatpush.bf16.msra.mxu0 %v363
    %516 = vmatpush.bf16.msra.mxu0 %v360
    %517 = vmatpush.bf16.msra.mxu0 %v357
    %518 = vmatmul.bf16.gmra.mxu0 %v116
    %v519 = vpop.f32.mrf.mxu0
    %v520 = vadd.f32 %v191, %v519
    %v521 = vpop.f32.mrf.mxu0
    %v522 = vadd.f32 %v191, %v521
    %523 = vmatmul.bf16.gmra.mxu0 %v118
    %v524 = vpop.f32.mrf.mxu0
    %v525 = vadd.f32 %v191, %v524
    %v526 = vpop.f32.mrf.mxu0
    %v527 = vadd.f32 %v191, %v526
    %528 = vmatmul.bf16.gmra.mxu0 %v120
    %v529 = vpop.f32.mrf.mxu0
    %v530 = vadd.f32 %v191, %v529
    %v531 = vpop.f32.mrf.mxu0
    %v532 = vadd.f32 %v191, %v531
    %533 = vmatmul.bf16.gmra.mxu0 %v122
    %v534 = vpop.f32.mrf.mxu0
    %v535 = vadd.f32 %v191, %v534
    %v536 = vpop.f32.mrf.mxu0
    %v537 = vadd.f32 %v191, %v536
    %538 = vdwg.mxu0
    %539 = vmatpush.bf16.msra.mxu0 %v402
    %540 = vmatpush.bf16.msra.mxu0 %v399
    %541 = vmatpush.bf16.msra.mxu0 %v396
    %542 = vmatpush.bf16.msra.mxu0 %v393
    %543 = vmatpush.bf16.msra.mxu0 %v390
    %544 = vmatpush.bf16.msra.mxu0 %v387
    %545 = vmatpush.bf16.msra.mxu0 %v384
    %546 = vmatpush.bf16.msra.mxu0 %v381
    %547 = vmatmul.bf16.gmra.mxu0 %v117
    %v548 = vpop.f32.mrf.mxu0
    %v549 = vadd.f32 %v520, %v548
    %v550 = vpop.f32.mrf.mxu0
    %v551 = vadd.f32 %v522, %v550
    %552 = vmatmul.bf16.gmra.mxu0 %v119
    %v553 = vpop.f32.mrf.mxu0
    %v554 = vadd.f32 %v525, %v553
    %v555 = vpop.f32.mrf.mxu0
    %v556 = vadd.f32 %v527, %v555
    %557 = vmatmul.bf16.gmra.mxu0 %v121
    %v558 = vpop.f32.mrf.mxu0
    %v559 = vadd.f32 %v530, %v558
    %v560 = vpop.f32.mrf.mxu0
    %v561 = vadd.f32 %v532, %v560
    %562 = vmatmul.bf16.gmra.mxu0 %v123
    %v563 = vpop.f32.mrf.mxu0
    %v564 = vadd.f32 %v535, %v563
    %v565 = vpop.f32.mrf.mxu0
    %v566 = vadd.f32 %v537, %v565
    %567 = vdwg.mxu0
    %568 = vmatpush.bf16.msra.mxu0 %v379
    %569 = vmatpush.bf16.msra.mxu0 %v376
    %570 = vmatpush.bf16.msra.mxu0 %v373
    %571 = vmatpush.bf16.msra.mxu0 %v370
    %572 = vmatpush.bf16.msra.mxu0 %v367
    %573 = vmatpush.bf16.msra.mxu0 %v364
    %574 = vmatpush.bf16.msra.mxu0 %v361
    %575 = vmatpush.bf16.msra.mxu0 %v358
    %576 = vmatmul.bf16.gmra.mxu0 %v116
    %v577 = vpop.f32.mrf.mxu0
    %v578 = vadd.f32 %v192, %v577
    %v579 = vpop.f32.mrf.mxu0
    %v580 = vadd.f32 %v192, %v579
    %581 = vmatmul.bf16.gmra.mxu0 %v118
    %v582 = vpop.f32.mrf.mxu0
    %v583 = vadd.f32 %v192, %v582
    %v584 = vpop.f32.mrf.mxu0
    %v585 = vadd.f32 %v192, %v584
    %586 = vmatmul.bf16.gmra.mxu0 %v120
    %v587 = vpop.f32.mrf.mxu0
    %v588 = vadd.f32 %v192, %v587
    %v589 = vpop.f32.mrf.mxu0
    %v590 = vadd.f32 %v192, %v589
    %591 = vmatmul.bf16.gmra.mxu0 %v122
    %v592 = vpop.f32.mrf.mxu0
    %v593 = vadd.f32 %v192, %v592
    %v594 = vpop.f32.mrf.mxu0
    %v595 = vadd.f32 %v192, %v594
    %596 = vdwg.mxu0
    %597 = vmatpush.bf16.msra.mxu0 %v403
    %598 = vmatpush.bf16.msra.mxu0 %v400
    %599 = vmatpush.bf16.msra.mxu0 %v397
    %600 = vmatpush.bf16.msra.mxu0 %v394
    %601 = vmatpush.bf16.msra.mxu0 %v391
    %602 = vmatpush.bf16.msra.mxu0 %v388
    %603 = vmatpush.bf16.msra.mxu0 %v385
    %604 = vmatpush.bf16.msra.mxu0 %v382
    %605 = vmatmul.bf16.gmra.mxu0 %v117
    %v606 = vpop.f32.mrf.mxu0
    %v607 = vadd.f32 %v578, %v606
    %v608 = vpop.f32.mrf.mxu0
    %v609 = vadd.f32 %v580, %v608
    %610 = vmatmul.bf16.gmra.mxu0 %v119
    %v611 = vpop.f32.mrf.mxu0
    %v612 = vadd.f32 %v583, %v611
    %v613 = vpop.f32.mrf.mxu0
    %v614 = vadd.f32 %v585, %v613
    %615 = vmatmul.bf16.gmra.mxu0 %v121
    %v616 = vpop.f32.mrf.mxu0
    %v617 = vadd.f32 %v588, %v616
    %v618 = vpop.f32.mrf.mxu0
    %v619 = vadd.f32 %v590, %v618
    %620 = vmatmul.bf16.gmra.mxu0 %v123
    %v621 = vpop.f32.mrf.mxu0
    %v622 = vadd.f32 %v593, %v621
    %v623 = vpop.f32.mrf.mxu0
    %v624 = vadd.f32 %v595, %v623
    %625 = vdwg.mxu0
    %626 = vst [vmem:[#allocation2] sm:$0xff] %v491
    %627 = vst [vmem:[#allocation2 + $0x8] sm:$0xff] %v549
    %628 = vst [vmem:[#allocation2 + $0x10] sm:$0xff] %v607
    %629 = vst [vmem:[#allocation2 + $0x18] sm:$0xff] %v493
    %630 = vst [vmem:[#allocation2 + $0x20] sm:$0xff] %v551
    %631 = vst [vmem:[#allocation2 + $0x28] sm:$0xff] %v609
    %632 = vst [vmem:[#allocation2 + $0x30] sm:$0xff] %v496
    %633 = vst [vmem:[#allocation2 + $0x38] sm:$0xff] %v554
    %634 = vst [vmem:[#allocation2 + $0x40] sm:$0xff] %v612
    %635 = vst [vmem:[#allocation2 + $0x48] sm:$0xff] %v498
    %636 = vst [vmem:[#allocation2 + $0x50] sm:$0xff] %v556
    %637 = vst [vmem:[#allocation2 + $0x58] sm:$0xff] %v614
    %638 = vst [vmem:[#allocation2 + $0x60] sm:$0xff] %v501
    %639 = vst [vmem:[#allocation2 + $0x68] sm:$0xff] %v559
    %640 = vst [vmem:[#allocation2 + $0x70] sm:$0xff] %v617
    %641 = vst [vmem:[#allocation2 + $0x78] sm:$0xff] %v503
    %642 = vst [vmem:[#allocation2 + $0x80] sm:$0xff] %v561
    %643 = vst [vmem:[#allocation2 + $0x88] sm:$0xff] %v619
    %644 = vst [vmem:[#allocation2 + $0x90] sm:$0xff] %v506
    %645 = vst [vmem:[#allocation2 + $0x98] sm:$0xff] %v564
    %646 = vst [vmem:[#allocation2 + $0xa0] sm:$0xff] %v622
    %647 = vst [vmem:[#allocation2 + $0xa8] sm:$0xff] %v508
    %648 = vst [vmem:[#allocation2 + $0xb0] sm:$0xff] %v566
    %649 = vst [vmem:[#allocation2 + $0xb8] sm:$0xff] %v624
    %v650 = vld [vmem:[%s3] sm:$0xff]
    %v651 = vld [vmem:[%s3 + $0x8] sm:$0xf]
    %v652 = vld [vmem:[%s3 + $0xc] sm:$0xff]
    %v653 = vld [vmem:[%s3 + $0x14] sm:$0xf]
    %v654 = vld [vmem:[%s3 + $0x18] sm:$0xff]
    %v655 = vld [vmem:[%s3 + $0x20] sm:$0xf]
    %v656 = vld [vmem:[%s3 + $0x24] sm:$0xff]
    %v657 = vld [vmem:[%s3 + $0x2c] sm:$0xf]
    %v658 = vld [vmem:[%s3 + $0x30] sm:$0xff]
    %v659 = vld [vmem:[%s3 + $0x38] sm:$0xf]
    %v660 = vld [vmem:[%s3 + $0x3c] sm:$0xff]
    %v661 = vld [vmem:[%s3 + $0x44] sm:$0xf]
    %v662 = vld [vmem:[%s3 + $0x48] sm:$0xff]
    %v663 = vld [vmem:[%s3 + $0x50] sm:$0xf]
    %v664 = vld [vmem:[%s3 + $0x54] sm:$0xff]
    %v665 = vld [vmem:[%s3 + $0x5c] sm:$0xf]
    %v666 = vld [vmem:[%s3 + $0x60] sm:$0xff]
    %v667 = vld [vmem:[%s3 + $0x68] sm:$0xf]
    %v668 = vld [vmem:[%s3 + $0x6c] sm:$0xff]
    %v669 = vld [vmem:[%s3 + $0x74] sm:$0xf]
    %v670 = vld [vmem:[%s3 + $0x78] sm:$0xff]
    %v671 = vld [vmem:[%s3 + $0x80] sm:$0xf]
    %v672 = vld [vmem:[%s3 + $0x84] sm:$0xff]
    %v673 = vld [vmem:[%s3 + $0x8c] sm:$0xf]
    %v674 = vld [vmem:[%s3 + $0x90] sm:$0xff]
    %v675 = vld [vmem:[%s3 + $0x98] sm:$0xf]
    %v676 = vld [vmem:[%s3 + $0x9c] sm:$0xff]
    %v677 = vld [vmem:[%s3 + $0xa4] sm:$0xf]
    %v678 = vld [vmem:[%s3 + $0xa8] sm:$0xff]
    %v679 = vld [vmem:[%s3 + $0xb0] sm:$0xf]
    %v680 = vld [vmem:[%s3 + $0xb4] sm:$0xff]
    %v681 = vld [vmem:[%s3 + $0xbc] sm:$0xf]
    %v682 = vld [vmem:[#allocation5] sm:$0xff]
    %v683 = vld [vmem:[#allocation5 + $0x8] sm:$0xf]
    %v684 = vld [vmem:[#allocation5 + $0xc] sm:$0xff]
    %v685 = vld [vmem:[#allocation5 + $0x14] sm:$0xf]
    %v686 = vld [vmem:[#allocation5 + $0x18] sm:$0xff]
    %v687 = vld [vmem:[#allocation5 + $0x20] sm:$0xf]
    %v688 = vld [vmem:[#allocation5 + $0x24] sm:$0xff]
    %v689 = vld [vmem:[#allocation5 + $0x2c] sm:$0xf]
    %v690 = vld [vmem:[#allocation5 + $0x30] sm:$0xff]
    %v691 = vld [vmem:[#allocation5 + $0x38] sm:$0xf]
    %v692 = vld [vmem:[#allocation5 + $0x3c] sm:$0xff]
    %v693 = vld [vmem:[#allocation5 + $0x44] sm:$0xf]
    %v694 = vld [vmem:[#allocation5 + $0x48] sm:$0xff]
    %v695 = vld [vmem:[#allocation5 + $0x50] sm:$0xf]
    %v696 = vld [vmem:[#allocation5 + $0x54] sm:$0xff]
    %v697 = vld [vmem:[#allocation5 + $0x5c] sm:$0xf]
    %v698 = vld [vmem:[#allocation5 + $0x60] sm:$0xff]
    %v699 = vld [vmem:[#allocation5 + $0x68] sm:$0xf]
    %v700 = vld [vmem:[#allocation5 + $0x6c] sm:$0xff]
    %v701 = vld [vmem:[#allocation5 + $0x74] sm:$0xf]
    %v702 = vld [vmem:[#allocation5 + $0x78] sm:$0xff]
    %v703 = vld [vmem:[#allocation5 + $0x80] sm:$0xf]
    %v704 = vld [vmem:[#allocation5 + $0x84] sm:$0xff]
    %v705 = vld [vmem:[#allocation5 + $0x8c] sm:$0xf]
    %v706 = vld [vmem:[#allocation5 + $0x90] sm:$0xff]
    %v707 = vld [vmem:[#allocation5 + $0x98] sm:$0xf]
    %v708 = vld [vmem:[#allocation5 + $0x9c] sm:$0xff]
    %v709 = vld [vmem:[#allocation5 + $0xa4] sm:$0xf]
    %v710 = vld [vmem:[#allocation5 + $0xa8] sm:$0xff]
    %v711 = vld [vmem:[#allocation5 + $0xb0] sm:$0xf]
    %v712 = vld [vmem:[#allocation5 + $0xb4] sm:$0xff]
    %v713 = vld [vmem:[#allocation5 + $0xbc] sm:$0xf]
    %v714 = vld [vmem:[#allocation7] sm:$0xff]
    %v715 = vld [vmem:[#allocation7 + $0x8] sm:$0xf]
    %v716 = vld [vmem:[#allocation7 + $0xc] sm:$0xff]
    %v717 = vld [vmem:[#allocation7 + $0x14] sm:$0xf]
    %v718 = vld [vmem:[#allocation7 + $0x18] sm:$0xff]
    %v719 = vld [vmem:[#allocation7 + $0x20] sm:$0xf]
    %v720 = vld [vmem:[#allocation7 + $0x24] sm:$0xff]
    %v721 = vld [vmem:[#allocation7 + $0x2c] sm:$0xf]
    %v722 = vld [vmem:[#allocation7 + $0x30] sm:$0xff]
    %v723 = vld [vmem:[#allocation7 + $0x38] sm:$0xf]
    %v724 = vld [vmem:[#allocation7 + $0x3c] sm:$0xff]
    %v725 = vld [vmem:[#allocation7 + $0x44] sm:$0xf]
    %v726 = vld [vmem:[#allocation7 + $0x48] sm:$0xff]
    %v727 = vld [vmem:[#allocation7 + $0x50] sm:$0xf]
    %v728 = vld [vmem:[#allocation7 + $0x54] sm:$0xff]
    %v729 = vld [vmem:[#allocation7 + $0x5c] sm:$0xf]
    %v730 = vld [vmem:[#allocation7 + $0x60] sm:$0xff]
    %v731 = vld [vmem:[#allocation7 + $0x68] sm:$0xf]
    %v732 = vld [vmem:[#allocation7 + $0x6c] sm:$0xff]
    %v733 = vld [vmem:[#allocation7 + $0x74] sm:$0xf]
    %v734 = vld [vmem:[#allocation7 + $0x78] sm:$0xff]
    %v735 = vld [vmem:[#allocation7 + $0x80] sm:$0xf]
    %v736 = vld [vmem:[#allocation7 + $0x84] sm:$0xff]
    %v737 = vld [vmem:[#allocation7 + $0x8c] sm:$0xf]
    %v738 = vld [vmem:[#allocation7 + $0x90] sm:$0xff]
    %v739 = vld [vmem:[#allocation7 + $0x98] sm:$0xf]
    %v740 = vld [vmem:[#allocation7 + $0x9c] sm:$0xff]
    %v741 = vld [vmem:[#allocation7 + $0xa4] sm:$0xf]
    %v742 = vld [vmem:[#allocation7 + $0xa8] sm:$0xff]
    %v743 = vld [vmem:[#allocation7 + $0xb0] sm:$0xf]
    %v744 = vld [vmem:[#allocation7 + $0xb4] sm:$0xff]
    %v745 = vld [vmem:[#allocation7 + $0xbc] sm:$0xf]
    %v746 = vld [vmem:[%s8] sm:$0x7]
    %v747 = vld [vmem:[%s7] sm:$0x1]
    %v748 = vld [vmem:[%s9] sm:$0x1]
    %v749 = vld [vmem:[%s1] sm:$0xff]
    %s750 = scalar_lea.vmem %s1, 8
    %v751 = vld [vmem:[%s750] sm:$0xff]
    %v752 = vpack.c.bf16 %v751, %v751
    %v785 = vunpack.c.l.b16 %v714
    %v786 = vunpack.c.h.b16 %v714
    %v787 = vunpack.c.l.b16 %v715
    %v788 = vunpack.c.l.b16 %v716
    %v789 = vunpack.c.h.b16 %v716
    %v790 = vunpack.c.l.b16 %v717
    %v791 = vunpack.c.l.b16 %v718
    %v792 = vunpack.c.h.b16 %v718
    %v793 = vunpack.c.l.b16 %v719
    %v794 = vunpack.c.l.b16 %v720
    %v795 = vunpack.c.h.b16 %v720
    %v796 = vunpack.c.l.b16 %v721
    %v797 = vunpack.c.l.b16 %v722
    %v798 = vunpack.c.h.b16 %v722
    %v799 = vunpack.c.l.b16 %v723
    %v800 = vunpack.c.l.b16 %v724
    %v801 = vunpack.c.h.b16 %v724
    %v802 = vunpack.c.l.b16 %v725
    %v803 = vunpack.c.l.b16 %v726
    %v804 = vunpack.c.h.b16 %v726
    %v805 = vunpack.c.l.b16 %v727
    %v806 = vunpack.c.l.b16 %v728
    %v807 = vunpack.c.h.b16 %v728
    %v808 = vunpack.c.l.b16 %v729
    %v809 = vunpack.c.l.b16 %v730
    %v810 = vunpack.c.h.b16 %v730
    %v811 = vunpack.c.l.b16 %v731
    %v812 = vunpack.c.l.b16 %v732
    %v813 = vunpack.c.h.b16 %v732
    %v814 = vunpack.c.l.b16 %v733
    %v815 = vunpack.c.l.b16 %v734
    %v816 = vunpack.c.h.b16 %v734
    %v817 = vunpack.c.l.b16 %v735
    %v818 = vunpack.c.l.b16 %v736
    %v819 = vunpack.c.h.b16 %v736
    %v820 = vunpack.c.l.b16 %v737
    %v821 = vunpack.c.l.b16 %v738
    %v822 = vunpack.c.h.b16 %v738
    %v823 = vunpack.c.l.b16 %v739
    %v824 = vunpack.c.l.b16 %v740
    %v825 = vunpack.c.h.b16 %v740
    %v826 = vunpack.c.l.b16 %v741
    %v827 = vunpack.c.l.b16 %v742
    %v828 = vunpack.c.h.b16 %v742
    %v829 = vunpack.c.l.b16 %v743
    %v830 = vunpack.c.l.b16 %v744
    %v831 = vunpack.c.h.b16 %v744
    %v832 = vunpack.c.l.b16 %v745
    %v833 = vpack.c.b16 %v788, %v785
    %v834 = vpack.c.b16 %v789, %v786
    %v835 = vpack.c.b16 %v790, %v787
    %v836 = vpack.c.b16 %v794, %v791
    %v837 = vpack.c.b16 %v795, %v792
    %v838 = vpack.c.b16 %v796, %v793
    %v839 = vpack.c.b16 %v800, %v797
    %v840 = vpack.c.b16 %v801, %v798
    %v841 = vpack.c.b16 %v802, %v799
    %v842 = vpack.c.b16 %v806, %v803
    %v843 = vpack.c.b16 %v807, %v804
    %v844 = vpack.c.b16 %v808, %v805
    %v845 = vpack.c.b16 %v812, %v809
    %v846 = vpack.c.b16 %v813, %v810
    %v847 = vpack.c.b16 %v814, %v811
    %v848 = vpack.c.b16 %v818, %v815
    %v849 = vpack.c.b16 %v819, %v816
    %v850 = vpack.c.b16 %v820, %v817
    %v851 = vpack.c.b16 %v824, %v821
    %v852 = vpack.c.b16 %v825, %v822
    %v853 = vpack.c.b16 %v826, %v823
    %v854 = vpack.c.b16 %v830, %v827
    %v855 = vpack.c.b16 %v831, %v828
    %v856 = vpack.c.b16 %v832, %v829
    %881 = vmatpush.bf16.msra.mxu0 %v854
    %882 = vmatpush.bf16.msra.mxu0 %v851
    %883 = vmatpush.bf16.msra.mxu0 %v848
    %884 = vmatpush.bf16.msra.mxu0 %v845
    %885 = vmatpush.bf16.msra.mxu0 %v842
    %886 = vmatpush.bf16.msra.mxu0 %v839
    %887 = vmatpush.bf16.msra.mxu0 %v836
    %888 = vmatpush.bf16.msra.mxu0 %v833
    %889 = vmatmul.bf16.gmra.mxu0 %v752
    %v890 = vpop.f32.mrf.mxu0
    %v891 = vadd.f32 0.0, %v890
    %v892 = vpop.f32.mrf.mxu0
    %893 = vdwg.mxu0
    %894 = vmatpush.bf16.msra.mxu0 %v855
    %895 = vmatpush.bf16.msra.mxu0 %v852
    %896 = vmatpush.bf16.msra.mxu0 %v849
    %897 = vmatpush.bf16.msra.mxu0 %v846
    %898 = vmatpush.bf16.msra.mxu0 %v843
    %899 = vmatpush.bf16.msra.mxu0 %v840
    %900 = vmatpush.bf16.msra.mxu0 %v837
    %901 = vmatpush.bf16.msra.mxu0 %v834
    %902 = vmatmul.bf16.gmra.mxu0 %v752
    %v903 = vpop.f32.mrf.mxu0
    %v904 = vadd.f32 0.0, %v903
    %v905 = vpop.f32.mrf.mxu0
    %906 = vdwg.mxu0
    %907 = vmatpush.bf16.msra.mxu0 %v856
    %908 = vmatpush.bf16.msra.mxu0 %v853
    %909 = vmatpush.bf16.msra.mxu0 %v850
    %910 = vmatpush.bf16.msra.mxu0 %v847
    %911 = vmatpush.bf16.msra.mxu0 %v844
    %912 = vmatpush.bf16.msra.mxu0 %v841
    %913 = vmatpush.bf16.msra.mxu0 %v838
    %914 = vmatpush.bf16.msra.mxu0 %v835
    %915 = vmatmul.bf16.gmra.mxu0 %v752
    %v916 = vpop.f32.mrf.mxu0
    %v917 = vadd.f32 0.0, %v916
    %v918 = vpop.f32.mrf.mxu0
    %919 = vdwg.mxu0
    %v920 = vpack.c.bf16 %v749, %v749
    %v953 = vunpack.c.l.b16 %v650
    %v954 = vunpack.c.h.b16 %v650
    %v955 = vunpack.c.l.b16 %v651
    %v956 = vunpack.c.l.b16 %v652
    %v957 = vunpack.c.h.b16 %v652
    %v958 = vunpack.c.l.b16 %v653
    %v959 = vunpack.c.l.b16 %v654
    %v960 = vunpack.c.h.b16 %v654
    %v961 = vunpack.c.l.b16 %v655
    %v962 = vunpack.c.l.b16 %v656
    %v963 = vunpack.c.h.b16 %v656
    %v964 = vunpack.c.l.b16 %v657
    %v965 = vunpack.c.l.b16 %v658
    %v966 = vunpack.c.h.b16 %v658
    %v967 = vunpack.c.l.b16 %v659
    %v968 = vunpack.c.l.b16 %v660
    %v969 = vunpack.c.h.b16 %v660
    %v970 = vunpack.c.l.b16 %v661
    %v971 = vunpack.c.l.b16 %v662
    %v972 = vunpack.c.h.b16 %v662
    %v973 = vunpack.c.l.b16 %v663
    %v974 = vunpack.c.l.b16 %v664
    %v975 = vunpack.c.h.b16 %v664
    %v976 = vunpack.c.l.b16 %v665
    %v977 = vunpack.c.l.b16 %v666
    %v978 = vunpack.c.h.b16 %v666
    %v979 = vunpack.c.l.b16 %v667
    %v980 = vunpack.c.l.b16 %v668
    %v981 = vunpack.c.h.b16 %v668
    %v982 = vunpack.c.l.b16 %v669
    %v983 = vunpack.c.l.b16 %v670
    %v984 = vunpack.c.h.b16 %v670
    %v985 = vunpack.c.l.b16 %v671
    %v986 = vunpack.c.l.b16 %v672
    %v987 = vunpack.c.h.b16 %v672
    %v988 = vunpack.c.l.b16 %v673
    %v989 = vunpack.c.l.b16 %v674
    %v990 = vunpack.c.h.b16 %v674
    %v991 = vunpack.c.l.b16 %v675
    %v992 = vunpack.c.l.b16 %v676
    %v993 = vunpack.c.h.b16 %v676
    %v994 = vunpack.c.l.b16 %v677
    %v995 = vunpack.c.l.b16 %v678
    %v996 = vunpack.c.h.b16 %v678
    %v997 = vunpack.c.l.b16 %v679
    %v998 = vunpack.c.l.b16 %v680
    %v999 = vunpack.c.h.b16 %v680
    %v1000 = vunpack.c.l.b16 %v681
    %v1001 = vpack.c.b16 %v956, %v953
    %v1002 = vpack.c.b16 %v957, %v954
    %v1003 = vpack.c.b16 %v958, %v955
    %v1004 = vpack.c.b16 %v962, %v959
    %v1005 = vpack.c.b16 %v963, %v960
    %v1006 = vpack.c.b16 %v964, %v961
    %v1007 = vpack.c.b16 %v968, %v965
    %v1008 = vpack.c.b16 %v969, %v966
    %v1009 = vpack.c.b16 %v970, %v967
    %v1010 = vpack.c.b16 %v974, %v971
    %v1011 = vpack.c.b16 %v975, %v972
    %v1012 = vpack.c.b16 %v976, %v973
    %v1013 = vpack.c.b16 %v980, %v977
    %v1014 = vpack.c.b16 %v981, %v978
    %v1015 = vpack.c.b16 %v982, %v979
    %v1016 = vpack.c.b16 %v986, %v983
    %v1017 = vpack.c.b16 %v987, %v984
    %v1018 = vpack.c.b16 %v988, %v985
    %v1019 = vpack.c.b16 %v992, %v989
    %v1020 = vpack.c.b16 %v993, %v990
    %v1021 = vpack.c.b16 %v994, %v991
    %v1022 = vpack.c.b16 %v998, %v995
    %v1023 = vpack.c.b16 %v999, %v996
    %v1024 = vpack.c.b16 %v1000, %v997
    %1049 = vmatpush.bf16.msra.mxu0 %v1022
    %1050 = vmatpush.bf16.msra.mxu0 %v1019
    %1051 = vmatpush.bf16.msra.mxu0 %v1016
    %1052 = vmatpush.bf16.msra.mxu0 %v1013
    %1053 = vmatpush.bf16.msra.mxu0 %v1010
    %1054 = vmatpush.bf16.msra.mxu0 %v1007
    %1055 = vmatpush.bf16.msra.mxu0 %v1004
    %1056 = vmatpush.bf16.msra.mxu0 %v1001
    %1057 = vmatmul.bf16.gmra.mxu0 %v920
    %v1058 = vpop.f32.mrf.mxu0
    %v1059 = vadd.f32 0.0, %v1058
    %v1060 = vpop.f32.mrf.mxu0
    %1061 = vdwg.mxu0
    %1062 = vmatpush.bf16.msra.mxu0 %v1023
    %1063 = vmatpush.bf16.msra.mxu0 %v1020
    %1064 = vmatpush.bf16.msra.mxu0 %v1017
    %1065 = vmatpush.bf16.msra.mxu0 %v1014
    %1066 = vmatpush.bf16.msra.mxu0 %v1011
    %1067 = vmatpush.bf16.msra.mxu0 %v1008
    %1068 = vmatpush.bf16.msra.mxu0 %v1005
    %1069 = vmatpush.bf16.msra.mxu0 %v1002
    %1070 = vmatmul.bf16.gmra.mxu0 %v920
    %v1071 = vpop.f32.mrf.mxu0
    %v1072 = vadd.f32 0.0, %v1071
    %v1073 = vpop.f32.mrf.mxu0
    %1074 = vdwg.mxu0
    %1075 = vmatpush.bf16.msra.mxu0 %v1024
    %1076 = vmatpush.bf16.msra.mxu0 %v1021
    %1077 = vmatpush.bf16.msra.mxu0 %v1018
    %1078 = vmatpush.bf16.msra.mxu0 %v1015
    %1079 = vmatpush.bf16.msra.mxu0 %v1012
    %1080 = vmatpush.bf16.msra.mxu0 %v1009
    %1081 = vmatpush.bf16.msra.mxu0 %v1006
    %1082 = vmatpush.bf16.msra.mxu0 %v1003
    %1083 = vmatmul.bf16.gmra.mxu0 %v920
    %v1084 = vpop.f32.mrf.mxu0
    %v1085 = vadd.f32 0.0, %v1084
    %v1086 = vpop.f32.mrf.mxu0
    %1087 = vdwg.mxu0
    %v1088 = vld [vmem:[#allocation2] sm:$0xff]
    %v1089 = vld [vmem:[#allocation2 + $0x8] sm:$0xff]
    %v1090 = vld [vmem:[#allocation2 + $0x10] sm:$0xff]
    %v1091 = vadd.f32 %v1088, %v1059
    %v1092 = vxor.u32 %v1091, 2147483648
    %v1093 = vmul.f32 %v1092, 1.442695
    %v1094 = vpow.pop %v1093
    %v1095 = vadd.f32 %v1094, 1.0
    %v1096 = vrcp.pop %v1095
    %v1097 = vmul.f32 %v1095, %v1096
    %v1098 = vsub.f32 1.0, %v1097
    %v1099 = vmul.f32 %v1096, %v1098
    %v1100 = vadd.f32 %v1096, %v1099
    %vm1101 = vweird.f32 %v1095
    %vm1102 = vweird.f32 %v1096
    %vm1103 = vmor %vm1101, %vm1102
    %v1104 = vsel %vm1103, %v1096, %v1100
    %v1105 = vand.u32 2147483647, %v1095
    %vm1106 = vcmp.eq.f32.partialorder %v1105, 8.507059e+37
    %v1107 = vand.u32 %v1095, 2147483648
    %v1108 = vor.u32 1.1754944e-38, %v1107
    %v1109 = vsel %vm1106, %v1108, %v1104
    %v1110 = vmul.f32 1.0, %v1109
    %v1111 = vadd.f32 %v1089, %v1072
    %v1112 = vxor.u32 %v1111, 2147483648
    %v1113 = vmul.f32 %v1112, 1.442695
    %v1114 = vpow.pop %v1113
    %v1115 = vadd.f32 %v1114, 1.0
    %v1116 = vrcp.pop %v1115
    %v1117 = vmul.f32 %v1115, %v1116
    %v1118 = vsub.f32 1.0, %v1117
    %v1119 = vmul.f32 %v1116, %v1118
    %v1120 = vadd.f32 %v1116, %v1119
    %vm1121 = vweird.f32 %v1115
    %vm1122 = vweird.f32 %v1116
    %vm1123 = vmor %vm1121, %vm1122
    %v1124 = vsel %vm1123, %v1116, %v1120
    %v1125 = vand.u32 2147483647, %v1115
    %vm1126 = vcmp.eq.f32.partialorder %v1125, 8.507059e+37
    %v1127 = vand.u32 %v1115, 2147483648
    %v1128 = vor.u32 1.1754944e-38, %v1127
    %v1129 = vsel %vm1126, %v1128, %v1124
    %v1130 = vmul.f32 1.0, %v1129
    %v1132 = vperm.slane %v747, 0
    %v1134 = vadd.f32 %v1085, %v1132
    %v1135 = vmul.f32 %v1110, %v1134
    %v1136 = vadd.f32 %v1090, %v1135
    %v1137 = vtanh.pop %v1136
    %v1138 = vsub.f32 1.0, %v1130
    %v1139 = vmul.f32 %v1138, %v1137
    %v1140 = vmul.f32 %v1130, %v749
    %v1141 = vadd.f32 %v1139, %v1140
    %v1142 = vpack.c.bf16 %v1141, %v1141
    %v1144 = vperm.slane %v746, 0
    %v1145 = vperm.slane %v746, 1
    %v1146 = vperm.slane %v746, 2
    %v1182 = vunpack.c.l.b16 %v682
    %v1183 = vunpack.c.h.b16 %v682
    %v1184 = vunpack.c.l.b16 %v683
    %v1185 = vunpack.c.l.b16 %v684
    %v1186 = vunpack.c.h.b16 %v684
    %v1187 = vunpack.c.l.b16 %v685
    %v1188 = vunpack.c.l.b16 %v686
    %v1189 = vunpack.c.h.b16 %v686
    %v1190 = vunpack.c.l.b16 %v687
    %v1191 = vunpack.c.l.b16 %v688
    %v1192 = vunpack.c.h.b16 %v688
    %v1193 = vunpack.c.l.b16 %v689
    %v1194 = vunpack.c.l.b16 %v690
    %v1195 = vunpack.c.h.b16 %v690
    %v1196 = vunpack.c.l.b16 %v691
    %v1197 = vunpack.c.l.b16 %v692
    %v1198 = vunpack.c.h.b16 %v692
    %v1199 = vunpack.c.l.b16 %v693
    %v1200 = vunpack.c.l.b16 %v694
    %v1201 = vunpack.c.h.b16 %v694
    %v1202 = vunpack.c.l.b16 %v695
    %v1203 = vunpack.c.l.b16 %v696
    %v1204 = vunpack.c.h.b16 %v696
    %v1205 = vunpack.c.l.b16 %v697
    %v1206 = vunpack.c.l.b16 %v698
    %v1207 = vunpack.c.h.b16 %v698
    %v1208 = vunpack.c.l.b16 %v699
    %v1209 = vunpack.c.l.b16 %v700
    %v1210 = vunpack.c.h.b16 %v700
    %v1211 = vunpack.c.l.b16 %v701
    %v1212 = vunpack.c.l.b16 %v702
    %v1213 = vunpack.c.h.b16 %v702
    %v1214 = vunpack.c.l.b16 %v703
    %v1215 = vunpack.c.l.b16 %v704
    %v1216 = vunpack.c.h.b16 %v704
    %v1217 = vunpack.c.l.b16 %v705
    %v1218 = vunpack.c.l.b16 %v706
    %v1219 = vunpack.c.h.b16 %v706
    %v1220 = vunpack.c.l.b16 %v707
    %v1221 = vunpack.c.l.b16 %v708
    %v1222 = vunpack.c.h.b16 %v708
    %v1223 = vunpack.c.l.b16 %v709
    %v1224 = vunpack.c.l.b16 %v710
    %v1225 = vunpack.c.h.b16 %v710
    %v1226 = vunpack.c.l.b16 %v711
    %v1227 = vunpack.c.l.b16 %v712
    %v1228 = vunpack.c.h.b16 %v712
    %v1229 = vunpack.c.l.b16 %v713
    %v1230 = vpack.c.b16 %v1185, %v1182
    %v1231 = vpack.c.b16 %v1186, %v1183
    %v1232 = vpack.c.b16 %v1187, %v1184
    %v1233 = vpack.c.b16 %v1191, %v1188
    %v1234 = vpack.c.b16 %v1192, %v1189
    %v1235 = vpack.c.b16 %v1193, %v1190
    %v1236 = vpack.c.b16 %v1197, %v1194
    %v1237 = vpack.c.b16 %v1198, %v1195
    %v1238 = vpack.c.b16 %v1199, %v1196
    %v1239 = vpack.c.b16 %v1203, %v1200
    %v1240 = vpack.c.b16 %v1204, %v1201
    %v1241 = vpack.c.b16 %v1205, %v1202
    %v1242 = vpack.c.b16 %v1209, %v1206
    %v1243 = vpack.c.b16 %v1210, %v1207
    %v1244 = vpack.c.b16 %v1211, %v1208
    %v1245 = vpack.c.b16 %v1215, %v1212
    %v1246 = vpack.c.b16 %v1216, %v1213
    %v1247 = vpack.c.b16 %v1217, %v1214
    %v1248 = vpack.c.b16 %v1221, %v1218
    %v1249 = vpack.c.b16 %v1222, %v1219
    %v1250 = vpack.c.b16 %v1223, %v1220
    %v1251 = vpack.c.b16 %v1227, %v1224
    %v1252 = vpack.c.b16 %v1228, %v1225
    %v1253 = vpack.c.b16 %v1229, %v1226
    %1278 = vmatpush.bf16.msra.mxu0 %v1251
    %1279 = vmatpush.bf16.msra.mxu0 %v1248
    %1280 = vmatpush.bf16.msra.mxu0 %v1245
    %1281 = vmatpush.bf16.msra.mxu0 %v1242
    %1282 = vmatpush.bf16.msra.mxu0 %v1239
    %1283 = vmatpush.bf16.msra.mxu0 %v1236
    %1284 = vmatpush.bf16.msra.mxu0 %v1233
    %1285 = vmatpush.bf16.msra.mxu0 %v1230
    %1286 = vmatmul.bf16.gmra.mxu0 %v1142
    %v1287 = vpop.f32.mrf.mxu0
    %v1288 = vadd.f32 %v1144, %v1287
    %v1289 = vpop.f32.mrf.mxu0
    %1290 = vdwg.mxu0
    %1291 = vmatpush.bf16.msra.mxu0 %v1252
    %1292 = vmatpush.bf16.msra.mxu0 %v1249
    %1293 = vmatpush.bf16.msra.mxu0 %v1246
    %1294 = vmatpush.bf16.msra.mxu0 %v1243
    %1295 = vmatpush.bf16.msra.mxu0 %v1240
    %1296 = vmatpush.bf16.msra.mxu0 %v1237
    %1297 = vmatpush.bf16.msra.mxu0 %v1234
    %1298 = vmatpush.bf16.msra.mxu0 %v1231
    %1299 = vmatmul.bf16.gmra.mxu0 %v1142
    %v1300 = vpop.f32.mrf.mxu0
    %v1301 = vadd.f32 %v1145, %v1300
    %v1302 = vpop.f32.mrf.mxu0
    %1303 = vdwg.mxu0
    %1304 = vmatpush.bf16.msra.mxu0 %v1253
    %1305 = vmatpush.bf16.msra.mxu0 %v1250
    %1306 = vmatpush.bf16.msra.mxu0 %v1247
    %1307 = vmatpush.bf16.msra.mxu0 %v1244
    %1308 = vmatpush.bf16.msra.mxu0 %v1241
    %1309 = vmatpush.bf16.msra.mxu0 %v1238
    %1310 = vmatpush.bf16.msra.mxu0 %v1235
    %1311 = vmatpush.bf16.msra.mxu0 %v1232
    %1312 = vmatmul.bf16.gmra.mxu0 %v1142
    %v1313 = vpop.f32.mrf.mxu0
    %v1314 = vadd.f32 %v1146, %v1313
    %v1315 = vpop.f32.mrf.mxu0
    %1316 = vdwg.mxu0
    %v1317 = vadd.f32 %v1288, %v891
    %v1318 = vxor.u32 %v1317, 2147483648
    %v1319 = vmul.f32 %v1318, 1.442695
    %v1320 = vpow.pop %v1319
    %v1321 = vadd.f32 %v1320, 1.0
    %v1322 = vrcp.pop %v1321
    %v1323 = vmul.f32 %v1321, %v1322
    %v1324 = vsub.f32 1.0, %v1323
    %v1325 = vmul.f32 %v1322, %v1324
    %v1326 = vadd.f32 %v1322, %v1325
    %vm1327 = vweird.f32 %v1321
    %vm1328 = vweird.f32 %v1322
    %vm1329 = vmor %vm1327, %vm1328
    %v1330 = vsel %vm1329, %v1322, %v1326
    %v1331 = vand.u32 2147483647, %v1321
    %vm1332 = vcmp.eq.f32.partialorder %v1331, 8.507059e+37
    %v1333 = vand.u32 %v1321, 2147483648
    %v1334 = vor.u32 1.1754944e-38, %v1333
    %v1335 = vsel %vm1332, %v1334, %v1330
    %v1336 = vmul.f32 1.0, %v1335
    %v1337 = vadd.f32 %v1301, %v904
    %v1338 = vxor.u32 %v1337, 2147483648
    %v1339 = vmul.f32 %v1338, 1.442695
    %v1340 = vpow.pop %v1339
    %v1341 = vadd.f32 %v1340, 1.0
    %v1342 = vrcp.pop %v1341
    %v1343 = vmul.f32 %v1341, %v1342
    %v1344 = vsub.f32 1.0, %v1343
    %v1345 = vmul.f32 %v1342, %v1344
    %v1346 = vadd.f32 %v1342, %v1345
    %vm1347 = vweird.f32 %v1341
    %vm1348 = vweird.f32 %v1342
    %vm1349 = vmor %vm1347, %vm1348
    %v1350 = vsel %vm1349, %v1342, %v1346
    %v1351 = vand.u32 2147483647, %v1341
    %vm1352 = vcmp.eq.f32.partialorder %v1351, 8.507059e+37
    %v1353 = vand.u32 %v1341, 2147483648
    %v1354 = vor.u32 1.1754944e-38, %v1353
    %v1355 = vsel %vm1352, %v1354, %v1350
    %v1356 = vmul.f32 1.0, %v1355
    %v1358 = vperm.slane %v748, 0
    %v1360 = vadd.f32 %v917, %v1358
    %v1361 = vmul.f32 %v1336, %v1360
    %v1362 = vadd.f32 %v1314, %v1361
    %v1363 = vtanh.pop %v1362
    %v1364 = vsub.f32 1.0, %v1356
    %v1365 = vmul.f32 %v1364, %v1363
    %v1366 = vmul.f32 %v1356, %v751
    %v1367 = vadd.f32 %v1365, %v1366
    %1368 = vst [vmem:[%s10] sm:$0xff] %v1367
    %v1369 = vpack.c.bf16 %v1367, %v1367
    %1370 = vmatpush.bf16.msra.mxu0 %v854
    %1371 = vmatpush.bf16.msra.mxu0 %v851
    %1372 = vmatpush.bf16.msra.mxu0 %v848
    %1373 = vmatpush.bf16.msra.mxu0 %v845
    %1374 = vmatpush.bf16.msra.mxu0 %v842
    %1375 = vmatpush.bf16.msra.mxu0 %v839
    %1376 = vmatpush.bf16.msra.mxu0 %v836
    %1377 = vmatpush.bf16.msra.mxu0 %v833
    %1378 = vmatmul.bf16.gmra.mxu0 %v1369
    %v1379 = vpop.f32.mrf.mxu0
    %v1380 = vadd.f32 0.0, %v1379
    %v1381 = vpop.f32.mrf.mxu0
    %1382 = vdwg.mxu0
    %1383 = vmatpush.bf16.msra.mxu0 %v855
    %1384 = vmatpush.bf16.msra.mxu0 %v852
    %1385 = vmatpush.bf16.msra.mxu0 %v849
    %1386 = vmatpush.bf16.msra.mxu0 %v846
    %1387 = vmatpush.bf16.msra.mxu0 %v843
    %1388 = vmatpush.bf16.msra.mxu0 %v840
    %1389 = vmatpush.bf16.msra.mxu0 %v837
    %1390 = vmatpush.bf16.msra.mxu0 %v834
    %1391 = vmatmul.bf16.gmra.mxu0 %v1369
    %v1392 = vpop.f32.mrf.mxu0
    %v1393 = vadd.f32 0.0, %v1392
    %v1394 = vpop.f32.mrf.mxu0
    %1395 = vdwg.mxu0
    %1396 = vmatpush.bf16.msra.mxu0 %v856
    %1397 = vmatpush.bf16.msra.mxu0 %v853
    %1398 = vmatpush.bf16.msra.mxu0 %v850
    %1399 = vmatpush.bf16.msra.mxu0 %v847
    %1400 = vmatpush.bf16.msra.mxu0 %v844
    %1401 = vmatpush.bf16.msra.mxu0 %v841
    %1402 = vmatpush.bf16.msra.mxu0 %v838
    %1403 = vmatpush.bf16.msra.mxu0 %v835
    %1404 = vmatmul.bf16.gmra.mxu0 %v1369
    %v1405 = vpop.f32.mrf.mxu0
    %v1406 = vadd.f32 0.0, %v1405
    %v1407 = vpop.f32.mrf.mxu0
    %1408 = vdwg.mxu0
    %1409 = vmatpush.bf16.msra.mxu0 %v1022
    %1410 = vmatpush.bf16.msra.mxu0 %v1019
    %1411 = vmatpush.bf16.msra.mxu0 %v1016
    %1412 = vmatpush.bf16.msra.mxu0 %v1013
    %1413 = vmatpush.bf16.msra.mxu0 %v1010
    %1414 = vmatpush.bf16.msra.mxu0 %v1007
    %1415 = vmatpush.bf16.msra.mxu0 %v1004
    %1416 = vmatpush.bf16.msra.mxu0 %v1001
    %1417 = vmatmul.bf16.gmra.mxu0 %v1142
    %v1418 = vpop.f32.mrf.mxu0
    %v1419 = vadd.f32 0.0, %v1418
    %v1420 = vpop.f32.mrf.mxu0
    %1421 = vdwg.mxu0
    %1422 = vmatpush.bf16.msra.mxu0 %v1023
    %1423 = vmatpush.bf16.msra.mxu0 %v1020
    %1424 = vmatpush.bf16.msra.mxu0 %v1017
    %1425 = vmatpush.bf16.msra.mxu0 %v1014
    %1426 = vmatpush.bf16.msra.mxu0 %v1011
    %1427 = vmatpush.bf16.msra.mxu0 %v1008
    %1428 = vmatpush.bf16.msra.mxu0 %v1005
    %1429 = vmatpush.bf16.msra.mxu0 %v1002
    %1430 = vmatmul.bf16.gmra.mxu0 %v1142
    %v1431 = vpop.f32.mrf.mxu0
    %v1432 = vadd.f32 0.0, %v1431
    %v1433 = vpop.f32.mrf.mxu0
    %1434 = vdwg.mxu0
    %1435 = vmatpush.bf16.msra.mxu0 %v1024
    %1436 = vmatpush.bf16.msra.mxu0 %v1021
    %1437 = vmatpush.bf16.msra.mxu0 %v1018
    %1438 = vmatpush.bf16.msra.mxu0 %v1015
    %1439 = vmatpush.bf16.msra.mxu0 %v1012
    %1440 = vmatpush.bf16.msra.mxu0 %v1009
    %1441 = vmatpush.bf16.msra.mxu0 %v1006
    %1442 = vmatpush.bf16.msra.mxu0 %v1003
    %1443 = vmatmul.bf16.gmra.mxu0 %v1142
    %v1444 = vpop.f32.mrf.mxu0
    %v1445 = vadd.f32 0.0, %v1444
    %v1446 = vpop.f32.mrf.mxu0
    %1447 = vdwg.mxu0
    %v1448 = vld [vmem:[#allocation2 + $0x18] sm:$0xff]
    %v1449 = vld [vmem:[#allocation2 + $0x20] sm:$0xff]
    %v1450 = vld [vmem:[#allocation2 + $0x28] sm:$0xff]
    %v1451 = vadd.f32 %v1448, %v1419
    %v1452 = vxor.u32 %v1451, 2147483648
    %v1453 = vmul.f32 %v1452, 1.442695
    %v1454 = vpow.pop %v1453
    %v1455 = vadd.f32 %v1454, 1.0
    %v1456 = vrcp.pop %v1455
    %v1457 = vmul.f32 %v1455, %v1456
    %v1458 = vsub.f32 1.0, %v1457
    %v1459 = vmul.f32 %v1456, %v1458
    %v1460 = vadd.f32 %v1456, %v1459
    %vm1461 = vweird.f32 %v1455
    %vm1462 = vweird.f32 %v1456
    %vm1463 = vmor %vm1461, %vm1462
    %v1464 = vsel %vm1463, %v1456, %v1460
    %v1465 = vand.u32 2147483647, %v1455
    %vm1466 = vcmp.eq.f32.partialorder %v1465, 8.507059e+37
    %v1467 = vand.u32 %v1455, 2147483648
    %v1468 = vor.u32 1.1754944e-38, %v1467
    %v1469 = vsel %vm1466, %v1468, %v1464
    %v1470 = vmul.f32 1.0, %v1469
    %v1471 = vadd.f32 %v1449, %v1432
    %v1472 = vxor.u32 %v1471, 2147483648
    %v1473 = vmul.f32 %v1472, 1.442695
    %v1474 = vpow.pop %v1473
    %v1475 = vadd.f32 %v1474, 1.0
    %v1476 = vrcp.pop %v1475
    %v1477 = vmul.f32 %v1475, %v1476
    %v1478 = vsub.f32 1.0, %v1477
    %v1479 = vmul.f32 %v1476, %v1478
    %v1480 = vadd.f32 %v1476, %v1479
    %vm1481 = vweird.f32 %v1475
    %vm1482 = vweird.f32 %v1476
    %vm1483 = vmor %vm1481, %vm1482
    %v1484 = vsel %vm1483, %v1476, %v1480
    %v1485 = vand.u32 2147483647, %v1475
    %vm1486 = vcmp.eq.f32.partialorder %v1485, 8.507059e+37
    %v1487 = vand.u32 %v1475, 2147483648
    %v1488 = vor.u32 1.1754944e-38, %v1487
    %v1489 = vsel %vm1486, %v1488, %v1484
    %v1490 = vmul.f32 1.0, %v1489
    %v1491 = vadd.f32 %v1445, %v1132
    %v1492 = vmul.f32 %v1470, %v1491
    %v1493 = vadd.f32 %v1450, %v1492
    %v1494 = vtanh.pop %v1493
    %v1495 = vsub.f32 1.0, %v1490
    %v1496 = vmul.f32 %v1495, %v1494
    %v1497 = vmul.f32 %v1490, %v1141
    %v1498 = vadd.f32 %v1496, %v1497
    %v1499 = vpack.c.bf16 %v1498, %v1498
    %1500 = vmatpush.bf16.msra.mxu0 %v1251
    %1501 = vmatpush.bf16.msra.mxu0 %v1248
    %1502 = vmatpush.bf16.msra.mxu0 %v1245
    %1503 = vmatpush.bf16.msra.mxu0 %v1242
    %1504 = vmatpush.bf16.msra.mxu0 %v1239
    %1505 = vmatpush.bf16.msra.mxu0 %v1236
    %1506 = vmatpush.bf16.msra.mxu0 %v1233
    %1507 = vmatpush.bf16.msra.mxu0 %v1230
    %1508 = vmatmul.bf16.gmra.mxu0 %v1499
    %v1509 = vpop.f32.mrf.mxu0
    %v1510 = vadd.f32 %v1144, %v1509
    %v1511 = vpop.f32.mrf.mxu0
    %1512 = vdwg.mxu0
    %1513 = vmatpush.bf16.msra.mxu0 %v1252
    %1514 = vmatpush.bf16.msra.mxu0 %v1249
    %1515 = vmatpush.bf16.msra.mxu0 %v1246
    %1516 = vmatpush.bf16.msra.mxu0 %v1243
    %1517 = vmatpush.bf16.msra.mxu0 %v1240
    %1518 = vmatpush.bf16.msra.mxu0 %v1237
    %1519 = vmatpush.bf16.msra.mxu0 %v1234
    %1520 = vmatpush.bf16.msra.mxu0 %v1231
    %1521 = vmatmul.bf16.gmra.mxu0 %v1499
    %v1522 = vpop.f32.mrf.mxu0
    %v1523 = vadd.f32 %v1145, %v1522
    %v1524 = vpop.f32.mrf.mxu0
    %1525 = vdwg.mxu0
    %1526 = vmatpush.bf16.msra.mxu0 %v1253
    %1527 = vmatpush.bf16.msra.mxu0 %v1250
    %1528 = vmatpush.bf16.msra.mxu0 %v1247
    %1529 = vmatpush.bf16.msra.mxu0 %v1244
    %1530 = vmatpush.bf16.msra.mxu0 %v1241
    %1531 = vmatpush.bf16.msra.mxu0 %v1238
    %1532 = vmatpush.bf16.msra.mxu0 %v1235
    %1533 = vmatpush.bf16.msra.mxu0 %v1232
    %1534 = vmatmul.bf16.gmra.mxu0 %v1499
    %v1535 = vpop.f32.mrf.mxu0
    %v1536 = vadd.f32 %v1146, %v1535
    %v1537 = vpop.f32.mrf.mxu0
    %1538 = vdwg.mxu0
    %v1539 = vadd.f32 %v1510, %v1380
    %v1540 = vxor.u32 %v1539, 2147483648
    %v1541 = vmul.f32 %v1540, 1.442695
    %v1542 = vpow.pop %v1541
    %v1543 = vadd.f32 %v1542, 1.0
    %v1544 = vrcp.pop %v1543
    %v1545 = vmul.f32 %v1543, %v1544
    %v1546 = vsub.f32 1.0, %v1545
    %v1547 = vmul.f32 %v1544, %v1546
    %v1548 = vadd.f32 %v1544, %v1547
    %vm1549 = vweird.f32 %v1543
    %vm1550 = vweird.f32 %v1544
    %vm1551 = vmor %vm1549, %vm1550
    %v1552 = vsel %vm1551, %v1544, %v1548
    %v1553 = vand.u32 2147483647, %v1543
    %vm1554 = vcmp.eq.f32.partialorder %v1553, 8.507059e+37
    %v1555 = vand.u32 %v1543, 2147483648
    %v1556 = vor.u32 1.1754944e-38, %v1555
    %v1557 = vsel %vm1554, %v1556, %v1552
    %v1558 = vmul.f32 1.0, %v1557
    %v1559 = vadd.f32 %v1523, %v1393
    %v1560 = vxor.u32 %v1559, 2147483648
    %v1561 = vmul.f32 %v1560, 1.442695
    %v1562 = vpow.pop %v1561
    %v1563 = vadd.f32 %v1562, 1.0
    %v1564 = vrcp.pop %v1563
    %v1565 = vmul.f32 %v1563, %v1564
    %v1566 = vsub.f32 1.0, %v1565
    %v1567 = vmul.f32 %v1564, %v1566
    %v1568 = vadd.f32 %v1564, %v1567
    %vm1569 = vweird.f32 %v1563
    %vm1570 = vweird.f32 %v1564
    %vm1571 = vmor %vm1569, %vm1570
    %v1572 = vsel %vm1571, %v1564, %v1568
    %v1573 = vand.u32 2147483647, %v1563
    %vm1574 = vcmp.eq.f32.partialorder %v1573, 8.507059e+37
    %v1575 = vand.u32 %v1563, 2147483648
    %v1576 = vor.u32 1.1754944e-38, %v1575
    %v1577 = vsel %vm1574, %v1576, %v1572
    %v1578 = vmul.f32 1.0, %v1577
    %v1579 = vadd.f32 %v1406, %v1358
    %v1580 = vmul.f32 %v1558, %v1579
    %v1581 = vadd.f32 %v1536, %v1580
    %v1582 = vtanh.pop %v1581
    %v1583 = vsub.f32 1.0, %v1578
    %v1584 = vmul.f32 %v1583, %v1582
    %v1585 = vmul.f32 %v1578, %v1367
    %v1586 = vadd.f32 %v1584, %v1585
    %s1587 = scalar_lea.vmem %s10, 8
    %1588 = vst [vmem:[%s1587] sm:$0xff] %v1586
    %v1589 = vpack.c.bf16 %v1586, %v1586
    %1590 = vmatpush.bf16.msra.mxu0 %v854
    %1591 = vmatpush.bf16.msra.mxu0 %v851
    %1592 = vmatpush.bf16.msra.mxu0 %v848
    %1593 = vmatpush.bf16.msra.mxu0 %v845
    %1594 = vmatpush.bf16.msra.mxu0 %v842
    %1595 = vmatpush.bf16.msra.mxu0 %v839
    %1596 = vmatpush.bf16.msra.mxu0 %v836
    %1597 = vmatpush.bf16.msra.mxu0 %v833
    %1598 = vmatmul.bf16.gmra.mxu0 %v1589
    %v1599 = vpop.f32.mrf.mxu0
    %v1600 = vadd.f32 0.0, %v1599
    %v1601 = vpop.f32.mrf.mxu0
    %1602 = vdwg.mxu0
    %1603 = vmatpush.bf16.msra.mxu0 %v855
    %1604 = vmatpush.bf16.msra.mxu0 %v852
    %1605 = vmatpush.bf16.msra.mxu0 %v849
    %1606 = vmatpush.bf16.msra.mxu0 %v846
    %1607 = vmatpush.bf16.msra.mxu0 %v843
    %1608 = vmatpush.bf16.msra.mxu0 %v840
    %1609 = vmatpush.bf16.msra.mxu0 %v837
    %1610 = vmatpush.bf16.msra.mxu0 %v834
    %1611 = vmatmul.bf16.gmra.mxu0 %v1589
    %v1612 = vpop.f32.mrf.mxu0
    %v1613 = vadd.f32 0.0, %v1612
    %v1614 = vpop.f32.mrf.mxu0
    %1615 = vdwg.mxu0
    %1616 = vmatpush.bf16.msra.mxu0 %v856
    %1617 = vmatpush.bf16.msra.mxu0 %v853
    %1618 = vmatpush.bf16.msra.mxu0 %v850
    %1619 = vmatpush.bf16.msra.mxu0 %v847
    %1620 = vmatpush.bf16.msra.mxu0 %v844
    %1621 = vmatpush.bf16.msra.mxu0 %v841
    %1622 = vmatpush.bf16.msra.mxu0 %v838
    %1623 = vmatpush.bf16.msra.mxu0 %v835
    %1624 = vmatmul.bf16.gmra.mxu0 %v1589
    %v1625 = vpop.f32.mrf.mxu0
    %v1626 = vadd.f32 0.0, %v1625
    %v1627 = vpop.f32.mrf.mxu0
    %1628 = vdwg.mxu0
    %1629 = vmatpush.bf16.msra.mxu0 %v1022
    %1630 = vmatpush.bf16.msra.mxu0 %v1019
    %1631 = vmatpush.bf16.msra.mxu0 %v1016
    %1632 = vmatpush.bf16.msra.mxu0 %v1013
    %1633 = vmatpush.bf16.msra.mxu0 %v1010
    %1634 = vmatpush.bf16.msra.mxu0 %v1007
    %1635 = vmatpush.bf16.msra.mxu0 %v1004
    %1636 = vmatpush.bf16.msra.mxu0 %v1001
    %1637 = vmatmul.bf16.gmra.mxu0 %v1499
    %v1638 = vpop.f32.mrf.mxu0
    %v1639 = vadd.f32 0.0, %v1638
    %v1640 = vpop.f32.mrf.mxu0
    %1641 = vdwg.mxu0
    %1642 = vmatpush.bf16.msra.mxu0 %v1023
    %1643 = vmatpush.bf16.msra.mxu0 %v1020
    %1644 = vmatpush.bf16.msra.mxu0 %v1017
    %1645 = vmatpush.bf16.msra.mxu0 %v1014
    %1646 = vmatpush.bf16.msra.mxu0 %v1011
    %1647 = vmatpush.bf16.msra.mxu0 %v1008
    %1648 = vmatpush.bf16.msra.mxu0 %v1005
    %1649 = vmatpush.bf16.msra.mxu0 %v1002
    %1650 = vmatmul.bf16.gmra.mxu0 %v1499
    %v1651 = vpop.f32.mrf.mxu0
    %v1652 = vadd.f32 0.0, %v1651
    %v1653 = vpop.f32.mrf.mxu0
    %1654 = vdwg.mxu0
    %1655 = vmatpush.bf16.msra.mxu0 %v1024
    %1656 = vmatpush.bf16.msra.mxu0 %v1021
    %1657 = vmatpush.bf16.msra.mxu0 %v1018
    %1658 = vmatpush.bf16.msra.mxu0 %v1015
    %1659 = vmatpush.bf16.msra.mxu0 %v1012
    %1660 = vmatpush.bf16.msra.mxu0 %v1009
    %1661 = vmatpush.bf16.msra.mxu0 %v1006
    %1662 = vmatpush.bf16.msra.mxu0 %v1003
    %1663 = vmatmul.bf16.gmra.mxu0 %v1499
    %v1664 = vpop.f32.mrf.mxu0
    %v1665 = vadd.f32 0.0, %v1664
    %v1666 = vpop.f32.mrf.mxu0
    %1667 = vdwg.mxu0
    %v1668 = vld [vmem:[#allocation2 + $0x30] sm:$0xff]
    %v1669 = vld [vmem:[#allocation2 + $0x38] sm:$0xff]
    %v1670 = vld [vmem:[#allocation2 + $0x40] sm:$0xff]
    %v1671 = vadd.f32 %v1668, %v1639
    %v1672 = vxor.u32 %v1671, 2147483648
    %v1673 = vmul.f32 %v1672, 1.442695
    %v1674 = vpow.pop %v1673
    %v1675 = vadd.f32 %v1674, 1.0
    %v1676 = vrcp.pop %v1675
    %v1677 = vmul.f32 %v1675, %v1676
    %v1678 = vsub.f32 1.0, %v1677
    %v1679 = vmul.f32 %v1676, %v1678
    %v1680 = vadd.f32 %v1676, %v1679
    %vm1681 = vweird.f32 %v1675
    %vm1682 = vweird.f32 %v1676
    %vm1683 = vmor %vm1681, %vm1682
    %v1684 = vsel %vm1683, %v1676, %v1680
    %v1685 = vand.u32 2147483647, %v1675
    %vm1686 = vcmp.eq.f32.partialorder %v1685, 8.507059e+37
    %v1687 = vand.u32 %v1675, 2147483648
    %v1688 = vor.u32 1.1754944e-38, %v1687
    %v1689 = vsel %vm1686, %v1688, %v1684
    %v1690 = vmul.f32 1.0, %v1689
    %v1691 = vadd.f32 %v1669, %v1652
    %v1692 = vxor.u32 %v1691, 2147483648
    %v1693 = vmul.f32 %v1692, 1.442695
    %v1694 = vpow.pop %v1693
    %v1695 = vadd.f32 %v1694, 1.0
    %v1696 = vrcp.pop %v1695
    %v1697 = vmul.f32 %v1695, %v1696
    %v1698 = vsub.f32 1.0, %v1697
    %v1699 = vmul.f32 %v1696, %v1698
    %v1700 = vadd.f32 %v1696, %v1699
    %vm1701 = vweird.f32 %v1695
    %vm1702 = vweird.f32 %v1696
    %vm1703 = vmor %vm1701, %vm1702
    %v1704 = vsel %vm1703, %v1696, %v1700
    %v1705 = vand.u32 2147483647, %v1695
    %vm1706 = vcmp.eq.f32.partialorder %v1705, 8.507059e+37
    %v1707 = vand.u32 %v1695, 2147483648
    %v1708 = vor.u32 1.1754944e-38, %v1707
    %v1709 = vsel %vm1706, %v1708, %v1704
    %v1710 = vmul.f32 1.0, %v1709
    %v1711 = vadd.f32 %v1665, %v1132
    %v1712 = vmul.f32 %v1690, %v1711
    %v1713 = vadd.f32 %v1670, %v1712
    %v1714 = vtanh.pop %v1713
    %v1715 = vsub.f32 1.0, %v1710
    %v1716 = vmul.f32 %v1715, %v1714
    %v1717 = vmul.f32 %v1710, %v1498
    %v1718 = vadd.f32 %v1716, %v1717
    %v1719 = vpack.c.bf16 %v1718, %v1718
    %1720 = vmatpush.bf16.msra.mxu0 %v1251
    %1721 = vmatpush.bf16.msra.mxu0 %v1248
    %1722 = vmatpush.bf16.msra.mxu0 %v1245
    %1723 = vmatpush.bf16.msra.mxu0 %v1242
    %1724 = vmatpush.bf16.msra.mxu0 %v1239
    %1725 = vmatpush.bf16.msra.mxu0 %v1236
    %1726 = vmatpush.bf16.msra.mxu0 %v1233
    %1727 = vmatpush.bf16.msra.mxu0 %v1230
    %1728 = vmatmul.bf16.gmra.mxu0 %v1719
    %v1729 = vpop.f32.mrf.mxu0
    %v1730 = vadd.f32 %v1144, %v1729
    %v1731 = vpop.f32.mrf.mxu0
    %1732 = vdwg.mxu0
    %1733 = vmatpush.bf16.msra.mxu0 %v1252
    %1734 = vmatpush.bf16.msra.mxu0 %v1249
    %1735 = vmatpush.bf16.msra.mxu0 %v1246
    %1736 = vmatpush.bf16.msra.mxu0 %v1243
    %1737 = vmatpush.bf16.msra.mxu0 %v1240
    %1738 = vmatpush.bf16.msra.mxu0 %v1237
    %1739 = vmatpush.bf16.msra.mxu0 %v1234
    %1740 = vmatpush.bf16.msra.mxu0 %v1231
    %1741 = vmatmul.bf16.gmra.mxu0 %v1719
    %v1742 = vpop.f32.mrf.mxu0
    %v1743 = vadd.f32 %v1145, %v1742
    %v1744 = vpop.f32.mrf.mxu0
    %1745 = vdwg.mxu0
    %1746 = vmatpush.bf16.msra.mxu0 %v1253
    %1747 = vmatpush.bf16.msra.mxu0 %v1250
    %1748 = vmatpush.bf16.msra.mxu0 %v1247
    %1749 = vmatpush.bf16.msra.mxu0 %v1244
    %1750 = vmatpush.bf16.msra.mxu0 %v1241
    %1751 = vmatpush.bf16.msra.mxu0 %v1238
    %1752 = vmatpush.bf16.msra.mxu0 %v1235
    %1753 = vmatpush.bf16.msra.mxu0 %v1232
    %1754 = vmatmul.bf16.gmra.mxu0 %v1719
    %v1755 = vpop.f32.mrf.mxu0
    %v1756 = vadd.f32 %v1146, %v1755
    %v1757 = vpop.f32.mrf.mxu0
    %1758 = vdwg.mxu0
    %v1759 = vadd.f32 %v1730, %v1600
    %v1760 = vxor.u32 %v1759, 2147483648
    %v1761 = vmul.f32 %v1760, 1.442695
    %v1762 = vpow.pop %v1761
    %v1763 = vadd.f32 %v1762, 1.0
    %v1764 = vrcp.pop %v1763
    %v1765 = vmul.f32 %v1763, %v1764
    %v1766 = vsub.f32 1.0, %v1765
    %v1767 = vmul.f32 %v1764, %v1766
    %v1768 = vadd.f32 %v1764, %v1767
    %vm1769 = vweird.f32 %v1763
    %vm1770 = vweird.f32 %v1764
    %vm1771 = vmor %vm1769, %vm1770
    %v1772 = vsel %vm1771, %v1764, %v1768
    %v1773 = vand.u32 2147483647, %v1763
    %vm1774 = vcmp.eq.f32.partialorder %v1773, 8.507059e+37
    %v1775 = vand.u32 %v1763, 2147483648
    %v1776 = vor.u32 1.1754944e-38, %v1775
    %v1777 = vsel %vm1774, %v1776, %v1772
    %v1778 = vmul.f32 1.0, %v1777
    %v1779 = vadd.f32 %v1743, %v1613
    %v1780 = vxor.u32 %v1779, 2147483648
    %v1781 = vmul.f32 %v1780, 1.442695
    %v1782 = vpow.pop %v1781
    %v1783 = vadd.f32 %v1782, 1.0
    %v1784 = vrcp.pop %v1783
    %v1785 = vmul.f32 %v1783, %v1784
    %v1786 = vsub.f32 1.0, %v1785
    %v1787 = vmul.f32 %v1784, %v1786
    %v1788 = vadd.f32 %v1784, %v1787
    %vm1789 = vweird.f32 %v1783
    %vm1790 = vweird.f32 %v1784
    %vm1791 = vmor %vm1789, %vm1790
    %v1792 = vsel %vm1791, %v1784, %v1788
    %v1793 = vand.u32 2147483647, %v1783
    %vm1794 = vcmp.eq.f32.partialorder %v1793, 8.507059e+37
    %v1795 = vand.u32 %v1783, 2147483648
    %v1796 = vor.u32 1.1754944e-38, %v1795
    %v1797 = vsel %vm1794, %v1796, %v1792
    %v1798 = vmul.f32 1.0, %v1797
    %v1799 = vadd.f32 %v1626, %v1358
    %v1800 = vmul.f32 %v1778, %v1799
    %v1801 = vadd.f32 %v1756, %v1800
    %v1802 = vtanh.pop %v1801
    %v1803 = vsub.f32 1.0, %v1798
    %v1804 = vmul.f32 %v1803, %v1802
    %v1805 = vmul.f32 %v1798, %v1586
    %v1806 = vadd.f32 %v1804, %v1805
    %s1807 = scalar_lea.vmem %s10, 16
    %1808 = vst [vmem:[%s1807] sm:$0xff] %v1806
    %v1809 = vpack.c.bf16 %v1806, %v1806
    %1810 = vmatpush.bf16.msra.mxu0 %v854
    %1811 = vmatpush.bf16.msra.mxu0 %v851
    %1812 = vmatpush.bf16.msra.mxu0 %v848
    %1813 = vmatpush.bf16.msra.mxu0 %v845
    %1814 = vmatpush.bf16.msra.mxu0 %v842
    %1815 = vmatpush.bf16.msra.mxu0 %v839
    %1816 = vmatpush.bf16.msra.mxu0 %v836
    %1817 = vmatpush.bf16.msra.mxu0 %v833
    %1818 = vmatmul.bf16.gmra.mxu0 %v1809
    %v1819 = vpop.f32.mrf.mxu0
    %v1820 = vadd.f32 0.0, %v1819
    %v1821 = vpop.f32.mrf.mxu0
    %1822 = vdwg.mxu0
    %1823 = vmatpush.bf16.msra.mxu0 %v855
    %1824 = vmatpush.bf16.msra.mxu0 %v852
    %1825 = vmatpush.bf16.msra.mxu0 %v849
    %1826 = vmatpush.bf16.msra.mxu0 %v846
    %1827 = vmatpush.bf16.msra.mxu0 %v843
    %1828 = vmatpush.bf16.msra.mxu0 %v840
    %1829 = vmatpush.bf16.msra.mxu0 %v837
    %1830 = vmatpush.bf16.msra.mxu0 %v834
    %1831 = vmatmul.bf16.gmra.mxu0 %v1809
    %v1832 = vpop.f32.mrf.mxu0
    %v1833 = vadd.f32 0.0, %v1832
    %v1834 = vpop.f32.mrf.mxu0
    %1835 = vdwg.mxu0
    %1836 = vmatpush.bf16.msra.mxu0 %v856
    %1837 = vmatpush.bf16.msra.mxu0 %v853
    %1838 = vmatpush.bf16.msra.mxu0 %v850
    %1839 = vmatpush.bf16.msra.mxu0 %v847
    %1840 = vmatpush.bf16.msra.mxu0 %v844
    %1841 = vmatpush.bf16.msra.mxu0 %v841
    %1842 = vmatpush.bf16.msra.mxu0 %v838
    %1843 = vmatpush.bf16.msra.mxu0 %v835
    %1844 = vmatmul.bf16.gmra.mxu0 %v1809
    %v1845 = vpop.f32.mrf.mxu0
    %v1846 = vadd.f32 0.0, %v1845
    %v1847 = vpop.f32.mrf.mxu0
    %1848 = vdwg.mxu0
    %1849 = vmatpush.bf16.msra.mxu0 %v1022
    %1850 = vmatpush.bf16.msra.mxu0 %v1019
    %1851 = vmatpush.bf16.msra.mxu0 %v1016
    %1852 = vmatpush.bf16.msra.mxu0 %v1013
    %1853 = vmatpush.bf16.msra.mxu0 %v1010
    %1854 = vmatpush.bf16.msra.mxu0 %v1007
    %1855 = vmatpush.bf16.msra.mxu0 %v1004
    %1856 = vmatpush.bf16.msra.mxu0 %v1001
    %1857 = vmatmul.bf16.gmra.mxu0 %v1719
    %v1858 = vpop.f32.mrf.mxu0
    %v1859 = vadd.f32 0.0, %v1858
    %v1860 = vpop.f32.mrf.mxu0
    %1861 = vdwg.mxu0
    %1862 = vmatpush.bf16.msra.mxu0 %v1023
    %1863 = vmatpush.bf16.msra.mxu0 %v1020
    %1864 = vmatpush.bf16.msra.mxu0 %v1017
    %1865 = vmatpush.bf16.msra.mxu0 %v1014
    %1866 = vmatpush.bf16.msra.mxu0 %v1011
    %1867 = vmatpush.bf16.msra.mxu0 %v1008
    %1868 = vmatpush.bf16.msra.mxu0 %v1005
    %1869 = vmatpush.bf16.msra.mxu0 %v1002
    %1870 = vmatmul.bf16.gmra.mxu0 %v1719
    %v1871 = vpop.f32.mrf.mxu0
    %v1872 = vadd.f32 0.0, %v1871
    %v1873 = vpop.f32.mrf.mxu0
    %1874 = vdwg.mxu0
    %1875 = vmatpush.bf16.msra.mxu0 %v1024
    %1876 = vmatpush.bf16.msra.mxu0 %v1021
    %1877 = vmatpush.bf16.msra.mxu0 %v1018
    %1878 = vmatpush.bf16.msra.mxu0 %v1015
    %1879 = vmatpush.bf16.msra.mxu0 %v1012
    %1880 = vmatpush.bf16.msra.mxu0 %v1009
    %1881 = vmatpush.bf16.msra.mxu0 %v1006
    %1882 = vmatpush.bf16.msra.mxu0 %v1003
    %1883 = vmatmul.bf16.gmra.mxu0 %v1719
    %v1884 = vpop.f32.mrf.mxu0
    %v1885 = vadd.f32 0.0, %v1884
    %v1886 = vpop.f32.mrf.mxu0
    %1887 = vdwg.mxu0
    %v1888 = vld [vmem:[#allocation2 + $0x48] sm:$0xff]
    %v1889 = vld [vmem:[#allocation2 + $0x50] sm:$0xff]
    %v1890 = vld [vmem:[#allocation2 + $0x58] sm:$0xff]
    %v1891 = vadd.f32 %v1888, %v1859
    %v1892 = vxor.u32 %v1891, 2147483648
    %v1893 = vmul.f32 %v1892, 1.442695
    %v1894 = vpow.pop %v1893
    %v1895 = vadd.f32 %v1894, 1.0
    %v1896 = vrcp.pop %v1895
    %v1897 = vmul.f32 %v1895, %v1896
    %v1898 = vsub.f32 1.0, %v1897
    %v1899 = vmul.f32 %v1896, %v1898
    %v1900 = vadd.f32 %v1896, %v1899
    %vm1901 = vweird.f32 %v1895
    %vm1902 = vweird.f32 %v1896
    %vm1903 = vmor %vm1901, %vm1902
    %v1904 = vsel %vm1903, %v1896, %v1900
    %v1905 = vand.u32 2147483647, %v1895
    %vm1906 = vcmp.eq.f32.partialorder %v1905, 8.507059e+37
    %v1907 = vand.u32 %v1895, 2147483648
    %v1908 = vor.u32 1.1754944e-38, %v1907
    %v1909 = vsel %vm1906, %v1908, %v1904
    %v1910 = vmul.f32 1.0, %v1909
    %v1911 = vadd.f32 %v1889, %v1872
    %v1912 = vxor.u32 %v1911, 2147483648
    %v1913 = vmul.f32 %v1912, 1.442695
    %v1914 = vpow.pop %v1913
    %v1915 = vadd.f32 %v1914, 1.0
    %v1916 = vrcp.pop %v1915
    %v1917 = vmul.f32 %v1915, %v1916
    %v1918 = vsub.f32 1.0, %v1917
    %v1919 = vmul.f32 %v1916, %v1918
    %v1920 = vadd.f32 %v1916, %v1919
    %vm1921 = vweird.f32 %v1915
    %vm1922 = vweird.f32 %v1916
    %vm1923 = vmor %vm1921, %vm1922
    %v1924 = vsel %vm1923, %v1916, %v1920
    %v1925 = vand.u32 2147483647, %v1915
    %vm1926 = vcmp.eq.f32.partialorder %v1925, 8.507059e+37
    %v1927 = vand.u32 %v1915, 2147483648
    %v1928 = vor.u32 1.1754944e-38, %v1927
    %v1929 = vsel %vm1926, %v1928, %v1924
    %v1930 = vmul.f32 1.0, %v1929
    %v1931 = vadd.f32 %v1885, %v1132
    %v1932 = vmul.f32 %v1910, %v1931
    %v1933 = vadd.f32 %v1890, %v1932
    %v1934 = vtanh.pop %v1933
    %v1935 = vsub.f32 1.0, %v1930
    %v1936 = vmul.f32 %v1935, %v1934
    %v1937 = vmul.f32 %v1930, %v1718
    %v1938 = vadd.f32 %v1936, %v1937
    %v1939 = vpack.c.bf16 %v1938, %v1938
    %1940 = vmatpush.bf16.msra.mxu0 %v1251
    %1941 = vmatpush.bf16.msra.mxu0 %v1248
    %1942 = vmatpush.bf16.msra.mxu0 %v1245
    %1943 = vmatpush.bf16.msra.mxu0 %v1242
    %1944 = vmatpush.bf16.msra.mxu0 %v1239
    %1945 = vmatpush.bf16.msra.mxu0 %v1236
    %1946 = vmatpush.bf16.msra.mxu0 %v1233
    %1947 = vmatpush.bf16.msra.mxu0 %v1230
    %1948 = vmatmul.bf16.gmra.mxu0 %v1939
    %v1949 = vpop.f32.mrf.mxu0
    %v1950 = vadd.f32 %v1144, %v1949
    %v1951 = vpop.f32.mrf.mxu0
    %1952 = vdwg.mxu0
    %1953 = vmatpush.bf16.msra.mxu0 %v1252
    %1954 = vmatpush.bf16.msra.mxu0 %v1249
    %1955 = vmatpush.bf16.msra.mxu0 %v1246
    %1956 = vmatpush.bf16.msra.mxu0 %v1243
    %1957 = vmatpush.bf16.msra.mxu0 %v1240
    %1958 = vmatpush.bf16.msra.mxu0 %v1237
    %1959 = vmatpush.bf16.msra.mxu0 %v1234
    %1960 = vmatpush.bf16.msra.mxu0 %v1231
    %1961 = vmatmul.bf16.gmra.mxu0 %v1939
    %v1962 = vpop.f32.mrf.mxu0
    %v1963 = vadd.f32 %v1145, %v1962
    %v1964 = vpop.f32.mrf.mxu0
    %1965 = vdwg.mxu0
    %1966 = vmatpush.bf16.msra.mxu0 %v1253
    %1967 = vmatpush.bf16.msra.mxu0 %v1250
    %1968 = vmatpush.bf16.msra.mxu0 %v1247
    %1969 = vmatpush.bf16.msra.mxu0 %v1244
    %1970 = vmatpush.bf16.msra.mxu0 %v1241
    %1971 = vmatpush.bf16.msra.mxu0 %v1238
    %1972 = vmatpush.bf16.msra.mxu0 %v1235
    %1973 = vmatpush.bf16.msra.mxu0 %v1232
    %1974 = vmatmul.bf16.gmra.mxu0 %v1939
    %v1975 = vpop.f32.mrf.mxu0
    %v1976 = vadd.f32 %v1146, %v1975
    %v1977 = vpop.f32.mrf.mxu0
    %1978 = vdwg.mxu0
    %v1979 = vadd.f32 %v1950, %v1820
    %v1980 = vxor.u32 %v1979, 2147483648
    %v1981 = vmul.f32 %v1980, 1.442695
    %v1982 = vpow.pop %v1981
    %v1983 = vadd.f32 %v1982, 1.0
    %v1984 = vrcp.pop %v1983
    %v1985 = vmul.f32 %v1983, %v1984
    %v1986 = vsub.f32 1.0, %v1985
    %v1987 = vmul.f32 %v1984, %v1986
    %v1988 = vadd.f32 %v1984, %v1987
    %vm1989 = vweird.f32 %v1983
    %vm1990 = vweird.f32 %v1984
    %vm1991 = vmor %vm1989, %vm1990
    %v1992 = vsel %vm1991, %v1984, %v1988
    %v1993 = vand.u32 2147483647, %v1983
    %vm1994 = vcmp.eq.f32.partialorder %v1993, 8.507059e+37
    %v1995 = vand.u32 %v1983, 2147483648
    %v1996 = vor.u32 1.1754944e-38, %v1995
    %v1997 = vsel %vm1994, %v1996, %v1992
    %v1998 = vmul.f32 1.0, %v1997
    %v1999 = vadd.f32 %v1963, %v1833
    %v2000 = vxor.u32 %v1999, 2147483648
    %v2001 = vmul.f32 %v2000, 1.442695
    %v2002 = vpow.pop %v2001
    %v2003 = vadd.f32 %v2002, 1.0
    %v2004 = vrcp.pop %v2003
    %v2005 = vmul.f32 %v2003, %v2004
    %v2006 = vsub.f32 1.0, %v2005
    %v2007 = vmul.f32 %v2004, %v2006
    %v2008 = vadd.f32 %v2004, %v2007
    %vm2009 = vweird.f32 %v2003
    %vm2010 = vweird.f32 %v2004
    %vm2011 = vmor %vm2009, %vm2010
    %v2012 = vsel %vm2011, %v2004, %v2008
    %v2013 = vand.u32 2147483647, %v2003
    %vm2014 = vcmp.eq.f32.partialorder %v2013, 8.507059e+37
    %v2015 = vand.u32 %v2003, 2147483648
    %v2016 = vor.u32 1.1754944e-38, %v2015
    %v2017 = vsel %vm2014, %v2016, %v2012
    %v2018 = vmul.f32 1.0, %v2017
    %v2019 = vadd.f32 %v1846, %v1358
    %v2020 = vmul.f32 %v1998, %v2019
    %v2021 = vadd.f32 %v1976, %v2020
    %v2022 = vtanh.pop %v2021
    %v2023 = vsub.f32 1.0, %v2018
    %v2024 = vmul.f32 %v2023, %v2022
    %v2025 = vmul.f32 %v2018, %v1806
    %v2026 = vadd.f32 %v2024, %v2025
    %s2027 = scalar_lea.vmem %s10, 24
    %2028 = vst [vmem:[%s2027] sm:$0xff] %v2026
    %v2029 = vpack.c.bf16 %v2026, %v2026
    %2030 = vmatpush.bf16.msra.mxu0 %v854
    %2031 = vmatpush.bf16.msra.mxu0 %v851
    %2032 = vmatpush.bf16.msra.mxu0 %v848
    %2033 = vmatpush.bf16.msra.mxu0 %v845
    %2034 = vmatpush.bf16.msra.mxu0 %v842
    %2035 = vmatpush.bf16.msra.mxu0 %v839
    %2036 = vmatpush.bf16.msra.mxu0 %v836
    %2037 = vmatpush.bf16.msra.mxu0 %v833
    %2038 = vmatmul.bf16.gmra.mxu0 %v2029
    %v2039 = vpop.f32.mrf.mxu0
    %v2040 = vadd.f32 0.0, %v2039
    %v2041 = vpop.f32.mrf.mxu0
    %2042 = vdwg.mxu0
    %2043 = vmatpush.bf16.msra.mxu0 %v855
    %2044 = vmatpush.bf16.msra.mxu0 %v852
    %2045 = vmatpush.bf16.msra.mxu0 %v849
    %2046 = vmatpush.bf16.msra.mxu0 %v846
    %2047 = vmatpush.bf16.msra.mxu0 %v843
    %2048 = vmatpush.bf16.msra.mxu0 %v840
    %2049 = vmatpush.bf16.msra.mxu0 %v837
    %2050 = vmatpush.bf16.msra.mxu0 %v834
    %2051 = vmatmul.bf16.gmra.mxu0 %v2029
    %v2052 = vpop.f32.mrf.mxu0
    %v2053 = vadd.f32 0.0, %v2052
    %v2054 = vpop.f32.mrf.mxu0
    %2055 = vdwg.mxu0
    %2056 = vmatpush.bf16.msra.mxu0 %v856
    %2057 = vmatpush.bf16.msra.mxu0 %v853
    %2058 = vmatpush.bf16.msra.mxu0 %v850
    %2059 = vmatpush.bf16.msra.mxu0 %v847
    %2060 = vmatpush.bf16.msra.mxu0 %v844
    %2061 = vmatpush.bf16.msra.mxu0 %v841
    %2062 = vmatpush.bf16.msra.mxu0 %v838
    %2063 = vmatpush.bf16.msra.mxu0 %v835
    %2064 = vmatmul.bf16.gmra.mxu0 %v2029
    %v2065 = vpop.f32.mrf.mxu0
    %v2066 = vadd.f32 0.0, %v2065
    %v2067 = vpop.f32.mrf.mxu0
    %2068 = vdwg.mxu0
    %2069 = vmatpush.bf16.msra.mxu0 %v1022
    %2070 = vmatpush.bf16.msra.mxu0 %v1019
    %2071 = vmatpush.bf16.msra.mxu0 %v1016
    %2072 = vmatpush.bf16.msra.mxu0 %v1013
    %2073 = vmatpush.bf16.msra.mxu0 %v1010
    %2074 = vmatpush.bf16.msra.mxu0 %v1007
    %2075 = vmatpush.bf16.msra.mxu0 %v1004
    %2076 = vmatpush.bf16.msra.mxu0 %v1001
    %2077 = vmatmul.bf16.gmra.mxu0 %v1939
    %v2078 = vpop.f32.mrf.mxu0
    %v2079 = vadd.f32 0.0, %v2078
    %v2080 = vpop.f32.mrf.mxu0
    %2081 = vdwg.mxu0
    %2082 = vmatpush.bf16.msra.mxu0 %v1023
    %2083 = vmatpush.bf16.msra.mxu0 %v1020
    %2084 = vmatpush.bf16.msra.mxu0 %v1017
    %2085 = vmatpush.bf16.msra.mxu0 %v1014
    %2086 = vmatpush.bf16.msra.mxu0 %v1011
    %2087 = vmatpush.bf16.msra.mxu0 %v1008
    %2088 = vmatpush.bf16.msra.mxu0 %v1005
    %2089 = vmatpush.bf16.msra.mxu0 %v1002
    %2090 = vmatmul.bf16.gmra.mxu0 %v1939
    %v2091 = vpop.f32.mrf.mxu0
    %v2092 = vadd.f32 0.0, %v2091
    %v2093 = vpop.f32.mrf.mxu0
    %2094 = vdwg.mxu0
    %2095 = vmatpush.bf16.msra.mxu0 %v1024
    %2096 = vmatpush.bf16.msra.mxu0 %v1021
    %2097 = vmatpush.bf16.msra.mxu0 %v1018
    %2098 = vmatpush.bf16.msra.mxu0 %v1015
    %2099 = vmatpush.bf16.msra.mxu0 %v1012
    %2100 = vmatpush.bf16.msra.mxu0 %v1009
    %2101 = vmatpush.bf16.msra.mxu0 %v1006
    %2102 = vmatpush.bf16.msra.mxu0 %v1003
    %2103 = vmatmul.bf16.gmra.mxu0 %v1939
    %v2104 = vpop.f32.mrf.mxu0
    %v2105 = vadd.f32 0.0, %v2104
    %v2106 = vpop.f32.mrf.mxu0
    %2107 = vdwg.mxu0
    %v2108 = vld [vmem:[#allocation2 + $0x60] sm:$0xff]
    %v2109 = vld [vmem:[#allocation2 + $0x68] sm:$0xff]
    %v2110 = vld [vmem:[#allocation2 + $0x70] sm:$0xff]
    %v2111 = vadd.f32 %v2108, %v2079
    %v2112 = vxor.u32 %v2111, 2147483648
    %v2113 = vmul.f32 %v2112, 1.442695
    %v2114 = vpow.pop %v2113
    %v2115 = vadd.f32 %v2114, 1.0
    %v2116 = vrcp.pop %v2115
    %v2117 = vmul.f32 %v2115, %v2116
    %v2118 = vsub.f32 1.0, %v2117
    %v2119 = vmul.f32 %v2116, %v2118
    %v2120 = vadd.f32 %v2116, %v2119
    %vm2121 = vweird.f32 %v2115
    %vm2122 = vweird.f32 %v2116
    %vm2123 = vmor %vm2121, %vm2122
    %v2124 = vsel %vm2123, %v2116, %v2120
    %v2125 = vand.u32 2147483647, %v2115
    %vm2126 = vcmp.eq.f32.partialorder %v2125, 8.507059e+37
    %v2127 = vand.u32 %v2115, 2147483648
    %v2128 = vor.u32 1.1754944e-38, %v2127
    %v2129 = vsel %vm2126, %v2128, %v2124
    %v2130 = vmul.f32 1.0, %v2129
    %v2131 = vadd.f32 %v2109, %v2092
    %v2132 = vxor.u32 %v2131, 2147483648
    %v2133 = vmul.f32 %v2132, 1.442695
    %v2134 = vpow.pop %v2133
    %v2135 = vadd.f32 %v2134, 1.0
    %v2136 = vrcp.pop %v2135
    %v2137 = vmul.f32 %v2135, %v2136
    %v2138 = vsub.f32 1.0, %v2137
    %v2139 = vmul.f32 %v2136, %v2138
    %v2140 = vadd.f32 %v2136, %v2139
    %vm2141 = vweird.f32 %v2135
    %vm2142 = vweird.f32 %v2136
    %vm2143 = vmor %vm2141, %vm2142
    %v2144 = vsel %vm2143, %v2136, %v2140
    %v2145 = vand.u32 2147483647, %v2135
    %vm2146 = vcmp.eq.f32.partialorder %v2145, 8.507059e+37
    %v2147 = vand.u32 %v2135, 2147483648
    %v2148 = vor.u32 1.1754944e-38, %v2147
    %v2149 = vsel %vm2146, %v2148, %v2144
    %v2150 = vmul.f32 1.0, %v2149
    %v2151 = vadd.f32 %v2105, %v1132
    %v2152 = vmul.f32 %v2130, %v2151
    %v2153 = vadd.f32 %v2110, %v2152
    %v2154 = vtanh.pop %v2153
    %v2155 = vsub.f32 1.0, %v2150
    %v2156 = vmul.f32 %v2155, %v2154
    %v2157 = vmul.f32 %v2150, %v1938
    %v2158 = vadd.f32 %v2156, %v2157
    %v2159 = vpack.c.bf16 %v2158, %v2158
    %2160 = vmatpush.bf16.msra.mxu0 %v1251
    %2161 = vmatpush.bf16.msra.mxu0 %v1248
    %2162 = vmatpush.bf16.msra.mxu0 %v1245
    %2163 = vmatpush.bf16.msra.mxu0 %v1242
    %2164 = vmatpush.bf16.msra.mxu0 %v1239
    %2165 = vmatpush.bf16.msra.mxu0 %v1236
    %2166 = vmatpush.bf16.msra.mxu0 %v1233
    %2167 = vmatpush.bf16.msra.mxu0 %v1230
    %2168 = vmatmul.bf16.gmra.mxu0 %v2159
    %v2169 = vpop.f32.mrf.mxu0
    %v2170 = vadd.f32 %v1144, %v2169
    %v2171 = vpop.f32.mrf.mxu0
    %2172 = vdwg.mxu0
    %2173 = vmatpush.bf16.msra.mxu0 %v1252
    %2174 = vmatpush.bf16.msra.mxu0 %v1249
    %2175 = vmatpush.bf16.msra.mxu0 %v1246
    %2176 = vmatpush.bf16.msra.mxu0 %v1243
    %2177 = vmatpush.bf16.msra.mxu0 %v1240
    %2178 = vmatpush.bf16.msra.mxu0 %v1237
    %2179 = vmatpush.bf16.msra.mxu0 %v1234
    %2180 = vmatpush.bf16.msra.mxu0 %v1231
    %2181 = vmatmul.bf16.gmra.mxu0 %v2159
    %v2182 = vpop.f32.mrf.mxu0
    %v2183 = vadd.f32 %v1145, %v2182
    %v2184 = vpop.f32.mrf.mxu0
    %2185 = vdwg.mxu0
    %2186 = vmatpush.bf16.msra.mxu0 %v1253
    %2187 = vmatpush.bf16.msra.mxu0 %v1250
    %2188 = vmatpush.bf16.msra.mxu0 %v1247
    %2189 = vmatpush.bf16.msra.mxu0 %v1244
    %2190 = vmatpush.bf16.msra.mxu0 %v1241
    %2191 = vmatpush.bf16.msra.mxu0 %v1238
    %2192 = vmatpush.bf16.msra.mxu0 %v1235
    %2193 = vmatpush.bf16.msra.mxu0 %v1232
    %2194 = vmatmul.bf16.gmra.mxu0 %v2159
    %v2195 = vpop.f32.mrf.mxu0
    %v2196 = vadd.f32 %v1146, %v2195
    %v2197 = vpop.f32.mrf.mxu0
    %2198 = vdwg.mxu0
    %v2199 = vadd.f32 %v2170, %v2040
    %v2200 = vxor.u32 %v2199, 2147483648
    %v2201 = vmul.f32 %v2200, 1.442695
    %v2202 = vpow.pop %v2201
    %v2203 = vadd.f32 %v2202, 1.0
    %v2204 = vrcp.pop %v2203
    %v2205 = vmul.f32 %v2203, %v2204
    %v2206 = vsub.f32 1.0, %v2205
    %v2207 = vmul.f32 %v2204, %v2206
    %v2208 = vadd.f32 %v2204, %v2207
    %vm2209 = vweird.f32 %v2203
    %vm2210 = vweird.f32 %v2204
    %vm2211 = vmor %vm2209, %vm2210
    %v2212 = vsel %vm2211, %v2204, %v2208
    %v2213 = vand.u32 2147483647, %v2203
    %vm2214 = vcmp.eq.f32.partialorder %v2213, 8.507059e+37
    %v2215 = vand.u32 %v2203, 2147483648
    %v2216 = vor.u32 1.1754944e-38, %v2215
    %v2217 = vsel %vm2214, %v2216, %v2212
    %v2218 = vmul.f32 1.0, %v2217
    %v2219 = vadd.f32 %v2183, %v2053
    %v2220 = vxor.u32 %v2219, 2147483648
    %v2221 = vmul.f32 %v2220, 1.442695
    %v2222 = vpow.pop %v2221
    %v2223 = vadd.f32 %v2222, 1.0
    %v2224 = vrcp.pop %v2223
    %v2225 = vmul.f32 %v2223, %v2224
    %v2226 = vsub.f32 1.0, %v2225
    %v2227 = vmul.f32 %v2224, %v2226
    %v2228 = vadd.f32 %v2224, %v2227
    %vm2229 = vweird.f32 %v2223
    %vm2230 = vweird.f32 %v2224
    %vm2231 = vmor %vm2229, %vm2230
    %v2232 = vsel %vm2231, %v2224, %v2228
    %v2233 = vand.u32 2147483647, %v2223
    %vm2234 = vcmp.eq.f32.partialorder %v2233, 8.507059e+37
    %v2235 = vand.u32 %v2223, 2147483648
    %v2236 = vor.u32 1.1754944e-38, %v2235
    %v2237 = vsel %vm2234, %v2236, %v2232
    %v2238 = vmul.f32 1.0, %v2237
    %v2239 = vadd.f32 %v2066, %v1358
    %v2240 = vmul.f32 %v2218, %v2239
    %v2241 = vadd.f32 %v2196, %v2240
    %v2242 = vtanh.pop %v2241
    %v2243 = vsub.f32 1.0, %v2238
    %v2244 = vmul.f32 %v2243, %v2242
    %v2245 = vmul.f32 %v2238, %v2026
    %v2246 = vadd.f32 %v2244, %v2245
    %s2247 = scalar_lea.vmem %s10, 32
    %2248 = vst [vmem:[%s2247] sm:$0xff] %v2246
    %v2249 = vpack.c.bf16 %v2246, %v2246
    %2250 = vmatpush.bf16.msra.mxu0 %v854
    %2251 = vmatpush.bf16.msra.mxu0 %v851
    %2252 = vmatpush.bf16.msra.mxu0 %v848
    %2253 = vmatpush.bf16.msra.mxu0 %v845
    %2254 = vmatpush.bf16.msra.mxu0 %v842
    %2255 = vmatpush.bf16.msra.mxu0 %v839
    %2256 = vmatpush.bf16.msra.mxu0 %v836
    %2257 = vmatpush.bf16.msra.mxu0 %v833
    %2258 = vmatmul.bf16.gmra.mxu0 %v2249
    %v2259 = vpop.f32.mrf.mxu0
    %v2260 = vadd.f32 0.0, %v2259
    %v2261 = vpop.f32.mrf.mxu0
    %2262 = vdwg.mxu0
    %2263 = vmatpush.bf16.msra.mxu0 %v855
    %2264 = vmatpush.bf16.msra.mxu0 %v852
    %2265 = vmatpush.bf16.msra.mxu0 %v849
    %2266 = vmatpush.bf16.msra.mxu0 %v846
    %2267 = vmatpush.bf16.msra.mxu0 %v843
    %2268 = vmatpush.bf16.msra.mxu0 %v840
    %2269 = vmatpush.bf16.msra.mxu0 %v837
    %2270 = vmatpush.bf16.msra.mxu0 %v834
    %2271 = vmatmul.bf16.gmra.mxu0 %v2249
    %v2272 = vpop.f32.mrf.mxu0
    %v2273 = vadd.f32 0.0, %v2272
    %v2274 = vpop.f32.mrf.mxu0
    %2275 = vdwg.mxu0
    %2276 = vmatpush.bf16.msra.mxu0 %v856
    %2277 = vmatpush.bf16.msra.mxu0 %v853
    %2278 = vmatpush.bf16.msra.mxu0 %v850
    %2279 = vmatpush.bf16.msra.mxu0 %v847
    %2280 = vmatpush.bf16.msra.mxu0 %v844
    %2281 = vmatpush.bf16.msra.mxu0 %v841
    %2282 = vmatpush.bf16.msra.mxu0 %v838
    %2283 = vmatpush.bf16.msra.mxu0 %v835
    %2284 = vmatmul.bf16.gmra.mxu0 %v2249
    %v2285 = vpop.f32.mrf.mxu0
    %v2286 = vadd.f32 0.0, %v2285
    %v2287 = vpop.f32.mrf.mxu0
    %2288 = vdwg.mxu0
    %2289 = vmatpush.bf16.msra.mxu0 %v1022
    %2290 = vmatpush.bf16.msra.mxu0 %v1019
    %2291 = vmatpush.bf16.msra.mxu0 %v1016
    %2292 = vmatpush.bf16.msra.mxu0 %v1013
    %2293 = vmatpush.bf16.msra.mxu0 %v1010
    %2294 = vmatpush.bf16.msra.mxu0 %v1007
    %2295 = vmatpush.bf16.msra.mxu0 %v1004
    %2296 = vmatpush.bf16.msra.mxu0 %v1001
    %2297 = vmatmul.bf16.gmra.mxu0 %v2159
    %v2298 = vpop.f32.mrf.mxu0
    %v2299 = vadd.f32 0.0, %v2298
    %v2300 = vpop.f32.mrf.mxu0
    %2301 = vdwg.mxu0
    %2302 = vmatpush.bf16.msra.mxu0 %v1023
    %2303 = vmatpush.bf16.msra.mxu0 %v1020
    %2304 = vmatpush.bf16.msra.mxu0 %v1017
    %2305 = vmatpush.bf16.msra.mxu0 %v1014
    %2306 = vmatpush.bf16.msra.mxu0 %v1011
    %2307 = vmatpush.bf16.msra.mxu0 %v1008
    %2308 = vmatpush.bf16.msra.mxu0 %v1005
    %2309 = vmatpush.bf16.msra.mxu0 %v1002
    %2310 = vmatmul.bf16.gmra.mxu0 %v2159
    %v2311 = vpop.f32.mrf.mxu0
    %v2312 = vadd.f32 0.0, %v2311
    %v2313 = vpop.f32.mrf.mxu0
    %2314 = vdwg.mxu0
    %2315 = vmatpush.bf16.msra.mxu0 %v1024
    %2316 = vmatpush.bf16.msra.mxu0 %v1021
    %2317 = vmatpush.bf16.msra.mxu0 %v1018
    %2318 = vmatpush.bf16.msra.mxu0 %v1015
    %2319 = vmatpush.bf16.msra.mxu0 %v1012
    %2320 = vmatpush.bf16.msra.mxu0 %v1009
    %2321 = vmatpush.bf16.msra.mxu0 %v1006
    %2322 = vmatpush.bf16.msra.mxu0 %v1003
    %2323 = vmatmul.bf16.gmra.mxu0 %v2159
    %v2324 = vpop.f32.mrf.mxu0
    %v2325 = vadd.f32 0.0, %v2324
    %v2326 = vpop.f32.mrf.mxu0
    %2327 = vdwg.mxu0
    %v2328 = vld [vmem:[#allocation2 + $0x78] sm:$0xff]
    %v2329 = vld [vmem:[#allocation2 + $0x80] sm:$0xff]
    %v2330 = vld [vmem:[#allocation2 + $0x88] sm:$0xff]
    %v2331 = vadd.f32 %v2328, %v2299
    %v2332 = vxor.u32 %v2331, 2147483648
    %v2333 = vmul.f32 %v2332, 1.442695
    %v2334 = vpow.pop %v2333
    %v2335 = vadd.f32 %v2334, 1.0
    %v2336 = vrcp.pop %v2335
    %v2337 = vmul.f32 %v2335, %v2336
    %v2338 = vsub.f32 1.0, %v2337
    %v2339 = vmul.f32 %v2336, %v2338
    %v2340 = vadd.f32 %v2336, %v2339
    %vm2341 = vweird.f32 %v2335
    %vm2342 = vweird.f32 %v2336
    %vm2343 = vmor %vm2341, %vm2342
    %v2344 = vsel %vm2343, %v2336, %v2340
    %v2345 = vand.u32 2147483647, %v2335
    %vm2346 = vcmp.eq.f32.partialorder %v2345, 8.507059e+37
    %v2347 = vand.u32 %v2335, 2147483648
    %v2348 = vor.u32 1.1754944e-38, %v2347
    %v2349 = vsel %vm2346, %v2348, %v2344
    %v2350 = vmul.f32 1.0, %v2349
    %v2351 = vadd.f32 %v2329, %v2312
    %v2352 = vxor.u32 %v2351, 2147483648
    %v2353 = vmul.f32 %v2352, 1.442695
    %v2354 = vpow.pop %v2353
    %v2355 = vadd.f32 %v2354, 1.0
    %v2356 = vrcp.pop %v2355
    %v2357 = vmul.f32 %v2355, %v2356
    %v2358 = vsub.f32 1.0, %v2357
    %v2359 = vmul.f32 %v2356, %v2358
    %v2360 = vadd.f32 %v2356, %v2359
    %vm2361 = vweird.f32 %v2355
    %vm2362 = vweird.f32 %v2356
    %vm2363 = vmor %vm2361, %vm2362
    %v2364 = vsel %vm2363, %v2356, %v2360
    %v2365 = vand.u32 2147483647, %v2355
    %vm2366 = vcmp.eq.f32.partialorder %v2365, 8.507059e+37
    %v2367 = vand.u32 %v2355, 2147483648
    %v2368 = vor.u32 1.1754944e-38, %v2367
    %v2369 = vsel %vm2366, %v2368, %v2364
    %v2370 = vmul.f32 1.0, %v2369
    %v2371 = vadd.f32 %v2325, %v1132
    %v2372 = vmul.f32 %v2350, %v2371
    %v2373 = vadd.f32 %v2330, %v2372
    %v2374 = vtanh.pop %v2373
    %v2375 = vsub.f32 1.0, %v2370
    %v2376 = vmul.f32 %v2375, %v2374
    %v2377 = vmul.f32 %v2370, %v2158
    %v2378 = vadd.f32 %v2376, %v2377
    %v2379 = vpack.c.bf16 %v2378, %v2378
    %2380 = vmatpush.bf16.msra.mxu0 %v1251
    %2381 = vmatpush.bf16.msra.mxu0 %v1248
    %2382 = vmatpush.bf16.msra.mxu0 %v1245
    %2383 = vmatpush.bf16.msra.mxu0 %v1242
    %2384 = vmatpush.bf16.msra.mxu0 %v1239
    %2385 = vmatpush.bf16.msra.mxu0 %v1236
    %2386 = vmatpush.bf16.msra.mxu0 %v1233
    %2387 = vmatpush.bf16.msra.mxu0 %v1230
    %2388 = vmatmul.bf16.gmra.mxu0 %v2379
    %v2389 = vpop.f32.mrf.mxu0
    %v2390 = vadd.f32 %v1144, %v2389
    %v2391 = vpop.f32.mrf.mxu0
    %2392 = vdwg.mxu0
    %2393 = vmatpush.bf16.msra.mxu0 %v1252
    %2394 = vmatpush.bf16.msra.mxu0 %v1249
    %2395 = vmatpush.bf16.msra.mxu0 %v1246
    %2396 = vmatpush.bf16.msra.mxu0 %v1243
    %2397 = vmatpush.bf16.msra.mxu0 %v1240
    %2398 = vmatpush.bf16.msra.mxu0 %v1237
    %2399 = vmatpush.bf16.msra.mxu0 %v1234
    %2400 = vmatpush.bf16.msra.mxu0 %v1231
    %2401 = vmatmul.bf16.gmra.mxu0 %v2379
    %v2402 = vpop.f32.mrf.mxu0
    %v2403 = vadd.f32 %v1145, %v2402
    %v2404 = vpop.f32.mrf.mxu0
    %2405 = vdwg.mxu0
    %2406 = vmatpush.bf16.msra.mxu0 %v1253
    %2407 = vmatpush.bf16.msra.mxu0 %v1250
    %2408 = vmatpush.bf16.msra.mxu0 %v1247
    %2409 = vmatpush.bf16.msra.mxu0 %v1244
    %2410 = vmatpush.bf16.msra.mxu0 %v1241
    %2411 = vmatpush.bf16.msra.mxu0 %v1238
    %2412 = vmatpush.bf16.msra.mxu0 %v1235
    %2413 = vmatpush.bf16.msra.mxu0 %v1232
    %2414 = vmatmul.bf16.gmra.mxu0 %v2379
    %v2415 = vpop.f32.mrf.mxu0
    %v2416 = vadd.f32 %v1146, %v2415
    %v2417 = vpop.f32.mrf.mxu0
    %2418 = vdwg.mxu0
    %v2419 = vadd.f32 %v2390, %v2260
    %v2420 = vxor.u32 %v2419, 2147483648
    %v2421 = vmul.f32 %v2420, 1.442695
    %v2422 = vpow.pop %v2421
    %v2423 = vadd.f32 %v2422, 1.0
    %v2424 = vrcp.pop %v2423
    %v2425 = vmul.f32 %v2423, %v2424
    %v2426 = vsub.f32 1.0, %v2425
    %v2427 = vmul.f32 %v2424, %v2426
    %v2428 = vadd.f32 %v2424, %v2427
    %vm2429 = vweird.f32 %v2423
    %vm2430 = vweird.f32 %v2424
    %vm2431 = vmor %vm2429, %vm2430
    %v2432 = vsel %vm2431, %v2424, %v2428
    %v2433 = vand.u32 2147483647, %v2423
    %vm2434 = vcmp.eq.f32.partialorder %v2433, 8.507059e+37
    %v2435 = vand.u32 %v2423, 2147483648
    %v2436 = vor.u32 1.1754944e-38, %v2435
    %v2437 = vsel %vm2434, %v2436, %v2432
    %v2438 = vmul.f32 1.0, %v2437
    %v2439 = vadd.f32 %v2403, %v2273
    %v2440 = vxor.u32 %v2439, 2147483648
    %v2441 = vmul.f32 %v2440, 1.442695
    %v2442 = vpow.pop %v2441
    %v2443 = vadd.f32 %v2442, 1.0
    %v2444 = vrcp.pop %v2443
    %v2445 = vmul.f32 %v2443, %v2444
    %v2446 = vsub.f32 1.0, %v2445
    %v2447 = vmul.f32 %v2444, %v2446
    %v2448 = vadd.f32 %v2444, %v2447
    %vm2449 = vweird.f32 %v2443
    %vm2450 = vweird.f32 %v2444
    %vm2451 = vmor %vm2449, %vm2450
    %v2452 = vsel %vm2451, %v2444, %v2448
    %v2453 = vand.u32 2147483647, %v2443
    %vm2454 = vcmp.eq.f32.partialorder %v2453, 8.507059e+37
    %v2455 = vand.u32 %v2443, 2147483648
    %v2456 = vor.u32 1.1754944e-38, %v2455
    %v2457 = vsel %vm2454, %v2456, %v2452
    %v2458 = vmul.f32 1.0, %v2457
    %v2459 = vadd.f32 %v2286, %v1358
    %v2460 = vmul.f32 %v2438, %v2459
    %v2461 = vadd.f32 %v2416, %v2460
    %v2462 = vtanh.pop %v2461
    %v2463 = vsub.f32 1.0, %v2458
    %v2464 = vmul.f32 %v2463, %v2462
    %v2465 = vmul.f32 %v2458, %v2246
    %v2466 = vadd.f32 %v2464, %v2465
    %s2467 = scalar_lea.vmem %s10, 40
    %2468 = vst [vmem:[%s2467] sm:$0xff] %v2466
    %v2469 = vpack.c.bf16 %v2466, %v2466
    %2470 = vmatpush.bf16.msra.mxu0 %v854
    %2471 = vmatpush.bf16.msra.mxu0 %v851
    %2472 = vmatpush.bf16.msra.mxu0 %v848
    %2473 = vmatpush.bf16.msra.mxu0 %v845
    %2474 = vmatpush.bf16.msra.mxu0 %v842
    %2475 = vmatpush.bf16.msra.mxu0 %v839
    %2476 = vmatpush.bf16.msra.mxu0 %v836
    %2477 = vmatpush.bf16.msra.mxu0 %v833
    %2478 = vmatmul.bf16.gmra.mxu0 %v2469
    %v2479 = vpop.f32.mrf.mxu0
    %v2480 = vadd.f32 0.0, %v2479
    %v2481 = vpop.f32.mrf.mxu0
    %2482 = vdwg.mxu0
    %2483 = vmatpush.bf16.msra.mxu0 %v855
    %2484 = vmatpush.bf16.msra.mxu0 %v852
    %2485 = vmatpush.bf16.msra.mxu0 %v849
    %2486 = vmatpush.bf16.msra.mxu0 %v846
    %2487 = vmatpush.bf16.msra.mxu0 %v843
    %2488 = vmatpush.bf16.msra.mxu0 %v840
    %2489 = vmatpush.bf16.msra.mxu0 %v837
    %2490 = vmatpush.bf16.msra.mxu0 %v834
    %2491 = vmatmul.bf16.gmra.mxu0 %v2469
    %v2492 = vpop.f32.mrf.mxu0
    %v2493 = vadd.f32 0.0, %v2492
    %v2494 = vpop.f32.mrf.mxu0
    %2495 = vdwg.mxu0
    %2496 = vmatpush.bf16.msra.mxu0 %v856
    %2497 = vmatpush.bf16.msra.mxu0 %v853
    %2498 = vmatpush.bf16.msra.mxu0 %v850
    %2499 = vmatpush.bf16.msra.mxu0 %v847
    %2500 = vmatpush.bf16.msra.mxu0 %v844
    %2501 = vmatpush.bf16.msra.mxu0 %v841
    %2502 = vmatpush.bf16.msra.mxu0 %v838
    %2503 = vmatpush.bf16.msra.mxu0 %v835
    %2504 = vmatmul.bf16.gmra.mxu0 %v2469
    %v2505 = vpop.f32.mrf.mxu0
    %v2506 = vadd.f32 0.0, %v2505
    %v2507 = vpop.f32.mrf.mxu0
    %2508 = vdwg.mxu0
    %2509 = vmatpush.bf16.msra.mxu0 %v1022
    %2510 = vmatpush.bf16.msra.mxu0 %v1019
    %2511 = vmatpush.bf16.msra.mxu0 %v1016
    %2512 = vmatpush.bf16.msra.mxu0 %v1013
    %2513 = vmatpush.bf16.msra.mxu0 %v1010
    %2514 = vmatpush.bf16.msra.mxu0 %v1007
    %2515 = vmatpush.bf16.msra.mxu0 %v1004
    %2516 = vmatpush.bf16.msra.mxu0 %v1001
    %2517 = vmatmul.bf16.gmra.mxu0 %v2379
    %v2518 = vpop.f32.mrf.mxu0
    %v2519 = vadd.f32 0.0, %v2518
    %v2520 = vpop.f32.mrf.mxu0
    %2521 = vdwg.mxu0
    %2522 = vmatpush.bf16.msra.mxu0 %v1023
    %2523 = vmatpush.bf16.msra.mxu0 %v1020
    %2524 = vmatpush.bf16.msra.mxu0 %v1017
    %2525 = vmatpush.bf16.msra.mxu0 %v1014
    %2526 = vmatpush.bf16.msra.mxu0 %v1011
    %2527 = vmatpush.bf16.msra.mxu0 %v1008
    %2528 = vmatpush.bf16.msra.mxu0 %v1005
    %2529 = vmatpush.bf16.msra.mxu0 %v1002
    %2530 = vmatmul.bf16.gmra.mxu0 %v2379
    %v2531 = vpop.f32.mrf.mxu0
    %v2532 = vadd.f32 0.0, %v2531
    %v2533 = vpop.f32.mrf.mxu0
    %2534 = vdwg.mxu0
    %2535 = vmatpush.bf16.msra.mxu0 %v1024
    %2536 = vmatpush.bf16.msra.mxu0 %v1021
    %2537 = vmatpush.bf16.msra.mxu0 %v1018
    %2538 = vmatpush.bf16.msra.mxu0 %v1015
    %2539 = vmatpush.bf16.msra.mxu0 %v1012
    %2540 = vmatpush.bf16.msra.mxu0 %v1009
    %2541 = vmatpush.bf16.msra.mxu0 %v1006
    %2542 = vmatpush.bf16.msra.mxu0 %v1003
    %2543 = vmatmul.bf16.gmra.mxu0 %v2379
    %v2544 = vpop.f32.mrf.mxu0
    %v2545 = vadd.f32 0.0, %v2544
    %v2546 = vpop.f32.mrf.mxu0
    %2547 = vdwg.mxu0
    %v2548 = vld [vmem:[#allocation2 + $0x90] sm:$0xff]
    %v2549 = vld [vmem:[#allocation2 + $0x98] sm:$0xff]
    %v2550 = vld [vmem:[#allocation2 + $0xa0] sm:$0xff]
    %v2551 = vadd.f32 %v2548, %v2519
    %v2552 = vxor.u32 %v2551, 2147483648
    %v2553 = vmul.f32 %v2552, 1.442695
    %v2554 = vpow.pop %v2553
    %v2555 = vadd.f32 %v2554, 1.0
    %v2556 = vrcp.pop %v2555
    %v2557 = vmul.f32 %v2555, %v2556
    %v2558 = vsub.f32 1.0, %v2557
    %v2559 = vmul.f32 %v2556, %v2558
    %v2560 = vadd.f32 %v2556, %v2559
    %vm2561 = vweird.f32 %v2555
    %vm2562 = vweird.f32 %v2556
    %vm2563 = vmor %vm2561, %vm2562
    %v2564 = vsel %vm2563, %v2556, %v2560
    %v2565 = vand.u32 2147483647, %v2555
    %vm2566 = vcmp.eq.f32.partialorder %v2565, 8.507059e+37
    %v2567 = vand.u32 %v2555, 2147483648
    %v2568 = vor.u32 1.1754944e-38, %v2567
    %v2569 = vsel %vm2566, %v2568, %v2564
    %v2570 = vmul.f32 1.0, %v2569
    %v2571 = vadd.f32 %v2549, %v2532
    %v2572 = vxor.u32 %v2571, 2147483648
    %v2573 = vmul.f32 %v2572, 1.442695
    %v2574 = vpow.pop %v2573
    %v2575 = vadd.f32 %v2574, 1.0
    %v2576 = vrcp.pop %v2575
    %v2577 = vmul.f32 %v2575, %v2576
    %v2578 = vsub.f32 1.0, %v2577
    %v2579 = vmul.f32 %v2576, %v2578
    %v2580 = vadd.f32 %v2576, %v2579
    %vm2581 = vweird.f32 %v2575
    %vm2582 = vweird.f32 %v2576
    %vm2583 = vmor %vm2581, %vm2582
    %v2584 = vsel %vm2583, %v2576, %v2580
    %v2585 = vand.u32 2147483647, %v2575
    %vm2586 = vcmp.eq.f32.partialorder %v2585, 8.507059e+37
    %v2587 = vand.u32 %v2575, 2147483648
    %v2588 = vor.u32 1.1754944e-38, %v2587
    %v2589 = vsel %vm2586, %v2588, %v2584
    %v2590 = vmul.f32 1.0, %v2589
    %v2591 = vadd.f32 %v2545, %v1132
    %v2592 = vmul.f32 %v2570, %v2591
    %v2593 = vadd.f32 %v2550, %v2592
    %v2594 = vtanh.pop %v2593
    %v2595 = vsub.f32 1.0, %v2590
    %v2596 = vmul.f32 %v2595, %v2594
    %v2597 = vmul.f32 %v2590, %v2378
    %v2598 = vadd.f32 %v2596, %v2597
    %v2599 = vpack.c.bf16 %v2598, %v2598
    %2600 = vmatpush.bf16.msra.mxu0 %v1251
    %2601 = vmatpush.bf16.msra.mxu0 %v1248
    %2602 = vmatpush.bf16.msra.mxu0 %v1245
    %2603 = vmatpush.bf16.msra.mxu0 %v1242
    %2604 = vmatpush.bf16.msra.mxu0 %v1239
    %2605 = vmatpush.bf16.msra.mxu0 %v1236
    %2606 = vmatpush.bf16.msra.mxu0 %v1233
    %2607 = vmatpush.bf16.msra.mxu0 %v1230
    %2608 = vmatmul.bf16.gmra.mxu0 %v2599
    %v2609 = vpop.f32.mrf.mxu0
    %v2610 = vadd.f32 %v1144, %v2609
    %v2611 = vpop.f32.mrf.mxu0
    %2612 = vdwg.mxu0
    %2613 = vmatpush.bf16.msra.mxu0 %v1252
    %2614 = vmatpush.bf16.msra.mxu0 %v1249
    %2615 = vmatpush.bf16.msra.mxu0 %v1246
    %2616 = vmatpush.bf16.msra.mxu0 %v1243
    %2617 = vmatpush.bf16.msra.mxu0 %v1240
    %2618 = vmatpush.bf16.msra.mxu0 %v1237
    %2619 = vmatpush.bf16.msra.mxu0 %v1234
    %2620 = vmatpush.bf16.msra.mxu0 %v1231
    %2621 = vmatmul.bf16.gmra.mxu0 %v2599
    %v2622 = vpop.f32.mrf.mxu0
    %v2623 = vadd.f32 %v1145, %v2622
    %v2624 = vpop.f32.mrf.mxu0
    %2625 = vdwg.mxu0
    %2626 = vmatpush.bf16.msra.mxu0 %v1253
    %2627 = vmatpush.bf16.msra.mxu0 %v1250
    %2628 = vmatpush.bf16.msra.mxu0 %v1247
    %2629 = vmatpush.bf16.msra.mxu0 %v1244
    %2630 = vmatpush.bf16.msra.mxu0 %v1241
    %2631 = vmatpush.bf16.msra.mxu0 %v1238
    %2632 = vmatpush.bf16.msra.mxu0 %v1235
    %2633 = vmatpush.bf16.msra.mxu0 %v1232
    %2634 = vmatmul.bf16.gmra.mxu0 %v2599
    %v2635 = vpop.f32.mrf.mxu0
    %v2636 = vadd.f32 %v1146, %v2635
    %v2637 = vpop.f32.mrf.mxu0
    %2638 = vdwg.mxu0
    %v2639 = vadd.f32 %v2610, %v2480
    %v2640 = vxor.u32 %v2639, 2147483648
    %v2641 = vmul.f32 %v2640, 1.442695
    %v2642 = vpow.pop %v2641
    %v2643 = vadd.f32 %v2642, 1.0
    %v2644 = vrcp.pop %v2643
    %v2645 = vmul.f32 %v2643, %v2644
    %v2646 = vsub.f32 1.0, %v2645
    %v2647 = vmul.f32 %v2644, %v2646
    %v2648 = vadd.f32 %v2644, %v2647
    %vm2649 = vweird.f32 %v2643
    %vm2650 = vweird.f32 %v2644
    %vm2651 = vmor %vm2649, %vm2650
    %v2652 = vsel %vm2651, %v2644, %v2648
    %v2653 = vand.u32 2147483647, %v2643
    %vm2654 = vcmp.eq.f32.partialorder %v2653, 8.507059e+37
    %v2655 = vand.u32 %v2643, 2147483648
    %v2656 = vor.u32 1.1754944e-38, %v2655
    %v2657 = vsel %vm2654, %v2656, %v2652
    %v2658 = vmul.f32 1.0, %v2657
    %v2659 = vadd.f32 %v2623, %v2493
    %v2660 = vxor.u32 %v2659, 2147483648
    %v2661 = vmul.f32 %v2660, 1.442695
    %v2662 = vpow.pop %v2661
    %v2663 = vadd.f32 %v2662, 1.0
    %v2664 = vrcp.pop %v2663
    %v2665 = vmul.f32 %v2663, %v2664
    %v2666 = vsub.f32 1.0, %v2665
    %v2667 = vmul.f32 %v2664, %v2666
    %v2668 = vadd.f32 %v2664, %v2667
    %vm2669 = vweird.f32 %v2663
    %vm2670 = vweird.f32 %v2664
    %vm2671 = vmor %vm2669, %vm2670
    %v2672 = vsel %vm2671, %v2664, %v2668
    %v2673 = vand.u32 2147483647, %v2663
    %vm2674 = vcmp.eq.f32.partialorder %v2673, 8.507059e+37
    %v2675 = vand.u32 %v2663, 2147483648
    %v2676 = vor.u32 1.1754944e-38, %v2675
    %v2677 = vsel %vm2674, %v2676, %v2672
    %v2678 = vmul.f32 1.0, %v2677
    %v2679 = vadd.f32 %v2506, %v1358
    %v2680 = vmul.f32 %v2658, %v2679
    %v2681 = vadd.f32 %v2636, %v2680
    %v2682 = vtanh.pop %v2681
    %v2683 = vsub.f32 1.0, %v2678
    %v2684 = vmul.f32 %v2683, %v2682
    %v2685 = vmul.f32 %v2678, %v2466
    %v2686 = vadd.f32 %v2684, %v2685
    %s2687 = scalar_lea.vmem %s10, 48
    %2688 = vst [vmem:[%s2687] sm:$0xff] %v2686
    %v2689 = vpack.c.bf16 %v2686, %v2686
    %2690 = vmatpush.bf16.msra.mxu0 %v854
    %2691 = vmatpush.bf16.msra.mxu0 %v851
    %2692 = vmatpush.bf16.msra.mxu0 %v848
    %2693 = vmatpush.bf16.msra.mxu0 %v845
    %2694 = vmatpush.bf16.msra.mxu0 %v842
    %2695 = vmatpush.bf16.msra.mxu0 %v839
    %2696 = vmatpush.bf16.msra.mxu0 %v836
    %2697 = vmatpush.bf16.msra.mxu0 %v833
    %2698 = vmatmul.bf16.gmra.mxu0 %v2689
    %v2699 = vpop.f32.mrf.mxu0
    %v2700 = vadd.f32 0.0, %v2699
    %v2701 = vpop.f32.mrf.mxu0
    %2702 = vdwg.mxu0
    %2703 = vmatpush.bf16.msra.mxu0 %v855
    %2704 = vmatpush.bf16.msra.mxu0 %v852
    %2705 = vmatpush.bf16.msra.mxu0 %v849
    %2706 = vmatpush.bf16.msra.mxu0 %v846
    %2707 = vmatpush.bf16.msra.mxu0 %v843
    %2708 = vmatpush.bf16.msra.mxu0 %v840
    %2709 = vmatpush.bf16.msra.mxu0 %v837
    %2710 = vmatpush.bf16.msra.mxu0 %v834
    %2711 = vmatmul.bf16.gmra.mxu0 %v2689
    %v2712 = vpop.f32.mrf.mxu0
    %v2713 = vadd.f32 0.0, %v2712
    %v2714 = vpop.f32.mrf.mxu0
    %2715 = vdwg.mxu0
    %2716 = vmatpush.bf16.msra.mxu0 %v856
    %2717 = vmatpush.bf16.msra.mxu0 %v853
    %2718 = vmatpush.bf16.msra.mxu0 %v850
    %2719 = vmatpush.bf16.msra.mxu0 %v847
    %2720 = vmatpush.bf16.msra.mxu0 %v844
    %2721 = vmatpush.bf16.msra.mxu0 %v841
    %2722 = vmatpush.bf16.msra.mxu0 %v838
    %2723 = vmatpush.bf16.msra.mxu0 %v835
    %2724 = vmatmul.bf16.gmra.mxu0 %v2689
    %v2725 = vpop.f32.mrf.mxu0
    %v2726 = vadd.f32 0.0, %v2725
    %v2727 = vpop.f32.mrf.mxu0
    %2728 = vdwg.mxu0
    %2729 = vmatpush.bf16.msra.mxu0 %v1022
    %2730 = vmatpush.bf16.msra.mxu0 %v1019
    %2731 = vmatpush.bf16.msra.mxu0 %v1016
    %2732 = vmatpush.bf16.msra.mxu0 %v1013
    %2733 = vmatpush.bf16.msra.mxu0 %v1010
    %2734 = vmatpush.bf16.msra.mxu0 %v1007
    %2735 = vmatpush.bf16.msra.mxu0 %v1004
    %2736 = vmatpush.bf16.msra.mxu0 %v1001
    %2737 = vmatmul.bf16.gmra.mxu0 %v2599
    %v2738 = vpop.f32.mrf.mxu0
    %v2739 = vadd.f32 0.0, %v2738
    %v2740 = vpop.f32.mrf.mxu0
    %2741 = vdwg.mxu0
    %2742 = vmatpush.bf16.msra.mxu0 %v1023
    %2743 = vmatpush.bf16.msra.mxu0 %v1020
    %2744 = vmatpush.bf16.msra.mxu0 %v1017
    %2745 = vmatpush.bf16.msra.mxu0 %v1014
    %2746 = vmatpush.bf16.msra.mxu0 %v1011
    %2747 = vmatpush.bf16.msra.mxu0 %v1008
    %2748 = vmatpush.bf16.msra.mxu0 %v1005
    %2749 = vmatpush.bf16.msra.mxu0 %v1002
    %2750 = vmatmul.bf16.gmra.mxu0 %v2599
    %v2751 = vpop.f32.mrf.mxu0
    %v2752 = vadd.f32 0.0, %v2751
    %v2753 = vpop.f32.mrf.mxu0
    %2754 = vdwg.mxu0
    %2755 = vmatpush.bf16.msra.mxu0 %v1024
    %2756 = vmatpush.bf16.msra.mxu0 %v1021
    %2757 = vmatpush.bf16.msra.mxu0 %v1018
    %2758 = vmatpush.bf16.msra.mxu0 %v1015
    %2759 = vmatpush.bf16.msra.mxu0 %v1012
    %2760 = vmatpush.bf16.msra.mxu0 %v1009
    %2761 = vmatpush.bf16.msra.mxu0 %v1006
    %2762 = vmatpush.bf16.msra.mxu0 %v1003
    %2763 = vmatmul.bf16.gmra.mxu0 %v2599
    %v2764 = vpop.f32.mrf.mxu0
    %v2765 = vadd.f32 0.0, %v2764
    %v2766 = vpop.f32.mrf.mxu0
    %2767 = vdwg.mxu0
    %v2768 = vld [vmem:[#allocation2 + $0xa8] sm:$0xff]
    %v2769 = vld [vmem:[#allocation2 + $0xb0] sm:$0xff]
    %v2770 = vld [vmem:[#allocation2 + $0xb8] sm:$0xff]
    %v2771 = vadd.f32 %v2768, %v2739
    %v2772 = vxor.u32 %v2771, 2147483648
    %v2773 = vmul.f32 %v2772, 1.442695
    %v2774 = vpow.pop %v2773
    %v2775 = vadd.f32 %v2774, 1.0
    %v2776 = vrcp.pop %v2775
    %v2777 = vmul.f32 %v2775, %v2776
    %v2778 = vsub.f32 1.0, %v2777
    %v2779 = vmul.f32 %v2776, %v2778
    %v2780 = vadd.f32 %v2776, %v2779
    %vm2781 = vweird.f32 %v2775
    %vm2782 = vweird.f32 %v2776
    %vm2783 = vmor %vm2781, %vm2782
    %v2784 = vsel %vm2783, %v2776, %v2780
    %v2785 = vand.u32 2147483647, %v2775
    %vm2786 = vcmp.eq.f32.partialorder %v2785, 8.507059e+37
    %v2787 = vand.u32 %v2775, 2147483648
    %v2788 = vor.u32 1.1754944e-38, %v2787
    %v2789 = vsel %vm2786, %v2788, %v2784
    %v2790 = vmul.f32 1.0, %v2789
    %v2791 = vadd.f32 %v2769, %v2752
    %v2792 = vxor.u32 %v2791, 2147483648
    %v2793 = vmul.f32 %v2792, 1.442695
    %v2794 = vpow.pop %v2793
    %v2795 = vadd.f32 %v2794, 1.0
    %v2796 = vrcp.pop %v2795
    %v2797 = vmul.f32 %v2795, %v2796
    %v2798 = vsub.f32 1.0, %v2797
    %v2799 = vmul.f32 %v2796, %v2798
    %v2800 = vadd.f32 %v2796, %v2799
    %vm2801 = vweird.f32 %v2795
    %vm2802 = vweird.f32 %v2796
    %vm2803 = vmor %vm2801, %vm2802
    %v2804 = vsel %vm2803, %v2796, %v2800
    %v2805 = vand.u32 2147483647, %v2795
    %vm2806 = vcmp.eq.f32.partialorder %v2805, 8.507059e+37
    %v2807 = vand.u32 %v2795, 2147483648
    %v2808 = vor.u32 1.1754944e-38, %v2807
    %v2809 = vsel %vm2806, %v2808, %v2804
    %v2810 = vmul.f32 1.0, %v2809
    %v2811 = vadd.f32 %v2765, %v1132
    %v2812 = vmul.f32 %v2790, %v2811
    %v2813 = vadd.f32 %v2770, %v2812
    %v2814 = vtanh.pop %v2813
    %v2815 = vsub.f32 1.0, %v2810
    %v2816 = vmul.f32 %v2815, %v2814
    %v2817 = vmul.f32 %v2810, %v2598
    %v2818 = vadd.f32 %v2816, %v2817
    %v2819 = vpack.c.bf16 %v2818, %v2818
    %2820 = vmatpush.bf16.msra.mxu0 %v1251
    %2821 = vmatpush.bf16.msra.mxu0 %v1248
    %2822 = vmatpush.bf16.msra.mxu0 %v1245
    %2823 = vmatpush.bf16.msra.mxu0 %v1242
    %2824 = vmatpush.bf16.msra.mxu0 %v1239
    %2825 = vmatpush.bf16.msra.mxu0 %v1236
    %2826 = vmatpush.bf16.msra.mxu0 %v1233
    %2827 = vmatpush.bf16.msra.mxu0 %v1230
    %2828 = vmatmul.bf16.gmra.mxu0 %v2819
    %v2829 = vpop.f32.mrf.mxu0
    %v2830 = vadd.f32 %v1144, %v2829
    %v2831 = vpop.f32.mrf.mxu0
    %2832 = vdwg.mxu0
    %2833 = vmatpush.bf16.msra.mxu0 %v1252
    %2834 = vmatpush.bf16.msra.mxu0 %v1249
    %2835 = vmatpush.bf16.msra.mxu0 %v1246
    %2836 = vmatpush.bf16.msra.mxu0 %v1243
    %2837 = vmatpush.bf16.msra.mxu0 %v1240
    %2838 = vmatpush.bf16.msra.mxu0 %v1237
    %2839 = vmatpush.bf16.msra.mxu0 %v1234
    %2840 = vmatpush.bf16.msra.mxu0 %v1231
    %2841 = vmatmul.bf16.gmra.mxu0 %v2819
    %v2842 = vpop.f32.mrf.mxu0
    %v2843 = vadd.f32 %v1145, %v2842
    %v2844 = vpop.f32.mrf.mxu0
    %2845 = vdwg.mxu0
    %2846 = vmatpush.bf16.msra.mxu0 %v1253
    %2847 = vmatpush.bf16.msra.mxu0 %v1250
    %2848 = vmatpush.bf16.msra.mxu0 %v1247
    %2849 = vmatpush.bf16.msra.mxu0 %v1244
    %2850 = vmatpush.bf16.msra.mxu0 %v1241
    %2851 = vmatpush.bf16.msra.mxu0 %v1238
    %2852 = vmatpush.bf16.msra.mxu0 %v1235
    %2853 = vmatpush.bf16.msra.mxu0 %v1232
    %2854 = vmatmul.bf16.gmra.mxu0 %v2819
    %v2855 = vpop.f32.mrf.mxu0
    %v2856 = vadd.f32 %v1146, %v2855
    %v2857 = vpop.f32.mrf.mxu0
    %2858 = vdwg.mxu0
    %v2859 = vadd.f32 %v2830, %v2700
    %v2860 = vxor.u32 %v2859, 2147483648
    %v2861 = vmul.f32 %v2860, 1.442695
    %v2862 = vpow.pop %v2861
    %v2863 = vadd.f32 %v2862, 1.0
    %v2864 = vrcp.pop %v2863
    %v2865 = vmul.f32 %v2863, %v2864
    %v2866 = vsub.f32 1.0, %v2865
    %v2867 = vmul.f32 %v2864, %v2866
    %v2868 = vadd.f32 %v2864, %v2867
    %vm2869 = vweird.f32 %v2863
    %vm2870 = vweird.f32 %v2864
    %vm2871 = vmor %vm2869, %vm2870
    %v2872 = vsel %vm2871, %v2864, %v2868
    %v2873 = vand.u32 2147483647, %v2863
    %vm2874 = vcmp.eq.f32.partialorder %v2873, 8.507059e+37
    %v2875 = vand.u32 %v2863, 2147483648
    %v2876 = vor.u32 1.1754944e-38, %v2875
    %v2877 = vsel %vm2874, %v2876, %v2872
    %v2878 = vmul.f32 1.0, %v2877
    %v2879 = vadd.f32 %v2843, %v2713
    %v2880 = vxor.u32 %v2879, 2147483648
    %v2881 = vmul.f32 %v2880, 1.442695
    %v2882 = vpow.pop %v2881
    %v2883 = vadd.f32 %v2882, 1.0
    %v2884 = vrcp.pop %v2883
    %v2885 = vmul.f32 %v2883, %v2884
    %v2886 = vsub.f32 1.0, %v2885
    %v2887 = vmul.f32 %v2884, %v2886
    %v2888 = vadd.f32 %v2884, %v2887
    %vm2889 = vweird.f32 %v2883
    %vm2890 = vweird.f32 %v2884
    %vm2891 = vmor %vm2889, %vm2890
    %v2892 = vsel %vm2891, %v2884, %v2888
    %v2893 = vand.u32 2147483647, %v2883
    %vm2894 = vcmp.eq.f32.partialorder %v2893, 8.507059e+37
    %v2895 = vand.u32 %v2883, 2147483648
    %v2896 = vor.u32 1.1754944e-38, %v2895
    %v2897 = vsel %vm2894, %v2896, %v2892
    %v2898 = vmul.f32 1.0, %v2897
    %v2899 = vadd.f32 %v2726, %v1358
    %v2900 = vmul.f32 %v2878, %v2899
    %v2901 = vadd.f32 %v2856, %v2900
    %v2902 = vtanh.pop %v2901
    %v2903 = vsub.f32 1.0, %v2898
    %v2904 = vmul.f32 %v2903, %v2902
    %v2905 = vmul.f32 %v2898, %v2686
    %v2906 = vadd.f32 %v2904, %v2905
    %s2907 = scalar_lea.vmem %s10, 56
    %2908 = vst [vmem:[%s2907] sm:$0xff] %v2906
    %2909 = vst [vmem:[%s11] sm:$0xff] %v2818
    %s2910 = scalar_lea.vmem %s11, 8
    %2911 = vst [vmem:[%s2910] sm:$0xff] %v2906
    // Predicated region
    $region54: #{decoder_rnn_forward.1} parent=1 // pred_check
      _
    $region55: #{decoder_rnn_forward.1} parent=1 // pred_check_branch
      %2913 = sbr.rel (0) target = $region57
    $region56: #{decoder_rnn_forward.1} parent=1 // pred_region
      _
    $region57: #{decoder_rnn_forward.1} parent=1 // pred_fallthru
      _
    // Predicated region
    $region58: #{decoder_rnn_forward.1} parent=1 // pred_check
      _
    $region59: #{decoder_rnn_forward.1} parent=1 // pred_check_branch
      %2915 = sbr.rel (0) target = $region61
    $region60: #{decoder_rnn_forward.1} parent=1 // pred_region
      _
    $region61: #{decoder_rnn_forward.1} parent=1 // pred_fallthru
      _
    // Predicated region
    $region62: #{decoder_rnn_forward.1} parent=1 // pred_check
      _
    $region63: #{decoder_rnn_forward.1} parent=1 // pred_check_branch
      %2917 = sbr.rel (0) target = $region65
    $region64: #{decoder_rnn_forward.1} parent=1 // pred_region
      _
    $region65: #{decoder_rnn_forward.1} parent=1 // pred_fallthru
      _
    // Predicated region
    $region66: #{decoder_rnn_forward.1} parent=1 // pred_check
      _
    $region67: #{decoder_rnn_forward.1} parent=1 // pred_check_branch
      %2919 = sbr.rel (0) target = $region69
    $region68: #{decoder_rnn_forward.1} parent=1 // pred_region
      _
    $region69: #{decoder_rnn_forward.1} parent=1 // pred_fallthru
      _
    %2920 = vsyncpa [#allocation4], 1
    %2921 = vsyncpa [#allocation6], 1

</llo_original>
